<compile_context>
chip_gen: v7x
topology: tpu7x:2x2x1
jax: 0.10.0
libtpu: 0.0.40
codegen_flags: <defaults>
</compile_context>

<pallas_src>
import functools
import math

import jax
import jax.numpy as jnp
from jax import lax
from jax.experimental import pallas as pl
from jax.experimental.pallas import tpu as pltpu


# ---------------------------------------------------------------------------
# In-kernel erf (XLA ErfImpl32 rational approximation, f32)
# ---------------------------------------------------------------------------
_ERF_ALPHA = (0.00022905065861350646, 0.0034082910107109506,
              0.050955695062380861, 0.18520832239976145, 1.128379143519084)
_ERF_BETA = (-1.1791602954361697e-7, 0.000023547966471313185,
             0.0010179625278914885, 0.014070470171167667,
             0.11098505178285362, 0.49746925110067538, 1.0)


def _erf_f32(x):
    x = jnp.clip(x, -4.0, 4.0)
    x2 = x * x
    p = jnp.full_like(x2, _ERF_ALPHA[0])
    for c in _ERF_ALPHA[1:]:
        p = p * x2 + c
    q = jnp.full_like(x2, _ERF_BETA[0])
    for c in _ERF_BETA[1:]:
        q = q * x2 + c
    # EUP approximate reciprocal instead of a VPU divide (q >= 1 on the
    # clipped range, so this is safe and goes to an otherwise-idle unit).
    return x * p * pl.reciprocal(q, approx=True)


def _sign_epilogue(mu, inv_k, threshold, eps):
    # p_avg*(1-p_avg)*K == mu - mu^2/K.  Clamp to eps: f32 rounding can push
    # mu marginally past K, which would give sqrt(negative) -> NaN.
    var = jnp.maximum(mu - mu * mu * inv_k + eps, eps)
    z = (threshold - 0.5 - mu) * lax.rsqrt(2.0 * var)
    return 0.5 - 0.5 * _erf_f32(z)


# ---------------------------------------------------------------------------
# Pallas kernels
# ---------------------------------------------------------------------------
def _sign_dense_kernel(x_ref, w_ref, b_ref, o_ref, *, inv_k, threshold, eps):
    mu = jnp.dot(x_ref[...], w_ref[...], preferred_element_type=jnp.float32)
    mu = mu + b_ref[...]
    o_ref[...] = _sign_epilogue(mu, inv_k, threshold, eps)


def _fused_linear_kernel(x_ref, w1_ref, b1_ref, w2_ref, b2_ref, o_ref, *,
                         inv_k1, thr1, inv_k2, thr2, eps):
    mu1 = jnp.dot(x_ref[...], w1_ref[...], preferred_element_type=jnp.float32)
    h = _sign_epilogue(mu1 + b1_ref[...], inv_k1, thr1, eps)
    mu2 = jnp.dot(h, w2_ref[...], preferred_element_type=jnp.float32)
    o_ref[...] = _sign_epilogue(mu2 + b2_ref[...], inv_k2, thr2, eps)


# ---------------------------------------------------------------------------
# Tiling / pallas_call wrappers
# ---------------------------------------------------------------------------
_VMEM_LIMIT = 32 * 1024 * 1024    # explicit scoped-VMEM: safe on v5e/v6e/v7x
_TILE_BUDGET = 16 * 1024 * 1024   # tiles + resident weights working-set target
_TILE_CAP = 512                   # keeps per-step DMA pipeline-friendly


def _pick_tile_n(n_rows, per_row_bytes, fixed_bytes):
    avail = max(_TILE_BUDGET - fixed_bytes, 8 * per_row_bytes)
    tile = min(avail // max(per_row_bytes, 1), _TILE_CAP)
    tile = max((int(tile) // 8) * 8, 8)
    # If everything fits in one tile, use the exact row count (block dim ==
    # full array dim is always legal, no row padding needed).
    return n_rows if n_rows <= tile else tile


def sign_dense(x, w_t, bias, in_features, eps=1e-6):
    """x:(N,K) probs; w_t:(K,C)=2*sigmoid(W).T-1; bias:(1,C)=K-colsum(sigmoid(W))."""
    N, K = x.shape
    C = w_t.shape[1]
    threshold = float(math.ceil(in_features / 2))
    tile_n = _pick_tile_n(N, per_row_bytes=8 * (K + C),
                          fixed_bytes=8 * (K * C + C))
    kernel = functools.partial(_sign_dense_kernel,
                               inv_k=1.0 / float(in_features),
                               threshold=threshold, eps=float(eps))
    return pl.pallas_call(
        kernel,
        grid=(pl.cdiv(N, tile_n),),
        in_specs=[pl.BlockSpec((tile_n, K), lambda i: (i, 0)),
                  pl.BlockSpec((K, C), lambda i: (0, 0)),     # weight resident
                  pl.BlockSpec((1, C), lambda i: (0, 0))],    # bias resident
        out_specs=pl.BlockSpec((tile_n, C), lambda i: (i, 0)),
        out_shape=jax.ShapeDtypeStruct((N, C), jnp.float32),
        compiler_params=pltpu.CompilerParams(
            dimension_semantics=("parallel",),
            vmem_limit_bytes=_VMEM_LIMIT),
        cost_estimate=pl.CostEstimate(
            flops=2 * N * K * C,
            transcendentals=2 * N * C,
            bytes_accessed=4 * (N * K + K * C + N * C + C)),
    )(x, w_t, bias)


def fused_sign_linear2(x, w1_t, b1, k1, w2_t, b2, k2, eps=1e-6):
    """linear1 + linear2 in one pallas_call; the (N, C1) intermediate stays on-chip."""
    N, K1 = x.shape
    C1 = w1_t.shape[1]
    C2 = w2_t.shape[1]
    tile_n = _pick_tile_n(
        N,
        per_row_bytes=8 * (K1 + C2) + 4 * C1,
        fixed_bytes=8 * (K1 * C1 + C1 + C1 * C2 + C2))
    kernel = functools.partial(
        _fused_linear_kernel,
        inv_k1=1.0 / float(k1), thr1=float(math.ceil(k1 / 2)),
        inv_k2=1.0 / float(k2), thr2=float(math.ceil(k2 / 2)),
        eps=float(eps))
    return pl.pallas_call(
        kernel,
        grid=(pl.cdiv(N, tile_n),),
        in_specs=[pl.BlockSpec((tile_n, K1), lambda i: (i, 0)),
                  pl.BlockSpec((K1, C1), lambda i: (0, 0)),
                  pl.BlockSpec((1, C1), lambda i: (0, 0)),
                  pl.BlockSpec((C1, C2), lambda i: (0, 0)),
                  pl.BlockSpec((1, C2), lambda i: (0, 0))],
        out_specs=pl.BlockSpec((tile_n, C2), lambda i: (i, 0)),
        out_shape=jax.ShapeDtypeStruct((N, C2), jnp.float32),
        compiler_params=pltpu.CompilerParams(
            dimension_semantics=("parallel",),
            vmem_limit_bytes=_VMEM_LIMIT),
        cost_estimate=pl.CostEstimate(
            flops=2 * N * (K1 * C1 + C1 * C2),
            transcendentals=2 * N * (C1 + C2),
            bytes_accessed=4 * (N * K1 + K1 * C1 + C1 * C2 + N * C2 + C1 + C2)),
    )(x, w1_t, b1, w2_t, b2)


# ---------------------------------------------------------------------------
# JAX glue: weight pre-transform + channels-last im2col (layout-free)
# ---------------------------------------------------------------------------
def prep_sign_weight(w_logits, reorder_chw=None):
    """Return (w', bias, K): w' = 2*sigmoid(W).T - 1, bias = K - colsum(sigmoid(W)).

    If reorder_chw=(C,H,W), permute the K axis from (c,h,w) to (h,w,c) so the
    activations can stay channels-last (permuting the tiny weight instead of
    the large activation)."""
    out_features, in_features = w_logits.shape
    p = jax.nn.sigmoid(w_logits.astype(jnp.float32))            # (C_out, K)
    bias = (float(in_features) - jnp.sum(p, axis=1)).reshape(1, out_features)
    if reorder_chw is not None:
        c, h, w = reorder_chw
        p = p.reshape(out_features, c, h, w).transpose(0, 2, 3, 1)
        p = p.reshape(out_features, in_features)
    w_t = jnp.transpose(2.0 * p - 1.0)                          # (K, C_out)
    return w_t, bias, in_features


def im2col_nhwc(x, k, stride):
    """(B,H,W,C) -> (B*OH*OW, k*k*C) patches with feature order (kh, kw, c)."""
    B, H, W, C = x.shape
    OH = (H - k) // stride + 1
    OW = (W - k) // stride + 1
    patches = []
    for i in range(k):
        for j in range(k):
            patches.append(x[:, i:i + stride * OH:stride,
                             j:j + stride * OW:stride, :])
    cols = jnp.concatenate(patches, axis=-1)        # last-axis concat, no transpose
    return cols.reshape(B * OH * OW, k * k * C), OH, OW


def sign_conv(x_nhwc, w_logits, in_channels, k, stride):
    out_ch = w_logits.shape[0]
    w_t, bias, in_features = prep_sign_weight(w_logits,
                                              reorder_chw=(in_channels, k, k))
    rows, OH, OW = im2col_nhwc(x_nhwc, k, stride)
    y = sign_dense(rows, w_t, bias, in_features)
    return y.reshape(x_nhwc.shape[0], OH, OW, out_ch)           # stays channels-last


# ---------------------------------------------------------------------------
# DigitalNet_1 forward (training mode)
# ---------------------------------------------------------------------------
def digitalnet1_forward(x, params):
    # training mode: input probabilities pass through unchanged.
    x = x.astype(jnp.float32)
    B = x.shape[0]
    x = jnp.transpose(x, (0, 2, 3, 1))                   # NCHW -> NHWC once (C=1)
    x = sign_conv(x, params["conv2_w"], in_channels=1, k=3, stride=2)   # (B,13,13,50)
    x = sign_conv(x, params["conv3_w"], in_channels=50, k=3, stride=2)  # (B,6,6,50)
    x = x.reshape(B, -1)                                 # (B,1800), order (h,w,c)
    # lin1 columns are (c,h,w) in PyTorch -> permute the weight to (h,w,c).
    w1_t, b1, k1 = prep_sign_weight(params["lin1_w"], reorder_chw=(50, 6, 6))
    w2_t, b2, k2 = prep_sign_weight(params["lin2_w"])
    return fused_sign_linear2(x, w1_t, b1, k1, w2_t, b2, k2)    # (B, 4)


def init_params(key):
    k1, k2, k3, k4 = jax.random.split(key, 4)
    u = lambda k, shape: jax.random.uniform(k, shape, jnp.float32, -2.0, 2.0)
    return {
        "conv2_w": u(k1, (50, 1 * 3 * 3)),     # SignConv(1, 50, 3, s=2)
        "conv3_w": u(k2, (50, 50 * 3 * 3)),    # SignConv(50, 50, 3, s=2)
        "lin1_w": u(k3, (500, 50 * 6 * 6)),    # SignLinear(1800, 500)
        "lin2_w": u(k4, (4, 500)),             # SignLinear(500, 4)
        # TODO(synk): nn.Conv2d conv1 is defined in __init__ but never used in
        # forward; it is intentionally omitted here.
    }


if __name__ == "__main__":
    key = jax.random.PRNGKey(0)
    pkey, xkey = jax.random.split(key)
    params = init_params(pkey)
    # 28x28 input so the hard-coded 50*6*6 flatten is consistent
    # ((28-3)//2+1 = 13, (13-3)//2+1 = 6). Training-mode inputs are probs in [0,1].
    x = jax.random.uniform(xkey, (2, 1, 28, 28), jnp.float32, 0.0, 1.0)

    fwd = jax.jit(digitalnet1_forward)
    out = fwd(x, params)
    jax.block_until_ready(out)
    assert out.shape == (2, 4) and out.dtype == jnp.float32
    assert bool(jnp.all(jnp.isfinite(out)))
    print("KERNEL_OK")
</pallas_src>

<mosaic_0001>
module attributes {stable_mosaic.version = 11 : i64} {
  func.func @_sign_dense_kernel(%arg0: i32, %arg1: memref<338x9xf32, #tpu.memory_space<vmem>>, %arg2: memref<9x50xf32, #tpu.memory_space<vmem>>, %arg3: memref<1x50xf32, #tpu.memory_space<vmem>>, %arg4: memref<338x50xf32, #tpu.memory_space<vmem>>) attributes {dimension_semantics = [#tpu.dimension_semantics<parallel>], iteration_bounds = array<i64: 1>, scalar_prefetch = 0 : i64, scratch_operands = 0 : i64, tpu.core_type = #tpu.core_type<tc>, window_params = [{transform_indices = @transform_0, window_bounds = array<i64: 338, 9>}, {pipeline_mode = #tpu.pipeline_mode<synchronous>, transform_indices = @transform_1, window_bounds = array<i64: 9, 50>}, {pipeline_mode = #tpu.pipeline_mode<synchronous>, transform_indices = @transform_2, window_bounds = array<i64: 1, 50>}, {transform_indices = @transform_3, window_bounds = array<i64: 338, 50>}]} {
    %c0 = arith.constant 0 : index
    %c0_0 = arith.constant 0 : index
    %0 = vector.load %arg1[%c0, %c0_0] : memref<338x9xf32, #tpu.memory_space<vmem>>, vector<338x9xf32>
    %c0_1 = arith.constant 0 : index
    %c0_2 = arith.constant 0 : index
    %1 = vector.load %arg2[%c0_1, %c0_2] : memref<9x50xf32, #tpu.memory_space<vmem>>, vector<9x50xf32>
    %cst = arith.constant dense<0.000000e+00> : vector<338x50xf32>
    %2 = tpu.matmul %0, %1, %cst {dimension_numbers = #tpu.dot_dimension_numbers<[1], [0], [0], [1], [0, 0, 1, 1], [], []>} : vector<338x9xf32>, vector<9x50xf32>, vector<338x50xf32> -> vector<338x50xf32>
    %c0_3 = arith.constant 0 : index
    %c0_4 = arith.constant 0 : index
    %3 = vector.load %arg3[%c0_3, %c0_4] : memref<1x50xf32, #tpu.memory_space<vmem>>, vector<1x50xf32>
    %4 = vector.broadcast %3 : vector<1x50xf32> to vector<338x50xf32>
    %5 = arith.addf %2, %4 : vector<338x50xf32>
    %6 = arith.mulf %5, %5 : vector<338x50xf32>
    %cst_5 = arith.constant 0.111111112 : f32
    %7 = vector.broadcast %cst_5 : f32 to vector<338x50xf32>
    %8 = arith.mulf %6, %7 : vector<338x50xf32>
    %9 = arith.subf %5, %8 : vector<338x50xf32>
    %cst_6 = arith.constant 9.99999997E-7 : f32
    %10 = vector.broadcast %cst_6 : f32 to vector<338x50xf32>
    %11 = arith.addf %9, %10 : vector<338x50xf32>
    %cst_7 = arith.constant 9.99999997E-7 : f32
    %12 = vector.broadcast %cst_7 : f32 to vector<338x50xf32>
    %13 = arith.maximumf %11, %12 : vector<338x50xf32>
    %cst_8 = arith.constant 4.500000e+00 : f32
    %14 = vector.broadcast %cst_8 : f32 to vector<338x50xf32>
    %15 = arith.subf %14, %5 : vector<338x50xf32>
    %cst_9 = arith.constant 2.000000e+00 : f32
    %16 = vector.broadcast %cst_9 : f32 to vector<338x50xf32>
    %17 = arith.mulf %16, %13 : vector<338x50xf32>
    %18 = math.rsqrt %17 : vector<338x50xf32>
    %19 = arith.mulf %15, %18 : vector<338x50xf32>
    %cst_10 = arith.constant -4.000000e+00 : f32
    %cst_11 = arith.constant 4.000000e+00 : f32
    %20 = vector.broadcast %cst_10 : f32 to vector<338x50xf32>
    %21 = arith.maximumf %20, %19 : vector<338x50xf32>
    %22 = vector.broadcast %cst_11 : f32 to vector<338x50xf32>
    %23 = arith.minimumf %22, %21 : vector<338x50xf32>
    %24 = arith.mulf %23, %23 : vector<338x50xf32>
    %cst_12 = arith.constant 2.29050653E-4 : f32
    %25 = vector.broadcast %cst_12 : f32 to vector<338x50xf32>
    %26 = arith.mulf %25, %24 : vector<338x50xf32>
    %cst_13 = arith.constant 0.00340829091 : f32
    %27 = vector.broadcast %cst_13 : f32 to vector<338x50xf32>
    %28 = arith.addf %26, %27 : vector<338x50xf32>
    %29 = arith.mulf %28, %24 : vector<338x50xf32>
    %cst_14 = arith.constant 0.0509556942 : f32
    %30 = vector.broadcast %cst_14 : f32 to vector<338x50xf32>
    %31 = arith.addf %29, %30 : vector<338x50xf32>
    %32 = arith.mulf %31, %24 : vector<338x50xf32>
    %cst_15 = arith.constant 0.185208321 : f32
    %33 = vector.broadcast %cst_15 : f32 to vector<338x50xf32>
    %34 = arith.addf %32, %33 : vector<338x50xf32>
    %35 = arith.mulf %34, %24 : vector<338x50xf32>
    %cst_16 = arith.constant 1.12837911 : f32
    %36 = vector.broadcast %cst_16 : f32 to vector<338x50xf32>
    %37 = arith.addf %35, %36 : vector<338x50xf32>
    %cst_17 = arith.constant -1.17916031E-7 : f32
    %38 = vector.broadcast %cst_17 : f32 to vector<338x50xf32>
    %39 = arith.mulf %38, %24 : vector<338x50xf32>
    %cst_18 = arith.constant 2.35479656E-5 : f32
    %40 = vector.broadcast %cst_18 : f32 to vector<338x50xf32>
    %41 = arith.addf %39, %40 : vector<338x50xf32>
    %42 = arith.mulf %41, %24 : vector<338x50xf32>
    %cst_19 = arith.constant 0.00101796258 : f32
    %43 = vector.broadcast %cst_19 : f32 to vector<338x50xf32>
    %44 = arith.addf %42, %43 : vector<338x50xf32>
    %45 = arith.mulf %44, %24 : vector<338x50xf32>
    %cst_20 = arith.constant 0.0140704699 : f32
    %46 = vector.broadcast %cst_20 : f32 to vector<338x50xf32>
    %47 = arith.addf %45, %46 : vector<338x50xf32>
    %48 = arith.mulf %47, %24 : vector<338x50xf32>
    %cst_21 = arith.constant 0.110985048 : f32
    %49 = vector.broadcast %cst_21 : f32 to vector<338x50xf32>
    %50 = arith.addf %48, %49 : vector<338x50xf32>
    %51 = arith.mulf %50, %24 : vector<338x50xf32>
    %cst_22 = arith.constant 0.497469246 : f32
    %52 = vector.broadcast %cst_22 : f32 to vector<338x50xf32>
    %53 = arith.addf %51, %52 : vector<338x50xf32>
    %54 = arith.mulf %53, %24 : vector<338x50xf32>
    %cst_23 = arith.constant 1.000000e+00 : f32
    %55 = vector.broadcast %cst_23 : f32 to vector<338x50xf32>
    %56 = arith.addf %54, %55 : vector<338x50xf32>
    %57 = arith.mulf %23, %37 : vector<338x50xf32>
    %58 = tpu.reciprocal %56 {approx = true} : vector<338x50xf32> -> vector<338x50xf32>
    %59 = arith.mulf %57, %58 : vector<338x50xf32>
    %cst_24 = arith.constant 5.000000e-01 : f32
    %60 = vector.broadcast %cst_24 : f32 to vector<338x50xf32>
    %61 = arith.mulf %60, %59 : vector<338x50xf32>
    %cst_25 = arith.constant 5.000000e-01 : f32
    %62 = vector.broadcast %cst_25 : f32 to vector<338x50xf32>
    %63 = arith.subf %62, %61 : vector<338x50xf32>
    %c0_26 = arith.constant 0 : index
    %c0_27 = arith.constant 0 : index
    %64 = vector.load %arg4[%c0_26, %c0_27] : memref<338x50xf32, #tpu.memory_space<vmem>>, vector<338x50xf32>
    tpu.vector_store %arg4[%c0_26, %c0_27], %63 {strides = array<i32>} : memref<338x50xf32, #tpu.memory_space<vmem>>, vector<338x50xf32>,
    return
  }
  func.func @transform_0(%arg0: i32) -> (i32, i32) {
    %c0_i32 = arith.constant 0 : i32
    %c0_i32_0 = arith.constant 0 : i32
    return %arg0, %c0_i32 : i32, i32
  }
  func.func @transform_1(%arg0: i32) -> (i32, i32) {
    %c0_i32 = arith.constant 0 : i32
    %c0_i32_0 = arith.constant 0 : i32
    %c0_i32_1 = arith.constant 0 : i32
    return %c0_i32, %c0_i32_0 : i32, i32
  }
  func.func @transform_2(%arg0: i32) -> (i32, i32) {
    %c0_i32 = arith.constant 0 : i32
    %c0_i32_0 = arith.constant 0 : i32
    %c0_i32_1 = arith.constant 0 : i32
    return %c0_i32, %c0_i32_0 : i32, i32
  }
  func.func @transform_3(%arg0: i32) -> (i32, i32) {
    %c0_i32 = arith.constant 0 : i32
    %c0_i32_0 = arith.constant 0 : i32
    return %arg0, %c0_i32 : i32, i32
  }
}

module attributes {stable_mosaic.version = 11 : i64} {
  func.func @_sign_dense_kernel(%arg0: i32, %arg1: memref<72x450xf32, #tpu.memory_space<vmem>>, %arg2: memref<450x50xf32, #tpu.memory_space<vmem>>, %arg3: memref<1x50xf32, #tpu.memory_space<vmem>>, %arg4: memref<72x50xf32, #tpu.memory_space<vmem>>) attributes {dimension_semantics = [#tpu.dimension_semantics<parallel>], iteration_bounds = array<i64: 1>, scalar_prefetch = 0 : i64, scratch_operands = 0 : i64, tpu.core_type = #tpu.core_type<tc>, window_params = [{transform_indices = @transform_0, window_bounds = array<i64: 72, 450>}, {pipeline_mode = #tpu.pipeline_mode<synchronous>, transform_indices = @transform_1, window_bounds = array<i64: 450, 50>}, {pipeline_mode = #tpu.pipeline_mode<synchronous>, transform_indices = @transform_2, window_bounds = array<i64: 1, 50>}, {transform_indices = @transform_3, window_bounds = array<i64: 72, 50>}]} {
    %c0 = arith.constant 0 : index
    %c0_0 = arith.constant 0 : index
    %0 = vector.load %arg1[%c0, %c0_0] : memref<72x450xf32, #tpu.memory_space<vmem>>, vector<72x450xf32>
    %c0_1 = arith.constant 0 : index
    %c0_2 = arith.constant 0 : index
    %1 = vector.load %arg2[%c0_1, %c0_2] : memref<450x50xf32, #tpu.memory_space<vmem>>, vector<450x50xf32>
    %cst = arith.constant dense<0.000000e+00> : vector<72x50xf32>
    %2 = tpu.matmul %0, %1, %cst {dimension_numbers = #tpu.dot_dimension_numbers<[1], [0], [0], [1], [0, 0, 1, 1], [], []>} : vector<72x450xf32>, vector<450x50xf32>, vector<72x50xf32> -> vector<72x50xf32>
    %c0_3 = arith.constant 0 : index
    %c0_4 = arith.constant 0 : index
    %3 = vector.load %arg3[%c0_3, %c0_4] : memref<1x50xf32, #tpu.memory_space<vmem>>, vector<1x50xf32>
    %4 = vector.broadcast %3 : vector<1x50xf32> to vector<72x50xf32>
    %5 = arith.addf %2, %4 : vector<72x50xf32>
    %6 = arith.mulf %5, %5 : vector<72x50xf32>
    %cst_5 = arith.constant 0.00222222228 : f32
    %7 = vector.broadcast %cst_5 : f32 to vector<72x50xf32>
    %8 = arith.mulf %6, %7 : vector<72x50xf32>
    %9 = arith.subf %5, %8 : vector<72x50xf32>
    %cst_6 = arith.constant 9.99999997E-7 : f32
    %10 = vector.broadcast %cst_6 : f32 to vector<72x50xf32>
    %11 = arith.addf %9, %10 : vector<72x50xf32>
    %cst_7 = arith.constant 9.99999997E-7 : f32
    %12 = vector.broadcast %cst_7 : f32 to vector<72x50xf32>
    %13 = arith.maximumf %11, %12 : vector<72x50xf32>
    %cst_8 = arith.constant 2.245000e+02 : f32
    %14 = vector.broadcast %cst_8 : f32 to vector<72x50xf32>
    %15 = arith.subf %14, %5 : vector<72x50xf32>
    %cst_9 = arith.constant 2.000000e+00 : f32
    %16 = vector.broadcast %cst_9 : f32 to vector<72x50xf32>
    %17 = arith.mulf %16, %13 : vector<72x50xf32>
    %18 = math.rsqrt %17 : vector<72x50xf32>
    %19 = arith.mulf %15, %18 : vector<72x50xf32>
    %cst_10 = arith.constant -4.000000e+00 : f32
    %cst_11 = arith.constant 4.000000e+00 : f32
    %20 = vector.broadcast %cst_10 : f32 to vector<72x50xf32>
    %21 = arith.maximumf %20, %19 : vector<72x50xf32>
    %22 = vector.broadcast %cst_11 : f32 to vector<72x50xf32>
    %23 = arith.minimumf %22, %21 : vector<72x50xf32>
    %24 = arith.mulf %23, %23 : vector<72x50xf32>
    %cst_12 = arith.constant 2.29050653E-4 : f32
    %25 = vector.broadcast %cst_12 : f32 to vector<72x50xf32>
    %26 = arith.mulf %25, %24 : vector<72x50xf32>
    %cst_13 = arith.constant 0.00340829091 : f32
    %27 = vector.broadcast %cst_13 : f32 to vector<72x50xf32>
    %28 = arith.addf %26, %27 : vector<72x50xf32>
    %29 = arith.mulf %28, %24 : vector<72x50xf32>
    %cst_14 = arith.constant 0.0509556942 : f32
    %30 = vector.broadcast %cst_14 : f32 to vector<72x50xf32>
    %31 = arith.addf %29, %30 : vector<72x50xf32>
    %32 = arith.mulf %31, %24 : vector<72x50xf32>
    %cst_15 = arith.constant 0.185208321 : f32
    %33 = vector.broadcast %cst_15 : f32 to vector<72x50xf32>
    %34 = arith.addf %32, %33 : vector<72x50xf32>
    %35 = arith.mulf %34, %24 : vector<72x50xf32>
    %cst_16 = arith.constant 1.12837911 : f32
    %36 = vector.broadcast %cst_16 : f32 to vector<72x50xf32>
    %37 = arith.addf %35, %36 : vector<72x50xf32>
    %cst_17 = arith.constant -1.17916031E-7 : f32
    %38 = vector.broadcast %cst_17 : f32 to vector<72x50xf32>
    %39 = arith.mulf %38, %24 : vector<72x50xf32>
    %cst_18 = arith.constant 2.35479656E-5 : f32
    %40 = vector.broadcast %cst_18 : f32 to vector<72x50xf32>
    %41 = arith.addf %39, %40 : vector<72x50xf32>
    %42 = arith.mulf %41, %24 : vector<72x50xf32>
    %cst_19 = arith.constant 0.00101796258 : f32
    %43 = vector.broadcast %cst_19 : f32 to vector<72x50xf32>
    %44 = arith.addf %42, %43 : vector<72x50xf32>
    %45 = arith.mulf %44, %24 : vector<72x50xf32>
    %cst_20 = arith.constant 0.0140704699 : f32
    %46 = vector.broadcast %cst_20 : f32 to vector<72x50xf32>
    %47 = arith.addf %45, %46 : vector<72x50xf32>
    %48 = arith.mulf %47, %24 : vector<72x50xf32>
    %cst_21 = arith.constant 0.110985048 : f32
    %49 = vector.broadcast %cst_21 : f32 to vector<72x50xf32>
    %50 = arith.addf %48, %49 : vector<72x50xf32>
    %51 = arith.mulf %50, %24 : vector<72x50xf32>
    %cst_22 = arith.constant 0.497469246 : f32
    %52 = vector.broadcast %cst_22 : f32 to vector<72x50xf32>
    %53 = arith.addf %51, %52 : vector<72x50xf32>
    %54 = arith.mulf %53, %24 : vector<72x50xf32>
    %cst_23 = arith.constant 1.000000e+00 : f32
    %55 = vector.broadcast %cst_23 : f32 to vector<72x50xf32>
    %56 = arith.addf %54, %55 : vector<72x50xf32>
    %57 = arith.mulf %23, %37 : vector<72x50xf32>
    %58 = tpu.reciprocal %56 {approx = true} : vector<72x50xf32> -> vector<72x50xf32>
    %59 = arith.mulf %57, %58 : vector<72x50xf32>
    %cst_24 = arith.constant 5.000000e-01 : f32
    %60 = vector.broadcast %cst_24 : f32 to vector<72x50xf32>
    %61 = arith.mulf %60, %59 : vector<72x50xf32>
    %cst_25 = arith.constant 5.000000e-01 : f32
    %62 = vector.broadcast %cst_25 : f32 to vector<72x50xf32>
    %63 = arith.subf %62, %61 : vector<72x50xf32>
    %c0_26 = arith.constant 0 : index
    %c0_27 = arith.constant 0 : index
    %64 = vector.load %arg4[%c0_26, %c0_27] : memref<72x50xf32, #tpu.memory_space<vmem>>, vector<72x50xf32>
    tpu.vector_store %arg4[%c0_26, %c0_27], %63 {strides = array<i32>} : memref<72x50xf32, #tpu.memory_space<vmem>>, vector<72x50xf32>,
    return
  }
  func.func @transform_0(%arg0: i32) -> (i32, i32) {
    %c0_i32 = arith.constant 0 : i32
    %c0_i32_0 = arith.constant 0 : i32
    return %arg0, %c0_i32 : i32, i32
  }
  func.func @transform_1(%arg0: i32) -> (i32, i32) {
    %c0_i32 = arith.constant 0 : i32
    %c0_i32_0 = arith.constant 0 : i32
    %c0_i32_1 = arith.constant 0 : i32
    return %c0_i32, %c0_i32_0 : i32, i32
  }
  func.func @transform_2(%arg0: i32) -> (i32, i32) {
    %c0_i32 = arith.constant 0 : i32
    %c0_i32_0 = arith.constant 0 : i32
    %c0_i32_1 = arith.constant 0 : i32
    return %c0_i32, %c0_i32_0 : i32, i32
  }
  func.func @transform_3(%arg0: i32) -> (i32, i32) {
    %c0_i32 = arith.constant 0 : i32
    %c0_i32_0 = arith.constant 0 : i32
    return %arg0, %c0_i32 : i32, i32
  }
}

module attributes {stable_mosaic.version = 11 : i64} {
  func.func @_fused_linear_kernel(%arg0: i32, %arg1: memref<2x1800xf32, #tpu.memory_space<vmem>>, %arg2: memref<1800x500xf32, #tpu.memory_space<vmem>>, %arg3: memref<1x500xf32, #tpu.memory_space<vmem>>, %arg4: memref<500x4xf32, #tpu.memory_space<vmem>>, %arg5: memref<1x4xf32, #tpu.memory_space<vmem>>, %arg6: memref<2x4xf32, #tpu.memory_space<vmem>>) attributes {dimension_semantics = [#tpu.dimension_semantics<parallel>], iteration_bounds = array<i64: 1>, scalar_prefetch = 0 : i64, scratch_operands = 0 : i64, tpu.core_type = #tpu.core_type<tc>, window_params = [{transform_indices = @transform_0, window_bounds = array<i64: 2, 1800>}, {pipeline_mode = #tpu.pipeline_mode<synchronous>, transform_indices = @transform_1, window_bounds = array<i64: 1800, 500>}, {pipeline_mode = #tpu.pipeline_mode<synchronous>, transform_indices = @transform_2, window_bounds = array<i64: 1, 500>}, {pipeline_mode = #tpu.pipeline_mode<synchronous>, transform_indices = @transform_3, window_bounds = array<i64: 500, 4>}, {pipeline_mode = #tpu.pipeline_mode<synchronous>, transform_indices = @transform_4, window_bounds = array<i64: 1, 4>}, {transform_indices = @transform_5, window_bounds = array<i64: 2, 4>}]} {
    %c0 = arith.constant 0 : index
    %c0_0 = arith.constant 0 : index
    %0 = vector.load %arg1[%c0, %c0_0] : memref<2x1800xf32, #tpu.memory_space<vmem>>, vector<2x1800xf32>
    %c0_1 = arith.constant 0 : index
    %c0_2 = arith.constant 0 : index
    %1 = vector.load %arg2[%c0_1, %c0_2] : memref<1800x500xf32, #tpu.memory_space<vmem>>, vector<1800x500xf32>
    %cst = arith.constant dense<0.000000e+00> : vector<2x500xf32>
    %2 = tpu.matmul %0, %1, %cst {dimension_numbers = #tpu.dot_dimension_numbers<[1], [0], [0], [1], [0, 0, 1, 1], [], []>} : vector<2x1800xf32>, vector<1800x500xf32>, vector<2x500xf32> -> vector<2x500xf32>
    %c0_3 = arith.constant 0 : index
    %c0_4 = arith.constant 0 : index
    %3 = vector.load %arg3[%c0_3, %c0_4] : memref<1x500xf32, #tpu.memory_space<vmem>>, vector<1x500xf32>
    %4 = vector.broadcast %3 : vector<1x500xf32> to vector<2x500xf32>
    %5 = arith.addf %2, %4 : vector<2x500xf32>
    %6 = arith.mulf %5, %5 : vector<2x500xf32>
    %cst_5 = arith.constant 5.55555569E-4 : f32
    %7 = vector.broadcast %cst_5 : f32 to vector<2x500xf32>
    %8 = arith.mulf %6, %7 : vector<2x500xf32>
    %9 = arith.subf %5, %8 : vector<2x500xf32>
    %cst_6 = arith.constant 9.99999997E-7 : f32
    %10 = vector.broadcast %cst_6 : f32 to vector<2x500xf32>
    %11 = arith.addf %9, %10 : vector<2x500xf32>
    %cst_7 = arith.constant 9.99999997E-7 : f32
    %12 = vector.broadcast %cst_7 : f32 to vector<2x500xf32>
    %13 = arith.maximumf %11, %12 : vector<2x500xf32>
    %cst_8 = arith.constant 8.995000e+02 : f32
    %14 = vector.broadcast %cst_8 : f32 to vector<2x500xf32>
    %15 = arith.subf %14, %5 : vector<2x500xf32>
    %cst_9 = arith.constant 2.000000e+00 : f32
    %16 = vector.broadcast %cst_9 : f32 to vector<2x500xf32>
    %17 = arith.mulf %16, %13 : vector<2x500xf32>
    %18 = math.rsqrt %17 : vector<2x500xf32>
    %19 = arith.mulf %15, %18 : vector<2x500xf32>
    %cst_10 = arith.constant -4.000000e+00 : f32
    %cst_11 = arith.constant 4.000000e+00 : f32
    %20 = vector.broadcast %cst_10 : f32 to vector<2x500xf32>
    %21 = arith.maximumf %20, %19 : vector<2x500xf32>
    %22 = vector.broadcast %cst_11 : f32 to vector<2x500xf32>
    %23 = arith.minimumf %22, %21 : vector<2x500xf32>
    %24 = arith.mulf %23, %23 : vector<2x500xf32>
    %cst_12 = arith.constant 2.29050653E-4 : f32
    %25 = vector.broadcast %cst_12 : f32 to vector<2x500xf32>
    %26 = arith.mulf %25, %24 : vector<2x500xf32>
    %cst_13 = arith.constant 0.00340829091 : f32
    %27 = vector.broadcast %cst_13 : f32 to vector<2x500xf32>
    %28 = arith.addf %26, %27 : vector<2x500xf32>
    %29 = arith.mulf %28, %24 : vector<2x500xf32>
    %cst_14 = arith.constant 0.0509556942 : f32
    %30 = vector.broadcast %cst_14 : f32 to vector<2x500xf32>
    %31 = arith.addf %29, %30 : vector<2x500xf32>
    %32 = arith.mulf %31, %24 : vector<2x500xf32>
    %cst_15 = arith.constant 0.185208321 : f32
    %33 = vector.broadcast %cst_15 : f32 to vector<2x500xf32>
    %34 = arith.addf %32, %33 : vector<2x500xf32>
    %35 = arith.mulf %34, %24 : vector<2x500xf32>
    %cst_16 = arith.constant 1.12837911 : f32
    %36 = vector.broadcast %cst_16 : f32 to vector<2x500xf32>
    %37 = arith.addf %35, %36 : vector<2x500xf32>
    %cst_17 = arith.constant -1.17916031E-7 : f32
    %38 = vector.broadcast %cst_17 : f32 to vector<2x500xf32>
    %39 = arith.mulf %38, %24 : vector<2x500xf32>
    %cst_18 = arith.constant 2.35479656E-5 : f32
    %40 = vector.broadcast %cst_18 : f32 to vector<2x500xf32>
    %41 = arith.addf %39, %40 : vector<2x500xf32>
    %42 = arith.mulf %41, %24 : vector<2x500xf32>
    %cst_19 = arith.constant 0.00101796258 : f32
    %43 = vector.broadcast %cst_19 : f32 to vector<2x500xf32>
    %44 = arith.addf %42, %43 : vector<2x500xf32>
    %45 = arith.mulf %44, %24 : vector<2x500xf32>
    %cst_20 = arith.constant 0.0140704699 : f32
    %46 = vector.broadcast %cst_20 : f32 to vector<2x500xf32>
    %47 = arith.addf %45, %46 : vector<2x500xf32>
    %48 = arith.mulf %47, %24 : vector<2x500xf32>
    %cst_21 = arith.constant 0.110985048 : f32
    %49 = vector.broadcast %cst_21 : f32 to vector<2x500xf32>
    %50 = arith.addf %48, %49 : vector<2x500xf32>
    %51 = arith.mulf %50, %24 : vector<2x500xf32>
    %cst_22 = arith.constant 0.497469246 : f32
    %52 = vector.broadcast %cst_22 : f32 to vector<2x500xf32>
    %53 = arith.addf %51, %52 : vector<2x500xf32>
    %54 = arith.mulf %53, %24 : vector<2x500xf32>
    %cst_23 = arith.constant 1.000000e+00 : f32
    %55 = vector.broadcast %cst_23 : f32 to vector<2x500xf32>
    %56 = arith.addf %54, %55 : vector<2x500xf32>
    %57 = arith.mulf %23, %37 : vector<2x500xf32>
    %58 = tpu.reciprocal %56 {approx = true} : vector<2x500xf32> -> vector<2x500xf32>
    %59 = arith.mulf %57, %58 : vector<2x500xf32>
    %cst_24 = arith.constant 5.000000e-01 : f32
    %60 = vector.broadcast %cst_24 : f32 to vector<2x500xf32>
    %61 = arith.mulf %60, %59 : vector<2x500xf32>
    %cst_25 = arith.constant 5.000000e-01 : f32
    %62 = vector.broadcast %cst_25 : f32 to vector<2x500xf32>
    %63 = arith.subf %62, %61 : vector<2x500xf32>
    %c0_26 = arith.constant 0 : index
    %c0_27 = arith.constant 0 : index
    %64 = vector.load %arg4[%c0_26, %c0_27] : memref<500x4xf32, #tpu.memory_space<vmem>>, vector<500x4xf32>
    %cst_28 = arith.constant dense<0.000000e+00> : vector<2x4xf32>
    %65 = tpu.matmul %63, %64, %cst_28 {dimension_numbers = #tpu.dot_dimension_numbers<[1], [0], [0], [1], [0, 0, 1, 1], [], []>} : vector<2x500xf32>, vector<500x4xf32>, vector<2x4xf32> -> vector<2x4xf32>
    %c0_29 = arith.constant 0 : index
    %c0_30 = arith.constant 0 : index
    %66 = vector.load %arg5[%c0_29, %c0_30] : memref<1x4xf32, #tpu.memory_space<vmem>>, vector<1x4xf32>
    %67 = vector.broadcast %66 : vector<1x4xf32> to vector<2x4xf32>
    %68 = arith.addf %65, %67 : vector<2x4xf32>
    %69 = arith.mulf %68, %68 : vector<2x4xf32>
    %cst_31 = arith.constant 2.000000e-03 : f32
    %70 = vector.broadcast %cst_31 : f32 to vector<2x4xf32>
    %71 = arith.mulf %69, %70 : vector<2x4xf32>
    %72 = arith.subf %68, %71 : vector<2x4xf32>
    %cst_32 = arith.constant 9.99999997E-7 : f32
    %73 = vector.broadcast %cst_32 : f32 to vector<2x4xf32>
    %74 = arith.addf %72, %73 : vector<2x4xf32>
    %cst_33 = arith.constant 9.99999997E-7 : f32
    %75 = vector.broadcast %cst_33 : f32 to vector<2x4xf32>
    %76 = arith.maximumf %74, %75 : vector<2x4xf32>
    %cst_34 = arith.constant 2.495000e+02 : f32
    %77 = vector.broadcast %cst_34 : f32 to vector<2x4xf32>
    %78 = arith.subf %77, %68 : vector<2x4xf32>
    %cst_35 = arith.constant 2.000000e+00 : f32
    %79 = vector.broadcast %cst_35 : f32 to vector<2x4xf32>
    %80 = arith.mulf %79, %76 : vector<2x4xf32>
    %81 = math.rsqrt %80 : vector<2x4xf32>
    %82 = arith.mulf %78, %81 : vector<2x4xf32>
    %cst_36 = arith.constant -4.000000e+00 : f32
    %cst_37 = arith.constant 4.000000e+00 : f32
    %83 = vector.broadcast %cst_36 : f32 to vector<2x4xf32>
    %84 = arith.maximumf %83, %82 : vector<2x4xf32>
    %85 = vector.broadcast %cst_37 : f32 to vector<2x4xf32>
    %86 = arith.minimumf %85, %84 : vector<2x4xf32>
    %87 = arith.mulf %86, %86 : vector<2x4xf32>
    %cst_38 = arith.constant 2.29050653E-4 : f32
    %88 = vector.broadcast %cst_38 : f32 to vector<2x4xf32>
    %89 = arith.mulf %88, %87 : vector<2x4xf32>
    %cst_39 = arith.constant 0.00340829091 : f32
    %90 = vector.broadcast %cst_39 : f32 to vector<2x4xf32>
    %91 = arith.addf %89, %90 : vector<2x4xf32>
    %92 = arith.mulf %91, %87 : vector<2x4xf32>
    %cst_40 = arith.constant 0.0509556942 : f32
    %93 = vector.broadcast %cst_40 : f32 to vector<2x4xf32>
    %94 = arith.addf %92, %93 : vector<2x4xf32>
    %95 = arith.mulf %94, %87 : vector<2x4xf32>
    %cst_41 = arith.constant 0.185208321 : f32
    %96 = vector.broadcast %cst_41 : f32 to vector<2x4xf32>
    %97 = arith.addf %95, %96 : vector<2x4xf32>
    %98 = arith.mulf %97, %87 : vector<2x4xf32>
    %cst_42 = arith.constant 1.12837911 : f32
    %99 = vector.broadcast %cst_42 : f32 to vector<2x4xf32>
    %100 = arith.addf %98, %99 : vector<2x4xf32>
    %cst_43 = arith.constant -1.17916031E-7 : f32
    %101 = vector.broadcast %cst_43 : f32 to vector<2x4xf32>
    %102 = arith.mulf %101, %87 : vector<2x4xf32>
    %cst_44 = arith.constant 2.35479656E-5 : f32
    %103 = vector.broadcast %cst_44 : f32 to vector<2x4xf32>
    %104 = arith.addf %102, %103 : vector<2x4xf32>
    %105 = arith.mulf %104, %87 : vector<2x4xf32>
    %cst_45 = arith.constant 0.00101796258 : f32
    %106 = vector.broadcast %cst_45 : f32 to vector<2x4xf32>
    %107 = arith.addf %105, %106 : vector<2x4xf32>
    %108 = arith.mulf %107, %87 : vector<2x4xf32>
    %cst_46 = arith.constant 0.0140704699 : f32
    %109 = vector.broadcast %cst_46 : f32 to vector<2x4xf32>
    %110 = arith.addf %108, %109 : vector<2x4xf32>
    %111 = arith.mulf %110, %87 : vector<2x4xf32>
    %cst_47 = arith.constant 0.110985048 : f32
    %112 = vector.broadcast %cst_47 : f32 to vector<2x4xf32>
    %113 = arith.addf %111, %112 : vector<2x4xf32>
    %114 = arith.mulf %113, %87 : vector<2x4xf32>
    %cst_48 = arith.constant 0.497469246 : f32
    %115 = vector.broadcast %cst_48 : f32 to vector<2x4xf32>
    %116 = arith.addf %114, %115 : vector<2x4xf32>
    %117 = arith.mulf %116, %87 : vector<2x4xf32>
    %cst_49 = arith.constant 1.000000e+00 : f32
    %118 = vector.broadcast %cst_49 : f32 to vector<2x4xf32>
    %119 = arith.addf %117, %118 : vector<2x4xf32>
    %120 = arith.mulf %86, %100 : vector<2x4xf32>
    %121 = tpu.reciprocal %119 {approx = true} : vector<2x4xf32> -> vector<2x4xf32>
    %122 = arith.mulf %120, %121 : vector<2x4xf32>
    %cst_50 = arith.constant 5.000000e-01 : f32
    %123 = vector.broadcast %cst_50 : f32 to vector<2x4xf32>
    %124 = arith.mulf %123, %122 : vector<2x4xf32>
    %cst_51 = arith.constant 5.000000e-01 : f32
    %125 = vector.broadcast %cst_51 : f32 to vector<2x4xf32>
    %126 = arith.subf %125, %124 : vector<2x4xf32>
    %c0_52 = arith.constant 0 : index
    %c0_53 = arith.constant 0 : index
    %127 = vector.load %arg6[%c0_52, %c0_53] : memref<2x4xf32, #tpu.memory_space<vmem>>, vector<2x4xf32>
    tpu.vector_store %arg6[%c0_52, %c0_53], %126 {strides = array<i32>} : memref<2x4xf32, #tpu.memory_space<vmem>>, vector<2x4xf32>,
    return
  }
  func.func @transform_0(%arg0: i32) -> (i32, i32) {
    %c0_i32 = arith.constant 0 : i32
    %c0_i32_0 = arith.constant 0 : i32
    return %arg0, %c0_i32 : i32, i32
  }
  func.func @transform_1(%arg0: i32) -> (i32, i32) {
    %c0_i32 = arith.constant 0 : i32
    %c0_i32_0 = arith.constant 0 : i32
    %c0_i32_1 = arith.constant 0 : i32
    return %c0_i32, %c0_i32_0 : i32, i32
  }
  func.func @transform_2(%arg0: i32) -> (i32, i32) {
    %c0_i32 = arith.constant 0 : i32
    %c0_i32_0 = arith.constant 0 : i32
    %c0_i32_1 = arith.constant 0 : i32
    return %c0_i32, %c0_i32_0 : i32, i32
  }
  func.func @transform_3(%arg0: i32) -> (i32, i32) {
    %c0_i32 = arith.constant 0 : i32
    %c0_i32_0 = arith.constant 0 : i32
    %c0_i32_1 = arith.constant 0 : i32
    return %c0_i32, %c0_i32_0 : i32, i32
  }
  func.func @transform_4(%arg0: i32) -> (i32, i32) {
    %c0_i32 = arith.constant 0 : i32
    %c0_i32_0 = arith.constant 0 : i32
    %c0_i32_1 = arith.constant 0 : i32
    return %c0_i32, %c0_i32_0 : i32, i32
  }
  func.func @transform_5(%arg0: i32) -> (i32, i32) {
    %c0_i32 = arith.constant 0 : i32
    %c0_i32_0 = arith.constant 0 : i32
    return %arg0, %c0_i32 : i32, i32
  }
}

</mosaic_0001>

<llo_original>
// kernel: digitalnet1_forward.3
$region0: #{digitalnet1_forward.3}
  #allocation0 [shape = 'u32[]', space=smem, size = 0x4, offset = 0x4, fixed_abs, tag = 'smem constant byte address 0x4 - core index']
  #allocation1 [shape = 'u32[144,128]{1,0:T(1,128)}', space=vmem, size = 0x12000, scoped, tag = 'internal scratch']
  %s0 = inlined_call_operand.vmem [shape: f32[338,9], index: 0, kind: input, shape index: {}]
  %s1 = inlined_call_operand.vmem [shape: f32[9,50], index: 1, kind: input, shape index: {}]
  %s2 = inlined_call_operand.vmem [shape: f32[1,50], index: 2, kind: input, shape index: {}]
  %s3 = inlined_call_operand.vmem [shape: f32[338,50], index: 3, kind: output, shape index: {}]
  %s4 = sld [smem:[#allocation0]]
  $region22: #{digitalnet1_forward.3} parent=0
    _
  %s6 = ssub.s32 1, %s4
  %s7 = scalar_select 0, %s6, %s4
  // Predicated region
  $region2: #{digitalnet1_forward.3} parent=0 // pred_check
    _
  $region3: #{digitalnet1_forward.3} parent=0 // pred_check_branch
    %9 = sbr.rel (0) target = $region5
  $region4: #{digitalnet1_forward.3} parent=0 // pred_region
    _
  $region5: #{digitalnet1_forward.3} parent=0 // pred_fallthru
    _
  // Predicated region
  $region6: #{digitalnet1_forward.3} parent=0 // pred_check
    _
  $region7: #{digitalnet1_forward.3} parent=0 // pred_check_branch
    %11 = sbr.rel (0) target = $region9
  $region8: #{digitalnet1_forward.3} parent=0 // pred_region
    _
  $region9: #{digitalnet1_forward.3} parent=0 // pred_fallthru
    _
  // Predicated region
  $region10: #{digitalnet1_forward.3} parent=0 // pred_check
    _
  $region11: #{digitalnet1_forward.3} parent=0 // pred_check_branch
    %13 = sbr.rel (0) target = $region13
  $region12: #{digitalnet1_forward.3} parent=0 // pred_region
    _
  $region13: #{digitalnet1_forward.3} parent=0 // pred_fallthru
    _
  %v14 = vld [vmem:[%s0] sm:$0xff]
  %v15 = vld [vmem:[%s0 + $0x8] sm:$0xff]
  %v16 = vld [vmem:[%s0 + $0x10] sm:$0xff]
  %v17 = vld [vmem:[%s0 + $0x18] sm:$0xff]
  %v18 = vld [vmem:[%s0 + $0x20] sm:$0xff]
  %v19 = vld [vmem:[%s0 + $0x28] sm:$0xff]
  %v20 = vld [vmem:[%s0 + $0x30] sm:$0xff]
  %v21 = vld [vmem:[%s0 + $0x38] sm:$0xff]
  %v22 = vld [vmem:[%s0 + $0x40] sm:$0xff]
  %v23 = vld [vmem:[%s0 + $0x48] sm:$0xff]
  %v24 = vld [vmem:[%s0 + $0x50] sm:$0xff]
  %v25 = vld [vmem:[%s0 + $0x58] sm:$0xff]
  %v26 = vld [vmem:[%s0 + $0x60] sm:$0xff]
  %v27 = vld [vmem:[%s0 + $0x68] sm:$0xff]
  %v28 = vld [vmem:[%s0 + $0x70] sm:$0xff]
  %v29 = vld [vmem:[%s0 + $0x78] sm:$0xff]
  %v30 = vld [vmem:[%s0 + $0x80] sm:$0xff]
  %v31 = vld [vmem:[%s0 + $0x88] sm:$0xff]
  %v32 = vld [vmem:[%s0 + $0x90] sm:$0xff]
  %v33 = vld [vmem:[%s0 + $0x98] sm:$0xff]
  %v34 = vld [vmem:[%s0 + $0xa0] sm:$0xff]
  %v35 = vld [vmem:[%s0 + $0xa8] sm:$0xff]
  %v36 = vld [vmem:[%s0 + $0xb0] sm:$0xff]
  %v37 = vld [vmem:[%s0 + $0xb8] sm:$0xff]
  %v38 = vld [vmem:[%s0 + $0xc0] sm:$0xff]
  %v39 = vld [vmem:[%s0 + $0xc8] sm:$0xff]
  %v40 = vld [vmem:[%s0 + $0xd0] sm:$0xff]
  %v41 = vld [vmem:[%s0 + $0xd8] sm:$0xff]
  %v42 = vld [vmem:[%s0 + $0xe0] sm:$0xff]
  %v43 = vld [vmem:[%s0 + $0xe8] sm:$0xff]
  %v44 = vld [vmem:[%s0 + $0xf0] sm:$0xff]
  %v45 = vld [vmem:[%s0 + $0xf8] sm:$0xff]
  %v46 = vld [vmem:[%s0 + $0x100] sm:$0xff]
  %v47 = vld [vmem:[%s0 + $0x108] sm:$0xff]
  %v48 = vld [vmem:[%s0 + $0x110] sm:$0xff]
  %v49 = vld [vmem:[%s0 + $0x118] sm:$0xff]
  %v50 = vld [vmem:[%s0 + $0x120] sm:$0xff]
  %v51 = vld [vmem:[%s0 + $0x128] sm:$0xff]
  %v52 = vld [vmem:[%s0 + $0x130] sm:$0xff]
  %v53 = vld [vmem:[%s0 + $0x138] sm:$0xff]
  %v54 = vld [vmem:[%s0 + $0x140] sm:$0xff]
  %v55 = vld [vmem:[%s0 + $0x148] sm:$0xff]
  %v56 = vld [vmem:[%s0 + $0x150] sm:$0x3]
  %v57 = vld [vmem:[%s1] sm:$0xff]
  %v58 = vld [vmem:[%s1 + $0x8] sm:$0x1]
  %v59 = vld [vmem:[%s2] sm:$0x1]
  %v61 = vlaneseq
  %v62 = vshrl.u32 %v61, 7
  %v63 = vsub.s32 0, %v62
  %v64 = vrot.slane %v59, %v63
  %vm66 = vcmask 72704
  %v68 = vsel %vm66, %v14, 0
  %v71 = vsel %vm66, %v15, 0
  %v74 = vsel %vm66, %v16, 0
  %v77 = vsel %vm66, %v17, 0
  %v80 = vsel %vm66, %v18, 0
  %v83 = vsel %vm66, %v19, 0
  %v86 = vsel %vm66, %v20, 0
  %v89 = vsel %vm66, %v21, 0
  %v92 = vsel %vm66, %v22, 0
  %v95 = vsel %vm66, %v23, 0
  %v98 = vsel %vm66, %v24, 0
  %v101 = vsel %vm66, %v25, 0
  %v104 = vsel %vm66, %v26, 0
  %v107 = vsel %vm66, %v27, 0
  %v110 = vsel %vm66, %v28, 0
  %v113 = vsel %vm66, %v29, 0
  %v116 = vsel %vm66, %v30, 0
  %v119 = vsel %vm66, %v31, 0
  %v122 = vsel %vm66, %v32, 0
  %v125 = vsel %vm66, %v33, 0
  %v128 = vsel %vm66, %v34, 0
  %v131 = vsel %vm66, %v35, 0
  %v134 = vsel %vm66, %v36, 0
  %v137 = vsel %vm66, %v37, 0
  %v140 = vsel %vm66, %v38, 0
  %v143 = vsel %vm66, %v39, 0
  %v146 = vsel %vm66, %v40, 0
  %v149 = vsel %vm66, %v41, 0
  %v152 = vsel %vm66, %v42, 0
  %v155 = vsel %vm66, %v43, 0
  %v158 = vsel %vm66, %v44, 0
  %v161 = vsel %vm66, %v45, 0
  %v164 = vsel %vm66, %v46, 0
  %v167 = vsel %vm66, %v47, 0
  %v170 = vsel %vm66, %v48, 0
  %v173 = vsel %vm66, %v49, 0
  %v176 = vsel %vm66, %v50, 0
  %v179 = vsel %vm66, %v51, 0
  %v182 = vsel %vm66, %v52, 0
  %v185 = vsel %vm66, %v53, 0
  %v188 = vsel %vm66, %v54, 0
  %v191 = vsel %vm66, %v55, 0
  %v194 = vsel %vm66, %v56, 0
  %vm196 = vcmask 1040384
  %v198 = vsel %vm196, %v58, 0
  %200 = vmatprep.subr.mxu0 0.0
  %201 = vmatpush1.msra.mxu0 %v57
  %202 = vmatprep.subr.mxu0 0.0
  %203 = vmatpush1.msra.mxu0 %v198
  %204 = vmatprep.subr.mxu0 0.0
  %205 = vmatpush1.msra.mxu0 0.0
  %206 = vmatprep.subr.mxu0 0.0
  %207 = vmatpush1.msra.mxu0 0.0
  %208 = vmatprep.subr.mxu0 0.0
  %209 = vmatpush1.msra.mxu0 0.0
  %210 = vmatprep.subr.mxu0 0.0
  %211 = vmatpush1.msra.mxu0 0.0
  %212 = vmatprep.subr.mxu0 0.0
  %213 = vmatpush1.msra.mxu0 0.0
  %214 = vmatprep.subr.mxu0 0.0
  %215 = vmatpush1.msra.mxu0 0.0
  %216 = vmatprep.subr.mxu0 0.0
  %217 = vmatpush1.msra.mxu0 0.0
  %218 = vmatprep.subr.mxu0 0.0
  %219 = vmatpush1.msra.mxu0 0.0
  %220 = vmatprep.subr.mxu0 0.0
  %221 = vmatpush1.msra.mxu0 0.0
  %222 = vmatprep.subr.mxu0 0.0
  %223 = vmatpush1.msra.mxu0 0.0
  %224 = vmatprep.subr.mxu0 0.0
  %225 = vmatpush1.msra.mxu0 0.0
  %226 = vmatprep.subr.mxu0 0.0
  %227 = vmatpush1.msra.mxu0 0.0
  %228 = vmatprep.subr.mxu0 0.0
  %229 = vmatpush1.msra.mxu0 0.0
  %230 = vmatprep.subr.mxu0 0.0
  %231 = vmatpush1.msra.mxu0 0.0
  %232 = vmatprep.subr.mxu0 0.0
  %233 = vmatpush1.msra.mxu0 0.0
  %234 = vmatprep.subr.mxu0 0.0
  %235 = vmatpush1.msra.mxu0 0.0
  %236 = vmatprep.subr.mxu0 0.0
  %237 = vmatpush1.msra.mxu0 0.0
  %238 = vmatprep.subr.mxu0 0.0
  %239 = vmatpush1.msra.mxu0 0.0
  %240 = vmatprep.subr.mxu0 0.0
  %241 = vmatpush1.msra.mxu0 0.0
  %242 = vmatprep.subr.mxu0 0.0
  %243 = vmatpush1.msra.mxu0 0.0
  %244 = vmatprep.subr.mxu0 0.0
  %245 = vmatpush1.msra.mxu0 0.0
  %246 = vmatprep.subr.mxu0 0.0
  %247 = vmatpush1.msra.mxu0 0.0
  %248 = vmatprep.subr.mxu0 0.0
  %249 = vmatpush1.msra.mxu0 0.0
  %250 = vmatprep.subr.mxu0 0.0
  %251 = vmatpush1.msra.mxu0 0.0
  %252 = vmatprep.subr.mxu0 0.0
  %253 = vmatpush1.msra.mxu0 0.0
  %254 = vmatprep.subr.mxu0 0.0
  %255 = vmatpush1.msra.mxu0 0.0
  %256 = vmatprep.subr.mxu0 0.0
  %257 = vmatpush1.msra.mxu0 0.0
  %258 = vmatprep.subr.mxu0 0.0
  %259 = vmatpush1.msra.mxu0 0.0
  %260 = vmatprep.subr.mxu0 0.0
  %261 = vmatpush1.msra.mxu0 0.0
  %262 = vmatprep.subr.mxu0 0.0
  %263 = vmatpush1.msra.mxu0 0.0
  %264 = vmatprep.mubr.f32.mxu0 0.0
  %265 = vmatmul.mubr.f32.gmra.mrb[0].mxu0 %v68
  %v266 = vpop.f32.mrb[0].mxu0
  %v267 = vadd.f32 %v64, %v266
  %v268 = vpop.f32.mrb[0].mxu0
  %269 = vmatprep.mubr.f32.mxu0 0.0
  %270 = vmatmul.mubr.f32.gmra.mrb[0].mxu0 %v71
  %v271 = vpop.f32.mrb[0].mxu0
  %v272 = vadd.f32 %v64, %v271
  %v273 = vpop.f32.mrb[0].mxu0
  %274 = vmatprep.mubr.f32.mxu0 0.0
  %275 = vmatmul.mubr.f32.gmra.mrb[0].mxu0 %v74
  %v276 = vpop.f32.mrb[0].mxu0
  %v277 = vadd.f32 %v64, %v276
  %v278 = vpop.f32.mrb[0].mxu0
  %279 = vmatprep.mubr.f32.mxu0 0.0
  %280 = vmatmul.mubr.f32.gmra.mrb[0].mxu0 %v77
  %v281 = vpop.f32.mrb[0].mxu0
  %v282 = vadd.f32 %v64, %v281
  %v283 = vpop.f32.mrb[0].mxu0
  %284 = vmatprep.mubr.f32.mxu0 0.0
  %285 = vmatmul.mubr.f32.gmra.mrb[0].mxu0 %v80
  %v286 = vpop.f32.mrb[0].mxu0
  %v287 = vadd.f32 %v64, %v286
  %v288 = vpop.f32.mrb[0].mxu0
  %289 = vmatprep.mubr.f32.mxu0 0.0
  %290 = vmatmul.mubr.f32.gmra.mrb[0].mxu0 %v83
  %v291 = vpop.f32.mrb[0].mxu0
  %v292 = vadd.f32 %v64, %v291
  %v293 = vpop.f32.mrb[0].mxu0
  %294 = vmatprep.mubr.f32.mxu0 0.0
  %295 = vmatmul.mubr.f32.gmra.mrb[0].mxu0 %v86
  %v296 = vpop.f32.mrb[0].mxu0
  %v297 = vadd.f32 %v64, %v296
  %v298 = vpop.f32.mrb[0].mxu0
  %299 = vmatprep.mubr.f32.mxu0 0.0
  %300 = vmatmul.mubr.f32.gmra.mrb[0].mxu0 %v89
  %v301 = vpop.f32.mrb[0].mxu0
  %v302 = vadd.f32 %v64, %v301
  %v303 = vpop.f32.mrb[0].mxu0
  %304 = vmatprep.mubr.f32.mxu0 0.0
  %305 = vmatmul.mubr.f32.gmra.mrb[0].mxu0 %v92
  %v306 = vpop.f32.mrb[0].mxu0
  %v307 = vadd.f32 %v64, %v306
  %v308 = vpop.f32.mrb[0].mxu0
  %309 = vmatprep.mubr.f32.mxu0 0.0
  %310 = vmatmul.mubr.f32.gmra.mrb[0].mxu0 %v95
  %v311 = vpop.f32.mrb[0].mxu0
  %v312 = vadd.f32 %v64, %v311
  %v313 = vpop.f32.mrb[0].mxu0
  %314 = vmatprep.mubr.f32.mxu0 0.0
  %315 = vmatmul.mubr.f32.gmra.mrb[0].mxu0 %v98
  %v316 = vpop.f32.mrb[0].mxu0
  %v317 = vadd.f32 %v64, %v316
  %v318 = vpop.f32.mrb[0].mxu0
  %319 = vmatprep.mubr.f32.mxu0 0.0
  %320 = vmatmul.mubr.f32.gmra.mrb[0].mxu0 %v101
  %v321 = vpop.f32.mrb[0].mxu0
  %v322 = vadd.f32 %v64, %v321
  %v323 = vpop.f32.mrb[0].mxu0
  %324 = vmatprep.mubr.f32.mxu0 0.0
  %325 = vmatmul.mubr.f32.gmra.mrb[0].mxu0 %v104
  %v326 = vpop.f32.mrb[0].mxu0
  %v327 = vadd.f32 %v64, %v326
  %v328 = vpop.f32.mrb[0].mxu0
  %329 = vmatprep.mubr.f32.mxu0 0.0
  %330 = vmatmul.mubr.f32.gmra.mrb[0].mxu0 %v107
  %v331 = vpop.f32.mrb[0].mxu0
  %v332 = vadd.f32 %v64, %v331
  %v333 = vpop.f32.mrb[0].mxu0
  %334 = vmatprep.mubr.f32.mxu0 0.0
  %335 = vmatmul.mubr.f32.gmra.mrb[0].mxu0 %v110
  %v336 = vpop.f32.mrb[0].mxu0
  %v337 = vadd.f32 %v64, %v336
  %v338 = vpop.f32.mrb[0].mxu0
  %339 = vmatprep.mubr.f32.mxu0 0.0
  %340 = vmatmul.mubr.f32.gmra.mrb[0].mxu0 %v113
  %v341 = vpop.f32.mrb[0].mxu0
  %v342 = vadd.f32 %v64, %v341
  %v343 = vpop.f32.mrb[0].mxu0
  %344 = vmatprep.mubr.f32.mxu0 0.0
  %345 = vmatmul.mubr.f32.gmra.mrb[0].mxu0 %v116
  %v346 = vpop.f32.mrb[0].mxu0
  %v347 = vadd.f32 %v64, %v346
  %v348 = vpop.f32.mrb[0].mxu0
  %349 = vmatprep.mubr.f32.mxu0 0.0
  %350 = vmatmul.mubr.f32.gmra.mrb[0].mxu0 %v119
  %v351 = vpop.f32.mrb[0].mxu0
  %v352 = vadd.f32 %v64, %v351
  %v353 = vpop.f32.mrb[0].mxu0
  %354 = vmatprep.mubr.f32.mxu0 0.0
  %355 = vmatmul.mubr.f32.gmra.mrb[0].mxu0 %v122
  %v356 = vpop.f32.mrb[0].mxu0
  %v357 = vadd.f32 %v64, %v356
  %v358 = vpop.f32.mrb[0].mxu0
  %359 = vmatprep.mubr.f32.mxu0 0.0
  %360 = vmatmul.mubr.f32.gmra.mrb[0].mxu0 %v125
  %v361 = vpop.f32.mrb[0].mxu0
  %v362 = vadd.f32 %v64, %v361
  %v363 = vpop.f32.mrb[0].mxu0
  %364 = vmatprep.mubr.f32.mxu0 0.0
  %365 = vmatmul.mubr.f32.gmra.mrb[0].mxu0 %v128
  %v366 = vpop.f32.mrb[0].mxu0
  %v367 = vadd.f32 %v64, %v366
  %v368 = vpop.f32.mrb[0].mxu0
  %369 = vmatprep.mubr.f32.mxu0 0.0
  %370 = vmatmul.mubr.f32.gmra.mrb[0].mxu0 %v131
  %v371 = vpop.f32.mrb[0].mxu0
  %v372 = vadd.f32 %v64, %v371
  %v373 = vpop.f32.mrb[0].mxu0
  %374 = vmatprep.mubr.f32.mxu0 0.0
  %375 = vmatmul.mubr.f32.gmra.mrb[0].mxu0 %v134
  %v376 = vpop.f32.mrb[0].mxu0
  %v377 = vadd.f32 %v64, %v376
  %v378 = vpop.f32.mrb[0].mxu0
  %379 = vmatprep.mubr.f32.mxu0 0.0
  %380 = vmatmul.mubr.f32.gmra.mrb[0].mxu0 %v137
  %v381 = vpop.f32.mrb[0].mxu0
  %v382 = vadd.f32 %v64, %v381
  %v383 = vpop.f32.mrb[0].mxu0
  %384 = vmatprep.mubr.f32.mxu0 0.0
  %385 = vmatmul.mubr.f32.gmra.mrb[0].mxu0 %v140
  %v386 = vpop.f32.mrb[0].mxu0
  %v387 = vadd.f32 %v64, %v386
  %v388 = vpop.f32.mrb[0].mxu0
  %389 = vmatprep.mubr.f32.mxu0 0.0
  %390 = vmatmul.mubr.f32.gmra.mrb[0].mxu0 %v143
  %v391 = vpop.f32.mrb[0].mxu0
  %v392 = vadd.f32 %v64, %v391
  %v393 = vpop.f32.mrb[0].mxu0
  %394 = vmatprep.mubr.f32.mxu0 0.0
  %395 = vmatmul.mubr.f32.gmra.mrb[0].mxu0 %v146
  %v396 = vpop.f32.mrb[0].mxu0
  %v397 = vadd.f32 %v64, %v396
  %v398 = vpop.f32.mrb[0].mxu0
  %399 = vmatprep.mubr.f32.mxu0 0.0
  %400 = vmatmul.mubr.f32.gmra.mrb[0].mxu0 %v149
  %v401 = vpop.f32.mrb[0].mxu0
  %v402 = vadd.f32 %v64, %v401
  %v403 = vpop.f32.mrb[0].mxu0
  %404 = vmatprep.mubr.f32.mxu0 0.0
  %405 = vmatmul.mubr.f32.gmra.mrb[0].mxu0 %v152
  %v406 = vpop.f32.mrb[0].mxu0
  %v407 = vadd.f32 %v64, %v406
  %v408 = vpop.f32.mrb[0].mxu0
  %409 = vmatprep.mubr.f32.mxu0 0.0
  %410 = vmatmul.mubr.f32.gmra.mrb[0].mxu0 %v155
  %v411 = vpop.f32.mrb[0].mxu0
  %v412 = vadd.f32 %v64, %v411
  %v413 = vpop.f32.mrb[0].mxu0
  %414 = vmatprep.mubr.f32.mxu0 0.0
  %415 = vmatmul.mubr.f32.gmra.mrb[0].mxu0 %v158
  %v416 = vpop.f32.mrb[0].mxu0
  %v417 = vadd.f32 %v64, %v416
  %v418 = vpop.f32.mrb[0].mxu0
  %419 = vmatprep.mubr.f32.mxu0 0.0
  %420 = vmatmul.mubr.f32.gmra.mrb[0].mxu0 %v161
  %v421 = vpop.f32.mrb[0].mxu0
  %v422 = vadd.f32 %v64, %v421
  %v423 = vpop.f32.mrb[0].mxu0
  %424 = vmatprep.mubr.f32.mxu0 0.0
  %425 = vmatmul.mubr.f32.gmra.mrb[0].mxu0 %v164
  %v426 = vpop.f32.mrb[0].mxu0
  %v427 = vadd.f32 %v64, %v426
  %v428 = vpop.f32.mrb[0].mxu0
  %429 = vmatprep.mubr.f32.mxu0 0.0
  %430 = vmatmul.mubr.f32.gmra.mrb[0].mxu0 %v167
  %v431 = vpop.f32.mrb[0].mxu0
  %v432 = vadd.f32 %v64, %v431
  %v433 = vpop.f32.mrb[0].mxu0
  %434 = vmatprep.mubr.f32.mxu0 0.0
  %435 = vmatmul.mubr.f32.gmra.mrb[0].mxu0 %v170
  %v436 = vpop.f32.mrb[0].mxu0
  %v437 = vadd.f32 %v64, %v436
  %v438 = vpop.f32.mrb[0].mxu0
  %439 = vmatprep.mubr.f32.mxu0 0.0
  %440 = vmatmul.mubr.f32.gmra.mrb[0].mxu0 %v173
  %v441 = vpop.f32.mrb[0].mxu0
  %v442 = vadd.f32 %v64, %v441
  %v443 = vpop.f32.mrb[0].mxu0
  %444 = vmatprep.mubr.f32.mxu0 0.0
  %445 = vmatmul.mubr.f32.gmra.mrb[0].mxu0 %v176
  %v446 = vpop.f32.mrb[0].mxu0
  %v447 = vadd.f32 %v64, %v446
  %v448 = vpop.f32.mrb[0].mxu0
  %449 = vmatprep.mubr.f32.mxu0 0.0
  %450 = vmatmul.mubr.f32.gmra.mrb[0].mxu0 %v179
  %v451 = vpop.f32.mrb[0].mxu0
  %v452 = vadd.f32 %v64, %v451
  %v453 = vpop.f32.mrb[0].mxu0
  %454 = vmatprep.mubr.f32.mxu0 0.0
  %455 = vmatmul.mubr.f32.gmra.mrb[0].mxu0 %v182
  %v456 = vpop.f32.mrb[0].mxu0
  %v457 = vadd.f32 %v64, %v456
  %v458 = vpop.f32.mrb[0].mxu0
  %459 = vmatprep.mubr.f32.mxu0 0.0
  %460 = vmatmul.mubr.f32.gmra.mrb[0].mxu0 %v185
  %v461 = vpop.f32.mrb[0].mxu0
  %v462 = vadd.f32 %v64, %v461
  %v463 = vpop.f32.mrb[0].mxu0
  %464 = vmatprep.mubr.f32.mxu0 0.0
  %465 = vmatmul.mubr.f32.gmra.mrb[0].mxu0 %v188
  %v466 = vpop.f32.mrb[0].mxu0
  %v467 = vadd.f32 %v64, %v466
  %v468 = vpop.f32.mrb[0].mxu0
  %469 = vmatprep.mubr.f32.mxu0 0.0
  %470 = vmatmul.mubr.f32.gmra.mrb[0].mxu0 %v191
  %v471 = vpop.f32.mrb[0].mxu0
  %v472 = vadd.f32 %v64, %v471
  %v473 = vpop.f32.mrb[0].mxu0
  %474 = vmatprep.mubr.f32.mxu0 0.0
  %475 = vmatmul.mubr.f32.gmra.mrb[0].mxu0 %v194
  %v476 = vpop.f32.mrb[0].mxu0
  %v477 = vadd.f32 %v64, %v476
  %v478 = vpop.f32.mrb[0].mxu0
  %479 = vdwg.mxu0
  %v480 = vmul.f32 %v267, %v267
  %v481 = vmul.f32 %v272, %v272
  %v482 = vmul.f32 %v277, %v277
  %v483 = vmul.f32 %v282, %v282
  %v484 = vmul.f32 %v287, %v287
  %v485 = vmul.f32 %v292, %v292
  %v486 = vmul.f32 %v297, %v297
  %v487 = vmul.f32 %v302, %v302
  %v488 = vmul.f32 %v307, %v307
  %v489 = vmul.f32 %v312, %v312
  %v490 = vmul.f32 %v317, %v317
  %v491 = vmul.f32 %v322, %v322
  %v492 = vmul.f32 %v327, %v327
  %v493 = vmul.f32 %v332, %v332
  %v494 = vmul.f32 %v337, %v337
  %v495 = vmul.f32 %v342, %v342
  %v496 = vmul.f32 %v347, %v347
  %v497 = vmul.f32 %v352, %v352
  %v498 = vmul.f32 %v357, %v357
  %v499 = vmul.f32 %v362, %v362
  %v500 = vmul.f32 %v367, %v367
  %v501 = vmul.f32 %v372, %v372
  %v502 = vmul.f32 %v377, %v377
  %v503 = vmul.f32 %v382, %v382
  %v504 = vmul.f32 %v387, %v387
  %v505 = vmul.f32 %v392, %v392
  %v506 = vmul.f32 %v397, %v397
  %v507 = vmul.f32 %v402, %v402
  %v508 = vmul.f32 %v407, %v407
  %v509 = vmul.f32 %v412, %v412
  %v510 = vmul.f32 %v417, %v417
  %v511 = vmul.f32 %v422, %v422
  %v512 = vmul.f32 %v427, %v427
  %v513 = vmul.f32 %v432, %v432
  %v514 = vmul.f32 %v437, %v437
  %v515 = vmul.f32 %v442, %v442
  %v516 = vmul.f32 %v447, %v447
  %v517 = vmul.f32 %v452, %v452
  %v518 = vmul.f32 %v457, %v457
  %v519 = vmul.f32 %v462, %v462
  %v520 = vmul.f32 %v467, %v467
  %v521 = vmul.f32 %v472, %v472
  %v522 = vmul.f32 %v477, %v477
  %v523 = vmul.f32 %v480, 0.11111111
  %v524 = vmul.f32 %v481, 0.11111111
  %v525 = vmul.f32 %v482, 0.11111111
  %v526 = vmul.f32 %v483, 0.11111111
  %v527 = vmul.f32 %v484, 0.11111111
  %v528 = vmul.f32 %v485, 0.11111111
  %v529 = vmul.f32 %v486, 0.11111111
  %v530 = vmul.f32 %v487, 0.11111111
  %v531 = vmul.f32 %v488, 0.11111111
  %v532 = vmul.f32 %v489, 0.11111111
  %v533 = vmul.f32 %v490, 0.11111111
  %v534 = vmul.f32 %v491, 0.11111111
  %v535 = vmul.f32 %v492, 0.11111111
  %v536 = vmul.f32 %v493, 0.11111111
  %v537 = vmul.f32 %v494, 0.11111111
  %v538 = vmul.f32 %v495, 0.11111111
  %v539 = vmul.f32 %v496, 0.11111111
  %v540 = vmul.f32 %v497, 0.11111111
  %v541 = vmul.f32 %v498, 0.11111111
  %v542 = vmul.f32 %v499, 0.11111111
  %v543 = vmul.f32 %v500, 0.11111111
  %v544 = vmul.f32 %v501, 0.11111111
  %v545 = vmul.f32 %v502, 0.11111111
  %v546 = vmul.f32 %v503, 0.11111111
  %v547 = vmul.f32 %v504, 0.11111111
  %v548 = vmul.f32 %v505, 0.11111111
  %v549 = vmul.f32 %v506, 0.11111111
  %v550 = vmul.f32 %v507, 0.11111111
  %v551 = vmul.f32 %v508, 0.11111111
  %v552 = vmul.f32 %v509, 0.11111111
  %v553 = vmul.f32 %v510, 0.11111111
  %v554 = vmul.f32 %v511, 0.11111111
  %v555 = vmul.f32 %v512, 0.11111111
  %v556 = vmul.f32 %v513, 0.11111111
  %v557 = vmul.f32 %v514, 0.11111111
  %v558 = vmul.f32 %v515, 0.11111111
  %v559 = vmul.f32 %v516, 0.11111111
  %v560 = vmul.f32 %v517, 0.11111111
  %v561 = vmul.f32 %v518, 0.11111111
  %v562 = vmul.f32 %v519, 0.11111111
  %v563 = vmul.f32 %v520, 0.11111111
  %v564 = vmul.f32 %v521, 0.11111111
  %v565 = vmul.f32 %v522, 0.11111111
  %v566 = vsub.f32 %v267, %v523
  %v567 = vsub.f32 %v272, %v524
  %v568 = vsub.f32 %v277, %v525
  %v569 = vsub.f32 %v282, %v526
  %v570 = vsub.f32 %v287, %v527
  %v571 = vsub.f32 %v292, %v528
  %v572 = vsub.f32 %v297, %v529
  %v573 = vsub.f32 %v302, %v530
  %v574 = vsub.f32 %v307, %v531
  %v575 = vsub.f32 %v312, %v532
  %v576 = vsub.f32 %v317, %v533
  %v577 = vsub.f32 %v322, %v534
  %v578 = vsub.f32 %v327, %v535
  %v579 = vsub.f32 %v332, %v536
  %v580 = vsub.f32 %v337, %v537
  %v581 = vsub.f32 %v342, %v538
  %v582 = vsub.f32 %v347, %v539
  %v583 = vsub.f32 %v352, %v540
  %v584 = vsub.f32 %v357, %v541
  %v585 = vsub.f32 %v362, %v542
  %v586 = vsub.f32 %v367, %v543
  %v587 = vsub.f32 %v372, %v544
  %v588 = vsub.f32 %v377, %v545
  %v589 = vsub.f32 %v382, %v546
  %v590 = vsub.f32 %v387, %v547
  %v591 = vsub.f32 %v392, %v548
  %v592 = vsub.f32 %v397, %v549
  %v593 = vsub.f32 %v402, %v550
  %v594 = vsub.f32 %v407, %v551
  %v595 = vsub.f32 %v412, %v552
  %v596 = vsub.f32 %v417, %v553
  %v597 = vsub.f32 %v422, %v554
  %v598 = vsub.f32 %v427, %v555
  %v599 = vsub.f32 %v432, %v556
  %v600 = vsub.f32 %v437, %v557
  %v601 = vsub.f32 %v442, %v558
  %v602 = vsub.f32 %v447, %v559
  %v603 = vsub.f32 %v452, %v560
  %v604 = vsub.f32 %v457, %v561
  %v605 = vsub.f32 %v462, %v562
  %v606 = vsub.f32 %v467, %v563
  %v607 = vsub.f32 %v472, %v564
  %v608 = vsub.f32 %v477, %v565
  %v609 = vadd.f32 %v566, 1e-06
  %v610 = vadd.f32 %v567, 1e-06
  %v611 = vadd.f32 %v568, 1e-06
  %v612 = vadd.f32 %v569, 1e-06
  %v613 = vadd.f32 %v570, 1e-06
  %v614 = vadd.f32 %v571, 1e-06
  %v615 = vadd.f32 %v572, 1e-06
  %v616 = vadd.f32 %v573, 1e-06
  %v617 = vadd.f32 %v574, 1e-06
  %v618 = vadd.f32 %v575, 1e-06
  %v619 = vadd.f32 %v576, 1e-06
  %v620 = vadd.f32 %v577, 1e-06
  %v621 = vadd.f32 %v578, 1e-06
  %v622 = vadd.f32 %v579, 1e-06
  %v623 = vadd.f32 %v580, 1e-06
  %v624 = vadd.f32 %v581, 1e-06
  %v625 = vadd.f32 %v582, 1e-06
  %v626 = vadd.f32 %v583, 1e-06
  %v627 = vadd.f32 %v584, 1e-06
  %v628 = vadd.f32 %v585, 1e-06
  %v629 = vadd.f32 %v586, 1e-06
  %v630 = vadd.f32 %v587, 1e-06
  %v631 = vadd.f32 %v588, 1e-06
  %v632 = vadd.f32 %v589, 1e-06
  %v633 = vadd.f32 %v590, 1e-06
  %v634 = vadd.f32 %v591, 1e-06
  %v635 = vadd.f32 %v592, 1e-06
  %v636 = vadd.f32 %v593, 1e-06
  %v637 = vadd.f32 %v594, 1e-06
  %v638 = vadd.f32 %v595, 1e-06
  %v639 = vadd.f32 %v596, 1e-06
  %v640 = vadd.f32 %v597, 1e-06
  %v641 = vadd.f32 %v598, 1e-06
  %v642 = vadd.f32 %v599, 1e-06
  %v643 = vadd.f32 %v600, 1e-06
  %v644 = vadd.f32 %v601, 1e-06
  %v645 = vadd.f32 %v602, 1e-06
  %v646 = vadd.f32 %v603, 1e-06
  %v647 = vadd.f32 %v604, 1e-06
  %v648 = vadd.f32 %v605, 1e-06
  %v649 = vadd.f32 %v606, 1e-06
  %v650 = vadd.f32 %v607, 1e-06
  %v651 = vadd.f32 %v608, 1e-06
  %v652 = vmax.f32 %v609, 1e-06
  %v653 = vmax.f32 %v610, 1e-06
  %v654 = vmax.f32 %v611, 1e-06
  %v655 = vmax.f32 %v612, 1e-06
  %v656 = vmax.f32 %v613, 1e-06
  %v657 = vmax.f32 %v614, 1e-06
  %v658 = vmax.f32 %v615, 1e-06
  %v659 = vmax.f32 %v616, 1e-06
  %v660 = vmax.f32 %v617, 1e-06
  %v661 = vmax.f32 %v618, 1e-06
  %v662 = vmax.f32 %v619, 1e-06
  %v663 = vmax.f32 %v620, 1e-06
  %v664 = vmax.f32 %v621, 1e-06
  %v665 = vmax.f32 %v622, 1e-06
  %v666 = vmax.f32 %v623, 1e-06
  %v667 = vmax.f32 %v624, 1e-06
  %v668 = vmax.f32 %v625, 1e-06
  %v669 = vmax.f32 %v626, 1e-06
  %v670 = vmax.f32 %v627, 1e-06
  %v671 = vmax.f32 %v628, 1e-06
  %v672 = vmax.f32 %v629, 1e-06
  %v673 = vmax.f32 %v630, 1e-06
  %v674 = vmax.f32 %v631, 1e-06
  %v675 = vmax.f32 %v632, 1e-06
  %v676 = vmax.f32 %v633, 1e-06
  %v677 = vmax.f32 %v634, 1e-06
  %v678 = vmax.f32 %v635, 1e-06
  %v679 = vmax.f32 %v636, 1e-06
  %v680 = vmax.f32 %v637, 1e-06
  %v681 = vmax.f32 %v638, 1e-06
  %v682 = vmax.f32 %v639, 1e-06
  %v683 = vmax.f32 %v640, 1e-06
  %v684 = vmax.f32 %v641, 1e-06
  %v685 = vmax.f32 %v642, 1e-06
  %v686 = vmax.f32 %v643, 1e-06
  %v687 = vmax.f32 %v644, 1e-06
  %v688 = vmax.f32 %v645, 1e-06
  %v689 = vmax.f32 %v646, 1e-06
  %v690 = vmax.f32 %v647, 1e-06
  %v691 = vmax.f32 %v648, 1e-06
  %v692 = vmax.f32 %v649, 1e-06
  %v693 = vmax.f32 %v650, 1e-06
  %v694 = vmax.f32 %v651, 1e-06
  %v695 = vsub.f32 4.5, %v267
  %v696 = vsub.f32 4.5, %v272
  %v697 = vsub.f32 4.5, %v277
  %v698 = vsub.f32 4.5, %v282
  %v699 = vsub.f32 4.5, %v287
  %v700 = vsub.f32 4.5, %v292
  %v701 = vsub.f32 4.5, %v297
  %v702 = vsub.f32 4.5, %v302
  %v703 = vsub.f32 4.5, %v307
  %v704 = vsub.f32 4.5, %v312
  %v705 = vsub.f32 4.5, %v317
  %v706 = vsub.f32 4.5, %v322
  %v707 = vsub.f32 4.5, %v327
  %v708 = vsub.f32 4.5, %v332
  %v709 = vsub.f32 4.5, %v337
  %v710 = vsub.f32 4.5, %v342
  %v711 = vsub.f32 4.5, %v347
  %v712 = vsub.f32 4.5, %v352
  %v713 = vsub.f32 4.5, %v357
  %v714 = vsub.f32 4.5, %v362
  %v715 = vsub.f32 4.5, %v367
  %v716 = vsub.f32 4.5, %v372
  %v717 = vsub.f32 4.5, %v377
  %v718 = vsub.f32 4.5, %v382
  %v719 = vsub.f32 4.5, %v387
  %v720 = vsub.f32 4.5, %v392
  %v721 = vsub.f32 4.5, %v397
  %v722 = vsub.f32 4.5, %v402
  %v723 = vsub.f32 4.5, %v407
  %v724 = vsub.f32 4.5, %v412
  %v725 = vsub.f32 4.5, %v417
  %v726 = vsub.f32 4.5, %v422
  %v727 = vsub.f32 4.5, %v427
  %v728 = vsub.f32 4.5, %v432
  %v729 = vsub.f32 4.5, %v437
  %v730 = vsub.f32 4.5, %v442
  %v731 = vsub.f32 4.5, %v447
  %v732 = vsub.f32 4.5, %v452
  %v733 = vsub.f32 4.5, %v457
  %v734 = vsub.f32 4.5, %v462
  %v735 = vsub.f32 4.5, %v467
  %v736 = vsub.f32 4.5, %v472
  %v737 = vsub.f32 4.5, %v477
  %v738 = vmul.f32 %v652, 2.0
  %v739 = vmul.f32 %v653, 2.0
  %v740 = vmul.f32 %v654, 2.0
  %v741 = vmul.f32 %v655, 2.0
  %v742 = vmul.f32 %v656, 2.0
  %v743 = vmul.f32 %v657, 2.0
  %v744 = vmul.f32 %v658, 2.0
  %v745 = vmul.f32 %v659, 2.0
  %v746 = vmul.f32 %v660, 2.0
  %v747 = vmul.f32 %v661, 2.0
  %v748 = vmul.f32 %v662, 2.0
  %v749 = vmul.f32 %v663, 2.0
  %v750 = vmul.f32 %v664, 2.0
  %v751 = vmul.f32 %v665, 2.0
  %v752 = vmul.f32 %v666, 2.0
  %v753 = vmul.f32 %v667, 2.0
  %v754 = vmul.f32 %v668, 2.0
  %v755 = vmul.f32 %v669, 2.0
  %v756 = vmul.f32 %v670, 2.0
  %v757 = vmul.f32 %v671, 2.0
  %v758 = vmul.f32 %v672, 2.0
  %v759 = vmul.f32 %v673, 2.0
  %v760 = vmul.f32 %v674, 2.0
  %v761 = vmul.f32 %v675, 2.0
  %v762 = vmul.f32 %v676, 2.0
  %v763 = vmul.f32 %v677, 2.0
  %v764 = vmul.f32 %v678, 2.0
  %v765 = vmul.f32 %v679, 2.0
  %v766 = vmul.f32 %v680, 2.0
  %v767 = vmul.f32 %v681, 2.0
  %v768 = vmul.f32 %v682, 2.0
  %v769 = vmul.f32 %v683, 2.0
  %v770 = vmul.f32 %v684, 2.0
  %v771 = vmul.f32 %v685, 2.0
  %v772 = vmul.f32 %v686, 2.0
  %v773 = vmul.f32 %v687, 2.0
  %v774 = vmul.f32 %v688, 2.0
  %v775 = vmul.f32 %v689, 2.0
  %v776 = vmul.f32 %v690, 2.0
  %v777 = vmul.f32 %v691, 2.0
  %v778 = vmul.f32 %v692, 2.0
  %v779 = vmul.f32 %v693, 2.0
  %v780 = vmul.f32 %v694, 2.0
  %v781 = vrsqrt.pop %v738
  %v782 = vrsqrt.pop %v739
  %v783 = vrsqrt.pop %v740
  %v784 = vrsqrt.pop %v741
  %v785 = vrsqrt.pop %v742
  %v786 = vrsqrt.pop %v743
  %v787 = vrsqrt.pop %v744
  %v788 = vrsqrt.pop %v745
  %v789 = vrsqrt.pop %v746
  %v790 = vrsqrt.pop %v747
  %v791 = vrsqrt.pop %v748
  %v792 = vrsqrt.pop %v749
  %v793 = vrsqrt.pop %v750
  %v794 = vrsqrt.pop %v751
  %v795 = vrsqrt.pop %v752
  %v796 = vrsqrt.pop %v753
  %v797 = vrsqrt.pop %v754
  %v798 = vrsqrt.pop %v755
  %v799 = vrsqrt.pop %v756
  %v800 = vrsqrt.pop %v757
  %v801 = vrsqrt.pop %v758
  %v802 = vrsqrt.pop %v759
  %v803 = vrsqrt.pop %v760
  %v804 = vrsqrt.pop %v761
  %v805 = vrsqrt.pop %v762
  %v806 = vrsqrt.pop %v763
  %v807 = vrsqrt.pop %v764
  %v808 = vrsqrt.pop %v765
  %v809 = vrsqrt.pop %v766
  %v810 = vrsqrt.pop %v767
  %v811 = vrsqrt.pop %v768
  %v812 = vrsqrt.pop %v769
  %v813 = vrsqrt.pop %v770
  %v814 = vrsqrt.pop %v771
  %v815 = vrsqrt.pop %v772
  %v816 = vrsqrt.pop %v773
  %v817 = vrsqrt.pop %v774
  %v818 = vrsqrt.pop %v775
  %v819 = vrsqrt.pop %v776
  %v820 = vrsqrt.pop %v777
  %v821 = vrsqrt.pop %v778
  %v822 = vrsqrt.pop %v779
  %v823 = vrsqrt.pop %v780
  %v824 = vmul.f32 %v695, %v781
  %v825 = vmul.f32 %v696, %v782
  %v826 = vmul.f32 %v697, %v783
  %v827 = vmul.f32 %v698, %v784
  %v828 = vmul.f32 %v699, %v785
  %v829 = vmul.f32 %v700, %v786
  %v830 = vmul.f32 %v701, %v787
  %v831 = vmul.f32 %v702, %v788
  %v832 = vmul.f32 %v703, %v789
  %v833 = vmul.f32 %v704, %v790
  %v834 = vmul.f32 %v705, %v791
  %v835 = vmul.f32 %v706, %v792
  %v836 = vmul.f32 %v707, %v793
  %v837 = vmul.f32 %v708, %v794
  %v838 = vmul.f32 %v709, %v795
  %v839 = vmul.f32 %v710, %v796
  %v840 = vmul.f32 %v711, %v797
  %v841 = vmul.f32 %v712, %v798
  %v842 = vmul.f32 %v713, %v799
  %v843 = vmul.f32 %v714, %v800
  %v844 = vmul.f32 %v715, %v801
  %v845 = vmul.f32 %v716, %v802
  %v846 = vmul.f32 %v717, %v803
  %v847 = vmul.f32 %v718, %v804
  %v848 = vmul.f32 %v719, %v805
  %v849 = vmul.f32 %v720, %v806
  %v850 = vmul.f32 %v721, %v807
  %v851 = vmul.f32 %v722, %v808
  %v852 = vmul.f32 %v723, %v809
  %v853 = vmul.f32 %v724, %v810
  %v854 = vmul.f32 %v725, %v811
  %v855 = vmul.f32 %v726, %v812
  %v856 = vmul.f32 %v727, %v813
  %v857 = vmul.f32 %v728, %v814
  %v858 = vmul.f32 %v729, %v815
  %v859 = vmul.f32 %v730, %v816
  %v860 = vmul.f32 %v731, %v817
  %v861 = vmul.f32 %v732, %v818
  %v862 = vmul.f32 %v733, %v819
  %v863 = vmul.f32 %v734, %v820
  %v864 = vmul.f32 %v735, %v821
  %v865 = vmul.f32 %v736, %v822
  %v866 = vmul.f32 %v737, %v823
  %v867 = vmax.f32 %v824, -4.0
  %v868 = vmax.f32 %v825, -4.0
  %v869 = vmax.f32 %v826, -4.0
  %v870 = vmax.f32 %v827, -4.0
  %v871 = vmax.f32 %v828, -4.0
  %v872 = vmax.f32 %v829, -4.0
  %v873 = vmax.f32 %v830, -4.0
  %v874 = vmax.f32 %v831, -4.0
  %v875 = vmax.f32 %v832, -4.0
  %v876 = vmax.f32 %v833, -4.0
  %v877 = vmax.f32 %v834, -4.0
  %v878 = vmax.f32 %v835, -4.0
  %v879 = vmax.f32 %v836, -4.0
  %v880 = vmax.f32 %v837, -4.0
  %v881 = vmax.f32 %v838, -4.0
  %v882 = vmax.f32 %v839, -4.0
  %v883 = vmax.f32 %v840, -4.0
  %v884 = vmax.f32 %v841, -4.0
  %v885 = vmax.f32 %v842, -4.0
  %v886 = vmax.f32 %v843, -4.0
  %v887 = vmax.f32 %v844, -4.0
  %v888 = vmax.f32 %v845, -4.0
  %v889 = vmax.f32 %v846, -4.0
  %v890 = vmax.f32 %v847, -4.0
  %v891 = vmax.f32 %v848, -4.0
  %v892 = vmax.f32 %v849, -4.0
  %v893 = vmax.f32 %v850, -4.0
  %v894 = vmax.f32 %v851, -4.0
  %v895 = vmax.f32 %v852, -4.0
  %v896 = vmax.f32 %v853, -4.0
  %v897 = vmax.f32 %v854, -4.0
  %v898 = vmax.f32 %v855, -4.0
  %v899 = vmax.f32 %v856, -4.0
  %v900 = vmax.f32 %v857, -4.0
  %v901 = vmax.f32 %v858, -4.0
  %v902 = vmax.f32 %v859, -4.0
  %v903 = vmax.f32 %v860, -4.0
  %v904 = vmax.f32 %v861, -4.0
  %v905 = vmax.f32 %v862, -4.0
  %v906 = vmax.f32 %v863, -4.0
  %v907 = vmax.f32 %v864, -4.0
  %v908 = vmax.f32 %v865, -4.0
  %v909 = vmax.f32 %v866, -4.0
  %v910 = vmin.f32 %v867, 4.0
  %v911 = vmin.f32 %v868, 4.0
  %v912 = vmin.f32 %v869, 4.0
  %v913 = vmin.f32 %v870, 4.0
  %v914 = vmin.f32 %v871, 4.0
  %v915 = vmin.f32 %v872, 4.0
  %v916 = vmin.f32 %v873, 4.0
  %v917 = vmin.f32 %v874, 4.0
  %v918 = vmin.f32 %v875, 4.0
  %v919 = vmin.f32 %v876, 4.0
  %v920 = vmin.f32 %v877, 4.0
  %v921 = vmin.f32 %v878, 4.0
  %v922 = vmin.f32 %v879, 4.0
  %v923 = vmin.f32 %v880, 4.0
  %v924 = vmin.f32 %v881, 4.0
  %v925 = vmin.f32 %v882, 4.0
  %v926 = vmin.f32 %v883, 4.0
  %v927 = vmin.f32 %v884, 4.0
  %v928 = vmin.f32 %v885, 4.0
  %v929 = vmin.f32 %v886, 4.0
  %v930 = vmin.f32 %v887, 4.0
  %v931 = vmin.f32 %v888, 4.0
  %v932 = vmin.f32 %v889, 4.0
  %v933 = vmin.f32 %v890, 4.0
  %v934 = vmin.f32 %v891, 4.0
  %v935 = vmin.f32 %v892, 4.0
  %v936 = vmin.f32 %v893, 4.0
  %v937 = vmin.f32 %v894, 4.0
  %v938 = vmin.f32 %v895, 4.0
  %v939 = vmin.f32 %v896, 4.0
  %v940 = vmin.f32 %v897, 4.0
  %v941 = vmin.f32 %v898, 4.0
  %v942 = vmin.f32 %v899, 4.0
  %v943 = vmin.f32 %v900, 4.0
  %v944 = vmin.f32 %v901, 4.0
  %v945 = vmin.f32 %v902, 4.0
  %v946 = vmin.f32 %v903, 4.0
  %v947 = vmin.f32 %v904, 4.0
  %v948 = vmin.f32 %v905, 4.0
  %v949 = vmin.f32 %v906, 4.0
  %v950 = vmin.f32 %v907, 4.0
  %v951 = vmin.f32 %v908, 4.0
  %v952 = vmin.f32 %v909, 4.0
  %v953 = vmul.f32 %v910, %v910
  %v954 = vmul.f32 %v911, %v911
  %v955 = vmul.f32 %v912, %v912
  %v956 = vmul.f32 %v913, %v913
  %v957 = vmul.f32 %v914, %v914
  %v958 = vmul.f32 %v915, %v915
  %v959 = vmul.f32 %v916, %v916
  %v960 = vmul.f32 %v917, %v917
  %v961 = vmul.f32 %v918, %v918
  %v962 = vmul.f32 %v919, %v919
  %v963 = vmul.f32 %v920, %v920
  %v964 = vmul.f32 %v921, %v921
  %v965 = vmul.f32 %v922, %v922
  %v966 = vmul.f32 %v923, %v923
  %v967 = vmul.f32 %v924, %v924
  %v968 = vmul.f32 %v925, %v925
  %v969 = vmul.f32 %v926, %v926
  %v970 = vmul.f32 %v927, %v927
  %v971 = vmul.f32 %v928, %v928
  %v972 = vmul.f32 %v929, %v929
  %v973 = vmul.f32 %v930, %v930
  %v974 = vmul.f32 %v931, %v931
  %v975 = vmul.f32 %v932, %v932
  %v976 = vmul.f32 %v933, %v933
  %v977 = vmul.f32 %v934, %v934
  %v978 = vmul.f32 %v935, %v935
  %v979 = vmul.f32 %v936, %v936
  %v980 = vmul.f32 %v937, %v937
  %v981 = vmul.f32 %v938, %v938
  %v982 = vmul.f32 %v939, %v939
  %v983 = vmul.f32 %v940, %v940
  %v984 = vmul.f32 %v941, %v941
  %v985 = vmul.f32 %v942, %v942
  %v986 = vmul.f32 %v943, %v943
  %v987 = vmul.f32 %v944, %v944
  %v988 = vmul.f32 %v945, %v945
  %v989 = vmul.f32 %v946, %v946
  %v990 = vmul.f32 %v947, %v947
  %v991 = vmul.f32 %v948, %v948
  %v992 = vmul.f32 %v949, %v949
  %v993 = vmul.f32 %v950, %v950
  %v994 = vmul.f32 %v951, %v951
  %v995 = vmul.f32 %v952, %v952
  %v996 = vmul.f32 %v953, 0.00022905065
  %v997 = vmul.f32 %v954, 0.00022905065
  %v998 = vmul.f32 %v955, 0.00022905065
  %v999 = vmul.f32 %v956, 0.00022905065
  %v1000 = vmul.f32 %v957, 0.00022905065
  %v1001 = vmul.f32 %v958, 0.00022905065
  %v1002 = vmul.f32 %v959, 0.00022905065
  %v1003 = vmul.f32 %v960, 0.00022905065
  %v1004 = vmul.f32 %v961, 0.00022905065
  %v1005 = vmul.f32 %v962, 0.00022905065
  %v1006 = vmul.f32 %v963, 0.00022905065
  %v1007 = vmul.f32 %v964, 0.00022905065
  %v1008 = vmul.f32 %v965, 0.00022905065
  %v1009 = vmul.f32 %v966, 0.00022905065
  %v1010 = vmul.f32 %v967, 0.00022905065
  %v1011 = vmul.f32 %v968, 0.00022905065
  %v1012 = vmul.f32 %v969, 0.00022905065
  %v1013 = vmul.f32 %v970, 0.00022905065
  %v1014 = vmul.f32 %v971, 0.00022905065
  %v1015 = vmul.f32 %v972, 0.00022905065
  %v1016 = vmul.f32 %v973, 0.00022905065
  %v1017 = vmul.f32 %v974, 0.00022905065
  %v1018 = vmul.f32 %v975, 0.00022905065
  %v1019 = vmul.f32 %v976, 0.00022905065
  %v1020 = vmul.f32 %v977, 0.00022905065
  %v1021 = vmul.f32 %v978, 0.00022905065
  %v1022 = vmul.f32 %v979, 0.00022905065
  %v1023 = vmul.f32 %v980, 0.00022905065
  %v1024 = vmul.f32 %v981, 0.00022905065
  %v1025 = vmul.f32 %v982, 0.00022905065
  %v1026 = vmul.f32 %v983, 0.00022905065
  %v1027 = vmul.f32 %v984, 0.00022905065
  %v1028 = vmul.f32 %v985, 0.00022905065
  %v1029 = vmul.f32 %v986, 0.00022905065
  %v1030 = vmul.f32 %v987, 0.00022905065
  %v1031 = vmul.f32 %v988, 0.00022905065
  %v1032 = vmul.f32 %v989, 0.00022905065
  %v1033 = vmul.f32 %v990, 0.00022905065
  %v1034 = vmul.f32 %v991, 0.00022905065
  %v1035 = vmul.f32 %v992, 0.00022905065
  %v1036 = vmul.f32 %v993, 0.00022905065
  %v1037 = vmul.f32 %v994, 0.00022905065
  %v1038 = vmul.f32 %v995, 0.00022905065
  %v1039 = vadd.f32 %v996, 0.003408291
  %v1040 = vadd.f32 %v997, 0.003408291
  %v1041 = vadd.f32 %v998, 0.003408291
  %v1042 = vadd.f32 %v999, 0.003408291
  %v1043 = vadd.f32 %v1000, 0.003408291
  %v1044 = vadd.f32 %v1001, 0.003408291
  %v1045 = vadd.f32 %v1002, 0.003408291
  %v1046 = vadd.f32 %v1003, 0.003408291
  %v1047 = vadd.f32 %v1004, 0.003408291
  %v1048 = vadd.f32 %v1005, 0.003408291
  %v1049 = vadd.f32 %v1006, 0.003408291
  %v1050 = vadd.f32 %v1007, 0.003408291
  %v1051 = vadd.f32 %v1008, 0.003408291
  %v1052 = vadd.f32 %v1009, 0.003408291
  %v1053 = vadd.f32 %v1010, 0.003408291
  %v1054 = vadd.f32 %v1011, 0.003408291
  %v1055 = vadd.f32 %v1012, 0.003408291
  %v1056 = vadd.f32 %v1013, 0.003408291
  %v1057 = vadd.f32 %v1014, 0.003408291
  %v1058 = vadd.f32 %v1015, 0.003408291
  %v1059 = vadd.f32 %v1016, 0.003408291
  %v1060 = vadd.f32 %v1017, 0.003408291
  %v1061 = vadd.f32 %v1018, 0.003408291
  %v1062 = vadd.f32 %v1019, 0.003408291
  %v1063 = vadd.f32 %v1020, 0.003408291
  %v1064 = vadd.f32 %v1021, 0.003408291
  %v1065 = vadd.f32 %v1022, 0.003408291
  %v1066 = vadd.f32 %v1023, 0.003408291
  %v1067 = vadd.f32 %v1024, 0.003408291
  %v1068 = vadd.f32 %v1025, 0.003408291
  %v1069 = vadd.f32 %v1026, 0.003408291
  %v1070 = vadd.f32 %v1027, 0.003408291
  %v1071 = vadd.f32 %v1028, 0.003408291
  %v1072 = vadd.f32 %v1029, 0.003408291
  %v1073 = vadd.f32 %v1030, 0.003408291
  %v1074 = vadd.f32 %v1031, 0.003408291
  %v1075 = vadd.f32 %v1032, 0.003408291
  %v1076 = vadd.f32 %v1033, 0.003408291
  %v1077 = vadd.f32 %v1034, 0.003408291
  %v1078 = vadd.f32 %v1035, 0.003408291
  %v1079 = vadd.f32 %v1036, 0.003408291
  %v1080 = vadd.f32 %v1037, 0.003408291
  %v1081 = vadd.f32 %v1038, 0.003408291
  %v1082 = vmul.f32 %v1039, %v953
  %v1083 = vmul.f32 %v1040, %v954
  %v1084 = vmul.f32 %v1041, %v955
  %v1085 = vmul.f32 %v1042, %v956
  %v1086 = vmul.f32 %v1043, %v957
  %v1087 = vmul.f32 %v1044, %v958
  %v1088 = vmul.f32 %v1045, %v959
  %v1089 = vmul.f32 %v1046, %v960
  %v1090 = vmul.f32 %v1047, %v961
  %v1091 = vmul.f32 %v1048, %v962
  %v1092 = vmul.f32 %v1049, %v963
  %v1093 = vmul.f32 %v1050, %v964
  %v1094 = vmul.f32 %v1051, %v965
  %v1095 = vmul.f32 %v1052, %v966
  %v1096 = vmul.f32 %v1053, %v967
  %v1097 = vmul.f32 %v1054, %v968
  %v1098 = vmul.f32 %v1055, %v969
  %v1099 = vmul.f32 %v1056, %v970
  %v1100 = vmul.f32 %v1057, %v971
  %v1101 = vmul.f32 %v1058, %v972
  %v1102 = vmul.f32 %v1059, %v973
  %v1103 = vmul.f32 %v1060, %v974
  %v1104 = vmul.f32 %v1061, %v975
  %v1105 = vmul.f32 %v1062, %v976
  %v1106 = vmul.f32 %v1063, %v977
  %v1107 = vmul.f32 %v1064, %v978
  %v1108 = vmul.f32 %v1065, %v979
  %v1109 = vmul.f32 %v1066, %v980
  %v1110 = vmul.f32 %v1067, %v981
  %v1111 = vmul.f32 %v1068, %v982
  %v1112 = vmul.f32 %v1069, %v983
  %v1113 = vmul.f32 %v1070, %v984
  %v1114 = vmul.f32 %v1071, %v985
  %v1115 = vmul.f32 %v1072, %v986
  %v1116 = vmul.f32 %v1073, %v987
  %v1117 = vmul.f32 %v1074, %v988
  %v1118 = vmul.f32 %v1075, %v989
  %v1119 = vmul.f32 %v1076, %v990
  %v1120 = vmul.f32 %v1077, %v991
  %v1121 = vmul.f32 %v1078, %v992
  %v1122 = vmul.f32 %v1079, %v993
  %v1123 = vmul.f32 %v1080, %v994
  %v1124 = vmul.f32 %v1081, %v995
  %v1125 = vadd.f32 %v1082, 0.050955694
  %v1126 = vadd.f32 %v1083, 0.050955694
  %v1127 = vadd.f32 %v1084, 0.050955694
  %v1128 = vadd.f32 %v1085, 0.050955694
  %v1129 = vadd.f32 %v1086, 0.050955694
  %v1130 = vadd.f32 %v1087, 0.050955694
  %v1131 = vadd.f32 %v1088, 0.050955694
  %v1132 = vadd.f32 %v1089, 0.050955694
  %v1133 = vadd.f32 %v1090, 0.050955694
  %v1134 = vadd.f32 %v1091, 0.050955694
  %v1135 = vadd.f32 %v1092, 0.050955694
  %v1136 = vadd.f32 %v1093, 0.050955694
  %v1137 = vadd.f32 %v1094, 0.050955694
  %v1138 = vadd.f32 %v1095, 0.050955694
  %v1139 = vadd.f32 %v1096, 0.050955694
  %v1140 = vadd.f32 %v1097, 0.050955694
  %v1141 = vadd.f32 %v1098, 0.050955694
  %v1142 = vadd.f32 %v1099, 0.050955694
  %v1143 = vadd.f32 %v1100, 0.050955694
  %v1144 = vadd.f32 %v1101, 0.050955694
  %v1145 = vadd.f32 %v1102, 0.050955694
  %v1146 = vadd.f32 %v1103, 0.050955694
  %v1147 = vadd.f32 %v1104, 0.050955694
  %v1148 = vadd.f32 %v1105, 0.050955694
  %v1149 = vadd.f32 %v1106, 0.050955694
  %v1150 = vadd.f32 %v1107, 0.050955694
  %v1151 = vadd.f32 %v1108, 0.050955694
  %v1152 = vadd.f32 %v1109, 0.050955694
  %v1153 = vadd.f32 %v1110, 0.050955694
  %v1154 = vadd.f32 %v1111, 0.050955694
  %v1155 = vadd.f32 %v1112, 0.050955694
  %v1156 = vadd.f32 %v1113, 0.050955694
  %v1157 = vadd.f32 %v1114, 0.050955694
  %v1158 = vadd.f32 %v1115, 0.050955694
  %v1159 = vadd.f32 %v1116, 0.050955694
  %v1160 = vadd.f32 %v1117, 0.050955694
  %v1161 = vadd.f32 %v1118, 0.050955694
  %v1162 = vadd.f32 %v1119, 0.050955694
  %v1163 = vadd.f32 %v1120, 0.050955694
  %v1164 = vadd.f32 %v1121, 0.050955694
  %v1165 = vadd.f32 %v1122, 0.050955694
  %v1166 = vadd.f32 %v1123, 0.050955694
  %v1167 = vadd.f32 %v1124, 0.050955694
  %v1168 = vmul.f32 %v1125, %v953
  %v1169 = vmul.f32 %v1126, %v954
  %v1170 = vmul.f32 %v1127, %v955
  %v1171 = vmul.f32 %v1128, %v956
  %v1172 = vmul.f32 %v1129, %v957
  %v1173 = vmul.f32 %v1130, %v958
  %v1174 = vmul.f32 %v1131, %v959
  %v1175 = vmul.f32 %v1132, %v960
  %v1176 = vmul.f32 %v1133, %v961
  %v1177 = vmul.f32 %v1134, %v962
  %v1178 = vmul.f32 %v1135, %v963
  %v1179 = vmul.f32 %v1136, %v964
  %v1180 = vmul.f32 %v1137, %v965
  %v1181 = vmul.f32 %v1138, %v966
  %v1182 = vmul.f32 %v1139, %v967
  %v1183 = vmul.f32 %v1140, %v968
  %v1184 = vmul.f32 %v1141, %v969
  %v1185 = vmul.f32 %v1142, %v970
  %v1186 = vmul.f32 %v1143, %v971
  %v1187 = vmul.f32 %v1144, %v972
  %v1188 = vmul.f32 %v1145, %v973
  %v1189 = vmul.f32 %v1146, %v974
  %v1190 = vmul.f32 %v1147, %v975
  %v1191 = vmul.f32 %v1148, %v976
  %v1192 = vmul.f32 %v1149, %v977
  %v1193 = vmul.f32 %v1150, %v978
  %v1194 = vmul.f32 %v1151, %v979
  %v1195 = vmul.f32 %v1152, %v980
  %v1196 = vmul.f32 %v1153, %v981
  %v1197 = vmul.f32 %v1154, %v982
  %v1198 = vmul.f32 %v1155, %v983
  %v1199 = vmul.f32 %v1156, %v984
  %v1200 = vmul.f32 %v1157, %v985
  %v1201 = vmul.f32 %v1158, %v986
  %v1202 = vmul.f32 %v1159, %v987
  %v1203 = vmul.f32 %v1160, %v988
  %v1204 = vmul.f32 %v1161, %v989
  %v1205 = vmul.f32 %v1162, %v990
  %v1206 = vmul.f32 %v1163, %v991
  %v1207 = vmul.f32 %v1164, %v992
  %v1208 = vmul.f32 %v1165, %v993
  %v1209 = vmul.f32 %v1166, %v994
  %v1210 = vmul.f32 %v1167, %v995
  %v1211 = vadd.f32 %v1168, 0.18520832
  %v1212 = vadd.f32 %v1169, 0.18520832
  %v1213 = vadd.f32 %v1170, 0.18520832
  %v1214 = vadd.f32 %v1171, 0.18520832
  %v1215 = vadd.f32 %v1172, 0.18520832
  %v1216 = vadd.f32 %v1173, 0.18520832
  %v1217 = vadd.f32 %v1174, 0.18520832
  %v1218 = vadd.f32 %v1175, 0.18520832
  %v1219 = vadd.f32 %v1176, 0.18520832
  %v1220 = vadd.f32 %v1177, 0.18520832
  %v1221 = vadd.f32 %v1178, 0.18520832
  %v1222 = vadd.f32 %v1179, 0.18520832
  %v1223 = vadd.f32 %v1180, 0.18520832
  %v1224 = vadd.f32 %v1181, 0.18520832
  %v1225 = vadd.f32 %v1182, 0.18520832
  %v1226 = vadd.f32 %v1183, 0.18520832
  %v1227 = vadd.f32 %v1184, 0.18520832
  %v1228 = vadd.f32 %v1185, 0.18520832
  %v1229 = vadd.f32 %v1186, 0.18520832
  %v1230 = vadd.f32 %v1187, 0.18520832
  %v1231 = vadd.f32 %v1188, 0.18520832
  %v1232 = vadd.f32 %v1189, 0.18520832
  %v1233 = vadd.f32 %v1190, 0.18520832
  %v1234 = vadd.f32 %v1191, 0.18520832
  %v1235 = vadd.f32 %v1192, 0.18520832
  %v1236 = vadd.f32 %v1193, 0.18520832
  %v1237 = vadd.f32 %v1194, 0.18520832
  %v1238 = vadd.f32 %v1195, 0.18520832
  %v1239 = vadd.f32 %v1196, 0.18520832
  %v1240 = vadd.f32 %v1197, 0.18520832
  %v1241 = vadd.f32 %v1198, 0.18520832
  %v1242 = vadd.f32 %v1199, 0.18520832
  %v1243 = vadd.f32 %v1200, 0.18520832
  %v1244 = vadd.f32 %v1201, 0.18520832
  %v1245 = vadd.f32 %v1202, 0.18520832
  %v1246 = vadd.f32 %v1203, 0.18520832
  %v1247 = vadd.f32 %v1204, 0.18520832
  %v1248 = vadd.f32 %v1205, 0.18520832
  %v1249 = vadd.f32 %v1206, 0.18520832
  %v1250 = vadd.f32 %v1207, 0.18520832
  %v1251 = vadd.f32 %v1208, 0.18520832
  %v1252 = vadd.f32 %v1209, 0.18520832
  %v1253 = vadd.f32 %v1210, 0.18520832
  %v1254 = vmul.f32 %v1211, %v953
  %v1255 = vmul.f32 %v1212, %v954
  %v1256 = vmul.f32 %v1213, %v955
  %v1257 = vmul.f32 %v1214, %v956
  %v1258 = vmul.f32 %v1215, %v957
  %v1259 = vmul.f32 %v1216, %v958
  %v1260 = vmul.f32 %v1217, %v959
  %v1261 = vmul.f32 %v1218, %v960
  %v1262 = vmul.f32 %v1219, %v961
  %v1263 = vmul.f32 %v1220, %v962
  %v1264 = vmul.f32 %v1221, %v963
  %v1265 = vmul.f32 %v1222, %v964
  %v1266 = vmul.f32 %v1223, %v965
  %v1267 = vmul.f32 %v1224, %v966
  %v1268 = vmul.f32 %v1225, %v967
  %v1269 = vmul.f32 %v1226, %v968
  %v1270 = vmul.f32 %v1227, %v969
  %v1271 = vmul.f32 %v1228, %v970
  %v1272 = vmul.f32 %v1229, %v971
  %v1273 = vmul.f32 %v1230, %v972
  %v1274 = vmul.f32 %v1231, %v973
  %v1275 = vmul.f32 %v1232, %v974
  %v1276 = vmul.f32 %v1233, %v975
  %v1277 = vmul.f32 %v1234, %v976
  %v1278 = vmul.f32 %v1235, %v977
  %v1279 = vmul.f32 %v1236, %v978
  %v1280 = vmul.f32 %v1237, %v979
  %v1281 = vmul.f32 %v1238, %v980
  %v1282 = vmul.f32 %v1239, %v981
  %v1283 = vmul.f32 %v1240, %v982
  %v1284 = vmul.f32 %v1241, %v983
  %v1285 = vmul.f32 %v1242, %v984
  %v1286 = vmul.f32 %v1243, %v985
  %v1287 = vmul.f32 %v1244, %v986
  %v1288 = vmul.f32 %v1245, %v987
  %v1289 = vmul.f32 %v1246, %v988
  %v1290 = vmul.f32 %v1247, %v989
  %v1291 = vmul.f32 %v1248, %v990
  %v1292 = vmul.f32 %v1249, %v991
  %v1293 = vmul.f32 %v1250, %v992
  %v1294 = vmul.f32 %v1251, %v993
  %v1295 = vmul.f32 %v1252, %v994
  %v1296 = vmul.f32 %v1253, %v995
  %v1297 = vadd.f32 %v1254, 1.1283791
  %v1298 = vadd.f32 %v1255, 1.1283791
  %v1299 = vadd.f32 %v1256, 1.1283791
  %v1300 = vadd.f32 %v1257, 1.1283791
  %v1301 = vadd.f32 %v1258, 1.1283791
  %v1302 = vadd.f32 %v1259, 1.1283791
  %v1303 = vadd.f32 %v1260, 1.1283791
  %v1304 = vadd.f32 %v1261, 1.1283791
  %v1305 = vadd.f32 %v1262, 1.1283791
  %v1306 = vadd.f32 %v1263, 1.1283791
  %v1307 = vadd.f32 %v1264, 1.1283791
  %v1308 = vadd.f32 %v1265, 1.1283791
  %v1309 = vadd.f32 %v1266, 1.1283791
  %v1310 = vadd.f32 %v1267, 1.1283791
  %v1311 = vadd.f32 %v1268, 1.1283791
  %v1312 = vadd.f32 %v1269, 1.1283791
  %v1313 = vadd.f32 %v1270, 1.1283791
  %v1314 = vadd.f32 %v1271, 1.1283791
  %v1315 = vadd.f32 %v1272, 1.1283791
  %v1316 = vadd.f32 %v1273, 1.1283791
  %v1317 = vadd.f32 %v1274, 1.1283791
  %v1318 = vadd.f32 %v1275, 1.1283791
  %v1319 = vadd.f32 %v1276, 1.1283791
  %v1320 = vadd.f32 %v1277, 1.1283791
  %v1321 = vadd.f32 %v1278, 1.1283791
  %v1322 = vadd.f32 %v1279, 1.1283791
  %v1323 = vadd.f32 %v1280, 1.1283791
  %v1324 = vadd.f32 %v1281, 1.1283791
  %v1325 = vadd.f32 %v1282, 1.1283791
  %v1326 = vadd.f32 %v1283, 1.1283791
  %v1327 = vadd.f32 %v1284, 1.1283791
  %v1328 = vadd.f32 %v1285, 1.1283791
  %v1329 = vadd.f32 %v1286, 1.1283791
  %v1330 = vadd.f32 %v1287, 1.1283791
  %v1331 = vadd.f32 %v1288, 1.1283791
  %v1332 = vadd.f32 %v1289, 1.1283791
  %v1333 = vadd.f32 %v1290, 1.1283791
  %v1334 = vadd.f32 %v1291, 1.1283791
  %v1335 = vadd.f32 %v1292, 1.1283791
  %v1336 = vadd.f32 %v1293, 1.1283791
  %v1337 = vadd.f32 %v1294, 1.1283791
  %v1338 = vadd.f32 %v1295, 1.1283791
  %v1339 = vadd.f32 %v1296, 1.1283791
  %v1340 = vmul.f32 %v953, -1.1791603e-07
  %v1341 = vmul.f32 %v954, -1.1791603e-07
  %v1342 = vmul.f32 %v955, -1.1791603e-07
  %v1343 = vmul.f32 %v956, -1.1791603e-07
  %v1344 = vmul.f32 %v957, -1.1791603e-07
  %v1345 = vmul.f32 %v958, -1.1791603e-07
  %v1346 = vmul.f32 %v959, -1.1791603e-07
  %v1347 = vmul.f32 %v960, -1.1791603e-07
  %v1348 = vmul.f32 %v961, -1.1791603e-07
  %v1349 = vmul.f32 %v962, -1.1791603e-07
  %v1350 = vmul.f32 %v963, -1.1791603e-07
  %v1351 = vmul.f32 %v964, -1.1791603e-07
  %v1352 = vmul.f32 %v965, -1.1791603e-07
  %v1353 = vmul.f32 %v966, -1.1791603e-07
  %v1354 = vmul.f32 %v967, -1.1791603e-07
  %v1355 = vmul.f32 %v968, -1.1791603e-07
  %v1356 = vmul.f32 %v969, -1.1791603e-07
  %v1357 = vmul.f32 %v970, -1.1791603e-07
  %v1358 = vmul.f32 %v971, -1.1791603e-07
  %v1359 = vmul.f32 %v972, -1.1791603e-07
  %v1360 = vmul.f32 %v973, -1.1791603e-07
  %v1361 = vmul.f32 %v974, -1.1791603e-07
  %v1362 = vmul.f32 %v975, -1.1791603e-07
  %v1363 = vmul.f32 %v976, -1.1791603e-07
  %v1364 = vmul.f32 %v977, -1.1791603e-07
  %v1365 = vmul.f32 %v978, -1.1791603e-07
  %v1366 = vmul.f32 %v979, -1.1791603e-07
  %v1367 = vmul.f32 %v980, -1.1791603e-07
  %v1368 = vmul.f32 %v981, -1.1791603e-07
  %v1369 = vmul.f32 %v982, -1.1791603e-07
  %v1370 = vmul.f32 %v983, -1.1791603e-07
  %v1371 = vmul.f32 %v984, -1.1791603e-07
  %v1372 = vmul.f32 %v985, -1.1791603e-07
  %v1373 = vmul.f32 %v986, -1.1791603e-07
  %v1374 = vmul.f32 %v987, -1.1791603e-07
  %v1375 = vmul.f32 %v988, -1.1791603e-07
  %v1376 = vmul.f32 %v989, -1.1791603e-07
  %v1377 = vmul.f32 %v990, -1.1791603e-07
  %v1378 = vmul.f32 %v991, -1.1791603e-07
  %v1379 = vmul.f32 %v992, -1.1791603e-07
  %v1380 = vmul.f32 %v993, -1.1791603e-07
  %v1381 = vmul.f32 %v994, -1.1791603e-07
  %v1382 = vmul.f32 %v995, -1.1791603e-07
  %v1383 = vadd.f32 %v1340, 2.3547966e-05
  %v1384 = vadd.f32 %v1341, 2.3547966e-05
  %v1385 = vadd.f32 %v1342, 2.3547966e-05
  %v1386 = vadd.f32 %v1343, 2.3547966e-05
  %v1387 = vadd.f32 %v1344, 2.3547966e-05
  %v1388 = vadd.f32 %v1345, 2.3547966e-05
  %v1389 = vadd.f32 %v1346, 2.3547966e-05
  %v1390 = vadd.f32 %v1347, 2.3547966e-05
  %v1391 = vadd.f32 %v1348, 2.3547966e-05
  %v1392 = vadd.f32 %v1349, 2.3547966e-05
  %v1393 = vadd.f32 %v1350, 2.3547966e-05
  %v1394 = vadd.f32 %v1351, 2.3547966e-05
  %v1395 = vadd.f32 %v1352, 2.3547966e-05
  %v1396 = vadd.f32 %v1353, 2.3547966e-05
  %v1397 = vadd.f32 %v1354, 2.3547966e-05
  %v1398 = vadd.f32 %v1355, 2.3547966e-05
  %v1399 = vadd.f32 %v1356, 2.3547966e-05
  %v1400 = vadd.f32 %v1357, 2.3547966e-05
  %v1401 = vadd.f32 %v1358, 2.3547966e-05
  %v1402 = vadd.f32 %v1359, 2.3547966e-05
  %v1403 = vadd.f32 %v1360, 2.3547966e-05
  %v1404 = vadd.f32 %v1361, 2.3547966e-05
  %v1405 = vadd.f32 %v1362, 2.3547966e-05
  %v1406 = vadd.f32 %v1363, 2.3547966e-05
  %v1407 = vadd.f32 %v1364, 2.3547966e-05
  %v1408 = vadd.f32 %v1365, 2.3547966e-05
  %v1409 = vadd.f32 %v1366, 2.3547966e-05
  %v1410 = vadd.f32 %v1367, 2.3547966e-05
  %v1411 = vadd.f32 %v1368, 2.3547966e-05
  %v1412 = vadd.f32 %v1369, 2.3547966e-05
  %v1413 = vadd.f32 %v1370, 2.3547966e-05
  %v1414 = vadd.f32 %v1371, 2.3547966e-05
  %v1415 = vadd.f32 %v1372, 2.3547966e-05
  %v1416 = vadd.f32 %v1373, 2.3547966e-05
  %v1417 = vadd.f32 %v1374, 2.3547966e-05
  %v1418 = vadd.f32 %v1375, 2.3547966e-05
  %v1419 = vadd.f32 %v1376, 2.3547966e-05
  %v1420 = vadd.f32 %v1377, 2.3547966e-05
  %v1421 = vadd.f32 %v1378, 2.3547966e-05
  %v1422 = vadd.f32 %v1379, 2.3547966e-05
  %v1423 = vadd.f32 %v1380, 2.3547966e-05
  %v1424 = vadd.f32 %v1381, 2.3547966e-05
  %v1425 = vadd.f32 %v1382, 2.3547966e-05
  %v1426 = vmul.f32 %v1383, %v953
  %v1427 = vmul.f32 %v1384, %v954
  %v1428 = vmul.f32 %v1385, %v955
  %v1429 = vmul.f32 %v1386, %v956
  %v1430 = vmul.f32 %v1387, %v957
  %v1431 = vmul.f32 %v1388, %v958
  %v1432 = vmul.f32 %v1389, %v959
  %v1433 = vmul.f32 %v1390, %v960
  %v1434 = vmul.f32 %v1391, %v961
  %v1435 = vmul.f32 %v1392, %v962
  %v1436 = vmul.f32 %v1393, %v963
  %v1437 = vmul.f32 %v1394, %v964
  %v1438 = vmul.f32 %v1395, %v965
  %v1439 = vmul.f32 %v1396, %v966
  %v1440 = vmul.f32 %v1397, %v967
  %v1441 = vmul.f32 %v1398, %v968
  %v1442 = vmul.f32 %v1399, %v969
  %v1443 = vmul.f32 %v1400, %v970
  %v1444 = vmul.f32 %v1401, %v971
  %v1445 = vmul.f32 %v1402, %v972
  %v1446 = vmul.f32 %v1403, %v973
  %v1447 = vmul.f32 %v1404, %v974
  %v1448 = vmul.f32 %v1405, %v975
  %v1449 = vmul.f32 %v1406, %v976
  %v1450 = vmul.f32 %v1407, %v977
  %v1451 = vmul.f32 %v1408, %v978
  %v1452 = vmul.f32 %v1409, %v979
  %v1453 = vmul.f32 %v1410, %v980
  %v1454 = vmul.f32 %v1411, %v981
  %v1455 = vmul.f32 %v1412, %v982
  %v1456 = vmul.f32 %v1413, %v983
  %v1457 = vmul.f32 %v1414, %v984
  %v1458 = vmul.f32 %v1415, %v985
  %v1459 = vmul.f32 %v1416, %v986
  %v1460 = vmul.f32 %v1417, %v987
  %v1461 = vmul.f32 %v1418, %v988
  %v1462 = vmul.f32 %v1419, %v989
  %v1463 = vmul.f32 %v1420, %v990
  %v1464 = vmul.f32 %v1421, %v991
  %v1465 = vmul.f32 %v1422, %v992
  %v1466 = vmul.f32 %v1423, %v993
  %v1467 = vmul.f32 %v1424, %v994
  %v1468 = vmul.f32 %v1425, %v995
  %v1469 = vadd.f32 %v1426, 0.0010179626
  %v1470 = vadd.f32 %v1427, 0.0010179626
  %v1471 = vadd.f32 %v1428, 0.0010179626
  %v1472 = vadd.f32 %v1429, 0.0010179626
  %v1473 = vadd.f32 %v1430, 0.0010179626
  %v1474 = vadd.f32 %v1431, 0.0010179626
  %v1475 = vadd.f32 %v1432, 0.0010179626
  %v1476 = vadd.f32 %v1433, 0.0010179626
  %v1477 = vadd.f32 %v1434, 0.0010179626
  %v1478 = vadd.f32 %v1435, 0.0010179626
  %v1479 = vadd.f32 %v1436, 0.0010179626
  %v1480 = vadd.f32 %v1437, 0.0010179626
  %v1481 = vadd.f32 %v1438, 0.0010179626
  %v1482 = vadd.f32 %v1439, 0.0010179626
  %v1483 = vadd.f32 %v1440, 0.0010179626
  %v1484 = vadd.f32 %v1441, 0.0010179626
  %v1485 = vadd.f32 %v1442, 0.0010179626
  %v1486 = vadd.f32 %v1443, 0.0010179626
  %v1487 = vadd.f32 %v1444, 0.0010179626
  %v1488 = vadd.f32 %v1445, 0.0010179626
  %v1489 = vadd.f32 %v1446, 0.0010179626
  %v1490 = vadd.f32 %v1447, 0.0010179626
  %v1491 = vadd.f32 %v1448, 0.0010179626
  %v1492 = vadd.f32 %v1449, 0.0010179626
  %v1493 = vadd.f32 %v1450, 0.0010179626
  %v1494 = vadd.f32 %v1451, 0.0010179626
  %v1495 = vadd.f32 %v1452, 0.0010179626
  %v1496 = vadd.f32 %v1453, 0.0010179626
  %v1497 = vadd.f32 %v1454, 0.0010179626
  %v1498 = vadd.f32 %v1455, 0.0010179626
  %v1499 = vadd.f32 %v1456, 0.0010179626
  %v1500 = vadd.f32 %v1457, 0.0010179626
  %v1501 = vadd.f32 %v1458, 0.0010179626
  %v1502 = vadd.f32 %v1459, 0.0010179626
  %v1503 = vadd.f32 %v1460, 0.0010179626
  %v1504 = vadd.f32 %v1461, 0.0010179626
  %v1505 = vadd.f32 %v1462, 0.0010179626
  %v1506 = vadd.f32 %v1463, 0.0010179626
  %v1507 = vadd.f32 %v1464, 0.0010179626
  %v1508 = vadd.f32 %v1465, 0.0010179626
  %v1509 = vadd.f32 %v1466, 0.0010179626
  %v1510 = vadd.f32 %v1467, 0.0010179626
  %v1511 = vadd.f32 %v1468, 0.0010179626
  %v1512 = vmul.f32 %v1469, %v953
  %v1513 = vmul.f32 %v1470, %v954
  %v1514 = vmul.f32 %v1471, %v955
  %v1515 = vmul.f32 %v1472, %v956
  %v1516 = vmul.f32 %v1473, %v957
  %v1517 = vmul.f32 %v1474, %v958
  %v1518 = vmul.f32 %v1475, %v959
  %v1519 = vmul.f32 %v1476, %v960
  %v1520 = vmul.f32 %v1477, %v961
  %v1521 = vmul.f32 %v1478, %v962
  %v1522 = vmul.f32 %v1479, %v963
  %v1523 = vmul.f32 %v1480, %v964
  %v1524 = vmul.f32 %v1481, %v965
  %v1525 = vmul.f32 %v1482, %v966
  %v1526 = vmul.f32 %v1483, %v967
  %v1527 = vmul.f32 %v1484, %v968
  %v1528 = vmul.f32 %v1485, %v969
  %v1529 = vmul.f32 %v1486, %v970
  %v1530 = vmul.f32 %v1487, %v971
  %v1531 = vmul.f32 %v1488, %v972
  %v1532 = vmul.f32 %v1489, %v973
  %v1533 = vmul.f32 %v1490, %v974
  %v1534 = vmul.f32 %v1491, %v975
  %v1535 = vmul.f32 %v1492, %v976
  %v1536 = vmul.f32 %v1493, %v977
  %v1537 = vmul.f32 %v1494, %v978
  %v1538 = vmul.f32 %v1495, %v979
  %v1539 = vmul.f32 %v1496, %v980
  %v1540 = vmul.f32 %v1497, %v981
  %v1541 = vmul.f32 %v1498, %v982
  %v1542 = vmul.f32 %v1499, %v983
  %v1543 = vmul.f32 %v1500, %v984
  %v1544 = vmul.f32 %v1501, %v985
  %v1545 = vmul.f32 %v1502, %v986
  %v1546 = vmul.f32 %v1503, %v987
  %v1547 = vmul.f32 %v1504, %v988
  %v1548 = vmul.f32 %v1505, %v989
  %v1549 = vmul.f32 %v1506, %v990
  %v1550 = vmul.f32 %v1507, %v991
  %v1551 = vmul.f32 %v1508, %v992
  %v1552 = vmul.f32 %v1509, %v993
  %v1553 = vmul.f32 %v1510, %v994
  %v1554 = vmul.f32 %v1511, %v995
  %v1555 = vadd.f32 %v1512, 0.01407047
  %v1556 = vadd.f32 %v1513, 0.01407047
  %v1557 = vadd.f32 %v1514, 0.01407047
  %v1558 = vadd.f32 %v1515, 0.01407047
  %v1559 = vadd.f32 %v1516, 0.01407047
  %v1560 = vadd.f32 %v1517, 0.01407047
  %v1561 = vadd.f32 %v1518, 0.01407047
  %v1562 = vadd.f32 %v1519, 0.01407047
  %v1563 = vadd.f32 %v1520, 0.01407047
  %v1564 = vadd.f32 %v1521, 0.01407047
  %v1565 = vadd.f32 %v1522, 0.01407047
  %v1566 = vadd.f32 %v1523, 0.01407047
  %v1567 = vadd.f32 %v1524, 0.01407047
  %v1568 = vadd.f32 %v1525, 0.01407047
  %v1569 = vadd.f32 %v1526, 0.01407047
  %v1570 = vadd.f32 %v1527, 0.01407047
  %v1571 = vadd.f32 %v1528, 0.01407047
  %v1572 = vadd.f32 %v1529, 0.01407047
  %v1573 = vadd.f32 %v1530, 0.01407047
  %v1574 = vadd.f32 %v1531, 0.01407047
  %v1575 = vadd.f32 %v1532, 0.01407047
  %v1576 = vadd.f32 %v1533, 0.01407047
  %v1577 = vadd.f32 %v1534, 0.01407047
  %v1578 = vadd.f32 %v1535, 0.01407047
  %v1579 = vadd.f32 %v1536, 0.01407047
  %v1580 = vadd.f32 %v1537, 0.01407047
  %v1581 = vadd.f32 %v1538, 0.01407047
  %v1582 = vadd.f32 %v1539, 0.01407047
  %v1583 = vadd.f32 %v1540, 0.01407047
  %v1584 = vadd.f32 %v1541, 0.01407047
  %v1585 = vadd.f32 %v1542, 0.01407047
  %v1586 = vadd.f32 %v1543, 0.01407047
  %v1587 = vadd.f32 %v1544, 0.01407047
  %v1588 = vadd.f32 %v1545, 0.01407047
  %v1589 = vadd.f32 %v1546, 0.01407047
  %v1590 = vadd.f32 %v1547, 0.01407047
  %v1591 = vadd.f32 %v1548, 0.01407047
  %v1592 = vadd.f32 %v1549, 0.01407047
  %v1593 = vadd.f32 %v1550, 0.01407047
  %v1594 = vadd.f32 %v1551, 0.01407047
  %v1595 = vadd.f32 %v1552, 0.01407047
  %v1596 = vadd.f32 %v1553, 0.01407047
  %v1597 = vadd.f32 %v1554, 0.01407047
  %v1598 = vmul.f32 %v1555, %v953
  %v1599 = vmul.f32 %v1556, %v954
  %v1600 = vmul.f32 %v1557, %v955
  %v1601 = vmul.f32 %v1558, %v956
  %v1602 = vmul.f32 %v1559, %v957
  %v1603 = vmul.f32 %v1560, %v958
  %v1604 = vmul.f32 %v1561, %v959
  %v1605 = vmul.f32 %v1562, %v960
  %v1606 = vmul.f32 %v1563, %v961
  %v1607 = vmul.f32 %v1564, %v962
  %v1608 = vmul.f32 %v1565, %v963
  %v1609 = vmul.f32 %v1566, %v964
  %v1610 = vmul.f32 %v1567, %v965
  %v1611 = vmul.f32 %v1568, %v966
  %v1612 = vmul.f32 %v1569, %v967
  %v1613 = vmul.f32 %v1570, %v968
  %v1614 = vmul.f32 %v1571, %v969
  %v1615 = vmul.f32 %v1572, %v970
  %v1616 = vmul.f32 %v1573, %v971
  %v1617 = vmul.f32 %v1574, %v972
  %v1618 = vmul.f32 %v1575, %v973
  %v1619 = vmul.f32 %v1576, %v974
  %v1620 = vmul.f32 %v1577, %v975
  %v1621 = vmul.f32 %v1578, %v976
  %v1622 = vmul.f32 %v1579, %v977
  %v1623 = vmul.f32 %v1580, %v978
  %v1624 = vmul.f32 %v1581, %v979
  %v1625 = vmul.f32 %v1582, %v980
  %v1626 = vmul.f32 %v1583, %v981
  %v1627 = vmul.f32 %v1584, %v982
  %v1628 = vmul.f32 %v1585, %v983
  %v1629 = vmul.f32 %v1586, %v984
  %v1630 = vmul.f32 %v1587, %v985
  %v1631 = vmul.f32 %v1588, %v986
  %v1632 = vmul.f32 %v1589, %v987
  %v1633 = vmul.f32 %v1590, %v988
  %v1634 = vmul.f32 %v1591, %v989
  %v1635 = vmul.f32 %v1592, %v990
  %v1636 = vmul.f32 %v1593, %v991
  %v1637 = vmul.f32 %v1594, %v992
  %v1638 = vmul.f32 %v1595, %v993
  %v1639 = vmul.f32 %v1596, %v994
  %v1640 = vmul.f32 %v1597, %v995
  %v1641 = vadd.f32 %v1598, 0.11098505
  %v1642 = vadd.f32 %v1599, 0.11098505
  %v1643 = vadd.f32 %v1600, 0.11098505
  %v1644 = vadd.f32 %v1601, 0.11098505
  %v1645 = vadd.f32 %v1602, 0.11098505
  %v1646 = vadd.f32 %v1603, 0.11098505
  %v1647 = vadd.f32 %v1604, 0.11098505
  %v1648 = vadd.f32 %v1605, 0.11098505
  %v1649 = vadd.f32 %v1606, 0.11098505
  %v1650 = vadd.f32 %v1607, 0.11098505
  %v1651 = vadd.f32 %v1608, 0.11098505
  %v1652 = vadd.f32 %v1609, 0.11098505
  %v1653 = vadd.f32 %v1610, 0.11098505
  %v1654 = vadd.f32 %v1611, 0.11098505
  %v1655 = vadd.f32 %v1612, 0.11098505
  %v1656 = vadd.f32 %v1613, 0.11098505
  %v1657 = vadd.f32 %v1614, 0.11098505
  %v1658 = vadd.f32 %v1615, 0.11098505
  %v1659 = vadd.f32 %v1616, 0.11098505
  %v1660 = vadd.f32 %v1617, 0.11098505
  %v1661 = vadd.f32 %v1618, 0.11098505
  %v1662 = vadd.f32 %v1619, 0.11098505
  %v1663 = vadd.f32 %v1620, 0.11098505
  %v1664 = vadd.f32 %v1621, 0.11098505
  %v1665 = vadd.f32 %v1622, 0.11098505
  %v1666 = vadd.f32 %v1623, 0.11098505
  %v1667 = vadd.f32 %v1624, 0.11098505
  %v1668 = vadd.f32 %v1625, 0.11098505
  %v1669 = vadd.f32 %v1626, 0.11098505
  %v1670 = vadd.f32 %v1627, 0.11098505
  %v1671 = vadd.f32 %v1628, 0.11098505
  %v1672 = vadd.f32 %v1629, 0.11098505
  %v1673 = vadd.f32 %v1630, 0.11098505
  %v1674 = vadd.f32 %v1631, 0.11098505
  %v1675 = vadd.f32 %v1632, 0.11098505
  %v1676 = vadd.f32 %v1633, 0.11098505
  %v1677 = vadd.f32 %v1634, 0.11098505
  %v1678 = vadd.f32 %v1635, 0.11098505
  %v1679 = vadd.f32 %v1636, 0.11098505
  %v1680 = vadd.f32 %v1637, 0.11098505
  %v1681 = vadd.f32 %v1638, 0.11098505
  %v1682 = vadd.f32 %v1639, 0.11098505
  %v1683 = vadd.f32 %v1640, 0.11098505
  %v1684 = vmul.f32 %v1641, %v953
  %v1685 = vmul.f32 %v1642, %v954
  %v1686 = vmul.f32 %v1643, %v955
  %v1687 = vmul.f32 %v1644, %v956
  %v1688 = vmul.f32 %v1645, %v957
  %v1689 = vmul.f32 %v1646, %v958
  %v1690 = vmul.f32 %v1647, %v959
  %v1691 = vmul.f32 %v1648, %v960
  %v1692 = vmul.f32 %v1649, %v961
  %v1693 = vmul.f32 %v1650, %v962
  %v1694 = vmul.f32 %v1651, %v963
  %v1695 = vmul.f32 %v1652, %v964
  %v1696 = vmul.f32 %v1653, %v965
  %v1697 = vmul.f32 %v1654, %v966
  %v1698 = vmul.f32 %v1655, %v967
  %v1699 = vmul.f32 %v1656, %v968
  %v1700 = vmul.f32 %v1657, %v969
  %v1701 = vmul.f32 %v1658, %v970
  %v1702 = vmul.f32 %v1659, %v971
  %v1703 = vmul.f32 %v1660, %v972
  %v1704 = vmul.f32 %v1661, %v973
  %v1705 = vmul.f32 %v1662, %v974
  %v1706 = vmul.f32 %v1663, %v975
  %v1707 = vmul.f32 %v1664, %v976
  %v1708 = vmul.f32 %v1665, %v977
  %v1709 = vmul.f32 %v1666, %v978
  %v1710 = vmul.f32 %v1667, %v979
  %v1711 = vmul.f32 %v1668, %v980
  %v1712 = vmul.f32 %v1669, %v981
  %v1713 = vmul.f32 %v1670, %v982
  %v1714 = vmul.f32 %v1671, %v983
  %v1715 = vmul.f32 %v1672, %v984
  %v1716 = vmul.f32 %v1673, %v985
  %v1717 = vmul.f32 %v1674, %v986
  %v1718 = vmul.f32 %v1675, %v987
  %v1719 = vmul.f32 %v1676, %v988
  %v1720 = vmul.f32 %v1677, %v989
  %v1721 = vmul.f32 %v1678, %v990
  %v1722 = vmul.f32 %v1679, %v991
  %v1723 = vmul.f32 %v1680, %v992
  %v1724 = vmul.f32 %v1681, %v993
  %v1725 = vmul.f32 %v1682, %v994
  %v1726 = vmul.f32 %v1683, %v995
  %v1727 = vadd.f32 %v1684, 0.49746925
  %v1728 = vadd.f32 %v1685, 0.49746925
  %v1729 = vadd.f32 %v1686, 0.49746925
  %v1730 = vadd.f32 %v1687, 0.49746925
  %v1731 = vadd.f32 %v1688, 0.49746925
  %v1732 = vadd.f32 %v1689, 0.49746925
  %v1733 = vadd.f32 %v1690, 0.49746925
  %v1734 = vadd.f32 %v1691, 0.49746925
  %v1735 = vadd.f32 %v1692, 0.49746925
  %v1736 = vadd.f32 %v1693, 0.49746925
  %v1737 = vadd.f32 %v1694, 0.49746925
  %v1738 = vadd.f32 %v1695, 0.49746925
  %v1739 = vadd.f32 %v1696, 0.49746925
  %v1740 = vadd.f32 %v1697, 0.49746925
  %v1741 = vadd.f32 %v1698, 0.49746925
  %v1742 = vadd.f32 %v1699, 0.49746925
  %v1743 = vadd.f32 %v1700, 0.49746925
  %v1744 = vadd.f32 %v1701, 0.49746925
  %v1745 = vadd.f32 %v1702, 0.49746925
  %v1746 = vadd.f32 %v1703, 0.49746925
  %v1747 = vadd.f32 %v1704, 0.49746925
  %v1748 = vadd.f32 %v1705, 0.49746925
  %v1749 = vadd.f32 %v1706, 0.49746925
  %v1750 = vadd.f32 %v1707, 0.49746925
  %v1751 = vadd.f32 %v1708, 0.49746925
  %v1752 = vadd.f32 %v1709, 0.49746925
  %v1753 = vadd.f32 %v1710, 0.49746925
  %v1754 = vadd.f32 %v1711, 0.49746925
  %v1755 = vadd.f32 %v1712, 0.49746925
  %v1756 = vadd.f32 %v1713, 0.49746925
  %v1757 = vadd.f32 %v1714, 0.49746925
  %v1758 = vadd.f32 %v1715, 0.49746925
  %v1759 = vadd.f32 %v1716, 0.49746925
  %v1760 = vadd.f32 %v1717, 0.49746925
  %v1761 = vadd.f32 %v1718, 0.49746925
  %v1762 = vadd.f32 %v1719, 0.49746925
  %v1763 = vadd.f32 %v1720, 0.49746925
  %v1764 = vadd.f32 %v1721, 0.49746925
  %v1765 = vadd.f32 %v1722, 0.49746925
  %v1766 = vadd.f32 %v1723, 0.49746925
  %v1767 = vadd.f32 %v1724, 0.49746925
  %v1768 = vadd.f32 %v1725, 0.49746925
  %v1769 = vadd.f32 %v1726, 0.49746925
  %v1770 = vmul.f32 %v1727, %v953
  %v1771 = vmul.f32 %v1728, %v954
  %v1772 = vmul.f32 %v1729, %v955
  %v1773 = vmul.f32 %v1730, %v956
  %v1774 = vmul.f32 %v1731, %v957
  %v1775 = vmul.f32 %v1732, %v958
  %v1776 = vmul.f32 %v1733, %v959
  %v1777 = vmul.f32 %v1734, %v960
  %v1778 = vmul.f32 %v1735, %v961
  %v1779 = vmul.f32 %v1736, %v962
  %v1780 = vmul.f32 %v1737, %v963
  %v1781 = vmul.f32 %v1738, %v964
  %v1782 = vmul.f32 %v1739, %v965
  %v1783 = vmul.f32 %v1740, %v966
  %v1784 = vmul.f32 %v1741, %v967
  %v1785 = vmul.f32 %v1742, %v968
  %v1786 = vmul.f32 %v1743, %v969
  %v1787 = vmul.f32 %v1744, %v970
  %v1788 = vmul.f32 %v1745, %v971
  %v1789 = vmul.f32 %v1746, %v972
  %v1790 = vmul.f32 %v1747, %v973
  %v1791 = vmul.f32 %v1748, %v974
  %v1792 = vmul.f32 %v1749, %v975
  %v1793 = vmul.f32 %v1750, %v976
  %v1794 = vmul.f32 %v1751, %v977
  %v1795 = vmul.f32 %v1752, %v978
  %v1796 = vmul.f32 %v1753, %v979
  %v1797 = vmul.f32 %v1754, %v980
  %v1798 = vmul.f32 %v1755, %v981
  %v1799 = vmul.f32 %v1756, %v982
  %v1800 = vmul.f32 %v1757, %v983
  %v1801 = vmul.f32 %v1758, %v984
  %v1802 = vmul.f32 %v1759, %v985
  %v1803 = vmul.f32 %v1760, %v986
  %v1804 = vmul.f32 %v1761, %v987
  %v1805 = vmul.f32 %v1762, %v988
  %v1806 = vmul.f32 %v1763, %v989
  %v1807 = vmul.f32 %v1764, %v990
  %v1808 = vmul.f32 %v1765, %v991
  %v1809 = vmul.f32 %v1766, %v992
  %v1810 = vmul.f32 %v1767, %v993
  %v1811 = vmul.f32 %v1768, %v994
  %v1812 = vmul.f32 %v1769, %v995
  %v1813 = vadd.f32 %v1770, 1.0
  %v1814 = vadd.f32 %v1771, 1.0
  %v1815 = vadd.f32 %v1772, 1.0
  %v1816 = vadd.f32 %v1773, 1.0
  %v1817 = vadd.f32 %v1774, 1.0
  %v1818 = vadd.f32 %v1775, 1.0
  %v1819 = vadd.f32 %v1776, 1.0
  %v1820 = vadd.f32 %v1777, 1.0
  %v1821 = vadd.f32 %v1778, 1.0
  %v1822 = vadd.f32 %v1779, 1.0
  %v1823 = vadd.f32 %v1780, 1.0
  %v1824 = vadd.f32 %v1781, 1.0
  %v1825 = vadd.f32 %v1782, 1.0
  %v1826 = vadd.f32 %v1783, 1.0
  %v1827 = vadd.f32 %v1784, 1.0
  %v1828 = vadd.f32 %v1785, 1.0
  %v1829 = vadd.f32 %v1786, 1.0
  %v1830 = vadd.f32 %v1787, 1.0
  %v1831 = vadd.f32 %v1788, 1.0
  %v1832 = vadd.f32 %v1789, 1.0
  %v1833 = vadd.f32 %v1790, 1.0
  %v1834 = vadd.f32 %v1791, 1.0
  %v1835 = vadd.f32 %v1792, 1.0
  %v1836 = vadd.f32 %v1793, 1.0
  %v1837 = vadd.f32 %v1794, 1.0
  %v1838 = vadd.f32 %v1795, 1.0
  %v1839 = vadd.f32 %v1796, 1.0
  %v1840 = vadd.f32 %v1797, 1.0
  %v1841 = vadd.f32 %v1798, 1.0
  %v1842 = vadd.f32 %v1799, 1.0
  %v1843 = vadd.f32 %v1800, 1.0
  %v1844 = vadd.f32 %v1801, 1.0
  %v1845 = vadd.f32 %v1802, 1.0
  %v1846 = vadd.f32 %v1803, 1.0
  %v1847 = vadd.f32 %v1804, 1.0
  %v1848 = vadd.f32 %v1805, 1.0
  %v1849 = vadd.f32 %v1806, 1.0
  %v1850 = vadd.f32 %v1807, 1.0
  %v1851 = vadd.f32 %v1808, 1.0
  %v1852 = vadd.f32 %v1809, 1.0
  %v1853 = vadd.f32 %v1810, 1.0
  %v1854 = vadd.f32 %v1811, 1.0
  %v1855 = vadd.f32 %v1812, 1.0
  %v1856 = vmul.f32 %v910, %v1297
  %v1857 = vmul.f32 %v911, %v1298
  %v1858 = vmul.f32 %v912, %v1299
  %v1859 = vmul.f32 %v913, %v1300
  %v1860 = vmul.f32 %v914, %v1301
  %v1861 = vmul.f32 %v915, %v1302
  %v1862 = vmul.f32 %v916, %v1303
  %v1863 = vmul.f32 %v917, %v1304
  %v1864 = vmul.f32 %v918, %v1305
  %v1865 = vmul.f32 %v919, %v1306
  %v1866 = vmul.f32 %v920, %v1307
  %v1867 = vmul.f32 %v921, %v1308
  %v1868 = vmul.f32 %v922, %v1309
  %v1869 = vmul.f32 %v923, %v1310
  %v1870 = vmul.f32 %v924, %v1311
  %v1871 = vmul.f32 %v925, %v1312
  %v1872 = vmul.f32 %v926, %v1313
  %v1873 = vmul.f32 %v927, %v1314
  %v1874 = vmul.f32 %v928, %v1315
  %v1875 = vmul.f32 %v929, %v1316
  %v1876 = vmul.f32 %v930, %v1317
  %v1877 = vmul.f32 %v931, %v1318
  %v1878 = vmul.f32 %v932, %v1319
  %v1879 = vmul.f32 %v933, %v1320
  %v1880 = vmul.f32 %v934, %v1321
  %v1881 = vmul.f32 %v935, %v1322
  %v1882 = vmul.f32 %v936, %v1323
  %v1883 = vmul.f32 %v937, %v1324
  %v1884 = vmul.f32 %v938, %v1325
  %v1885 = vmul.f32 %v939, %v1326
  %v1886 = vmul.f32 %v940, %v1327
  %v1887 = vmul.f32 %v941, %v1328
  %v1888 = vmul.f32 %v942, %v1329
  %v1889 = vmul.f32 %v943, %v1330
  %v1890 = vmul.f32 %v944, %v1331
  %v1891 = vmul.f32 %v945, %v1332
  %v1892 = vmul.f32 %v946, %v1333
  %v1893 = vmul.f32 %v947, %v1334
  %v1894 = vmul.f32 %v948, %v1335
  %v1895 = vmul.f32 %v949, %v1336
  %v1896 = vmul.f32 %v950, %v1337
  %v1897 = vmul.f32 %v951, %v1338
  %v1898 = vmul.f32 %v952, %v1339
  %v1899 = vrcp.pop %v1813
  %v1900 = vrcp.pop %v1814
  %v1901 = vrcp.pop %v1815
  %v1902 = vrcp.pop %v1816
  %v1903 = vrcp.pop %v1817
  %v1904 = vrcp.pop %v1818
  %v1905 = vrcp.pop %v1819
  %v1906 = vrcp.pop %v1820
  %v1907 = vrcp.pop %v1821
  %v1908 = vrcp.pop %v1822
  %v1909 = vrcp.pop %v1823
  %v1910 = vrcp.pop %v1824
  %v1911 = vrcp.pop %v1825
  %v1912 = vrcp.pop %v1826
  %v1913 = vrcp.pop %v1827
  %v1914 = vrcp.pop %v1828
  %v1915 = vrcp.pop %v1829
  %v1916 = vrcp.pop %v1830
  %v1917 = vrcp.pop %v1831
  %v1918 = vrcp.pop %v1832
  %v1919 = vrcp.pop %v1833
  %v1920 = vrcp.pop %v1834
  %v1921 = vrcp.pop %v1835
  %v1922 = vrcp.pop %v1836
  %v1923 = vrcp.pop %v1837
  %v1924 = vrcp.pop %v1838
  %v1925 = vrcp.pop %v1839
  %v1926 = vrcp.pop %v1840
  %v1927 = vrcp.pop %v1841
  %v1928 = vrcp.pop %v1842
  %v1929 = vrcp.pop %v1843
  %v1930 = vrcp.pop %v1844
  %v1931 = vrcp.pop %v1845
  %v1932 = vrcp.pop %v1846
  %v1933 = vrcp.pop %v1847
  %v1934 = vrcp.pop %v1848
  %v1935 = vrcp.pop %v1849
  %v1936 = vrcp.pop %v1850
  %v1937 = vrcp.pop %v1851
  %v1938 = vrcp.pop %v1852
  %v1939 = vrcp.pop %v1853
  %v1940 = vrcp.pop %v1854
  %v1941 = vrcp.pop %v1855
  %v1942 = vmul.f32 %v1856, %v1899
  %v1943 = vmul.f32 %v1857, %v1900
  %v1944 = vmul.f32 %v1858, %v1901
  %v1945 = vmul.f32 %v1859, %v1902
  %v1946 = vmul.f32 %v1860, %v1903
  %v1947 = vmul.f32 %v1861, %v1904
  %v1948 = vmul.f32 %v1862, %v1905
  %v1949 = vmul.f32 %v1863, %v1906
  %v1950 = vmul.f32 %v1864, %v1907
  %v1951 = vmul.f32 %v1865, %v1908
  %v1952 = vmul.f32 %v1866, %v1909
  %v1953 = vmul.f32 %v1867, %v1910
  %v1954 = vmul.f32 %v1868, %v1911
  %v1955 = vmul.f32 %v1869, %v1912
  %v1956 = vmul.f32 %v1870, %v1913
  %v1957 = vmul.f32 %v1871, %v1914
  %v1958 = vmul.f32 %v1872, %v1915
  %v1959 = vmul.f32 %v1873, %v1916
  %v1960 = vmul.f32 %v1874, %v1917
  %v1961 = vmul.f32 %v1875, %v1918
  %v1962 = vmul.f32 %v1876, %v1919
  %v1963 = vmul.f32 %v1877, %v1920
  %v1964 = vmul.f32 %v1878, %v1921
  %v1965 = vmul.f32 %v1879, %v1922
  %v1966 = vmul.f32 %v1880, %v1923
  %v1967 = vmul.f32 %v1881, %v1924
  %v1968 = vmul.f32 %v1882, %v1925
  %v1969 = vmul.f32 %v1883, %v1926
  %v1970 = vmul.f32 %v1884, %v1927
  %v1971 = vmul.f32 %v1885, %v1928
  %v1972 = vmul.f32 %v1886, %v1929
  %v1973 = vmul.f32 %v1887, %v1930
  %v1974 = vmul.f32 %v1888, %v1931
  %v1975 = vmul.f32 %v1889, %v1932
  %v1976 = vmul.f32 %v1890, %v1933
  %v1977 = vmul.f32 %v1891, %v1934
  %v1978 = vmul.f32 %v1892, %v1935
  %v1979 = vmul.f32 %v1893, %v1936
  %v1980 = vmul.f32 %v1894, %v1937
  %v1981 = vmul.f32 %v1895, %v1938
  %v1982 = vmul.f32 %v1896, %v1939
  %v1983 = vmul.f32 %v1897, %v1940
  %v1984 = vmul.f32 %v1898, %v1941
  %v1985 = vmul.f32 %v1942, 0.5
  %v1986 = vmul.f32 %v1943, 0.5
  %v1987 = vmul.f32 %v1944, 0.5
  %v1988 = vmul.f32 %v1945, 0.5
  %v1989 = vmul.f32 %v1946, 0.5
  %v1990 = vmul.f32 %v1947, 0.5
  %v1991 = vmul.f32 %v1948, 0.5
  %v1992 = vmul.f32 %v1949, 0.5
  %v1993 = vmul.f32 %v1950, 0.5
  %v1994 = vmul.f32 %v1951, 0.5
  %v1995 = vmul.f32 %v1952, 0.5
  %v1996 = vmul.f32 %v1953, 0.5
  %v1997 = vmul.f32 %v1954, 0.5
  %v1998 = vmul.f32 %v1955, 0.5
  %v1999 = vmul.f32 %v1956, 0.5
  %v2000 = vmul.f32 %v1957, 0.5
  %v2001 = vmul.f32 %v1958, 0.5
  %v2002 = vmul.f32 %v1959, 0.5
  %v2003 = vmul.f32 %v1960, 0.5
  %v2004 = vmul.f32 %v1961, 0.5
  %v2005 = vmul.f32 %v1962, 0.5
  %v2006 = vmul.f32 %v1963, 0.5
  %v2007 = vmul.f32 %v1964, 0.5
  %v2008 = vmul.f32 %v1965, 0.5
  %v2009 = vmul.f32 %v1966, 0.5
  %v2010 = vmul.f32 %v1967, 0.5
  %v2011 = vmul.f32 %v1968, 0.5
  %v2012 = vmul.f32 %v1969, 0.5
  %v2013 = vmul.f32 %v1970, 0.5
  %v2014 = vmul.f32 %v1971, 0.5
  %v2015 = vmul.f32 %v1972, 0.5
  %v2016 = vmul.f32 %v1973, 0.5
  %v2017 = vmul.f32 %v1974, 0.5
  %v2018 = vmul.f32 %v1975, 0.5
  %v2019 = vmul.f32 %v1976, 0.5
  %v2020 = vmul.f32 %v1977, 0.5
  %v2021 = vmul.f32 %v1978, 0.5
  %v2022 = vmul.f32 %v1979, 0.5
  %v2023 = vmul.f32 %v1980, 0.5
  %v2024 = vmul.f32 %v1981, 0.5
  %v2025 = vmul.f32 %v1982, 0.5
  %v2026 = vmul.f32 %v1983, 0.5
  %v2027 = vmul.f32 %v1984, 0.5
  %v2028 = vsub.f32 0.5, %v1985
  %v2029 = vsub.f32 0.5, %v1986
  %v2030 = vsub.f32 0.5, %v1987
  %v2031 = vsub.f32 0.5, %v1988
  %v2032 = vsub.f32 0.5, %v1989
  %v2033 = vsub.f32 0.5, %v1990
  %v2034 = vsub.f32 0.5, %v1991
  %v2035 = vsub.f32 0.5, %v1992
  %v2036 = vsub.f32 0.5, %v1993
  %v2037 = vsub.f32 0.5, %v1994
  %v2038 = vsub.f32 0.5, %v1995
  %v2039 = vsub.f32 0.5, %v1996
  %v2040 = vsub.f32 0.5, %v1997
  %v2041 = vsub.f32 0.5, %v1998
  %v2042 = vsub.f32 0.5, %v1999
  %v2043 = vsub.f32 0.5, %v2000
  %v2044 = vsub.f32 0.5, %v2001
  %v2045 = vsub.f32 0.5, %v2002
  %v2046 = vsub.f32 0.5, %v2003
  %v2047 = vsub.f32 0.5, %v2004
  %v2048 = vsub.f32 0.5, %v2005
  %v2049 = vsub.f32 0.5, %v2006
  %v2050 = vsub.f32 0.5, %v2007
  %v2051 = vsub.f32 0.5, %v2008
  %v2052 = vsub.f32 0.5, %v2009
  %v2053 = vsub.f32 0.5, %v2010
  %v2054 = vsub.f32 0.5, %v2011
  %v2055 = vsub.f32 0.5, %v2012
  %v2056 = vsub.f32 0.5, %v2013
  %v2057 = vsub.f32 0.5, %v2014
  %v2058 = vsub.f32 0.5, %v2015
  %v2059 = vsub.f32 0.5, %v2016
  %v2060 = vsub.f32 0.5, %v2017
  %v2061 = vsub.f32 0.5, %v2018
  %v2062 = vsub.f32 0.5, %v2019
  %v2063 = vsub.f32 0.5, %v2020
  %v2064 = vsub.f32 0.5, %v2021
  %v2065 = vsub.f32 0.5, %v2022
  %v2066 = vsub.f32 0.5, %v2023
  %v2067 = vsub.f32 0.5, %v2024
  %v2068 = vsub.f32 0.5, %v2025
  %v2069 = vsub.f32 0.5, %v2026
  %v2070 = vsub.f32 0.5, %v2027
  %vm2071 = vcmask 408576
  %2072 = vst.msk [vmem:[%s3] sm:$0xff] %vm2071, %v2028
  %2073 = vst.msk [vmem:[%s3 + $0x8] sm:$0xff] %vm2071, %v2029
  %2074 = vst.msk [vmem:[%s3 + $0x10] sm:$0xff] %vm2071, %v2030
  %2075 = vst.msk [vmem:[%s3 + $0x18] sm:$0xff] %vm2071, %v2031
  %2076 = vst.msk [vmem:[%s3 + $0x20] sm:$0xff] %vm2071, %v2032
  %2077 = vst.msk [vmem:[%s3 + $0x28] sm:$0xff] %vm2071, %v2033
  %2078 = vst.msk [vmem:[%s3 + $0x30] sm:$0xff] %vm2071, %v2034
  %2079 = vst.msk [vmem:[%s3 + $0x38] sm:$0xff] %vm2071, %v2035
  %2080 = vst.msk [vmem:[%s3 + $0x40] sm:$0xff] %vm2071, %v2036
  %2081 = vst.msk [vmem:[%s3 + $0x48] sm:$0xff] %vm2071, %v2037
  %2082 = vst.msk [vmem:[%s3 + $0x50] sm:$0xff] %vm2071, %v2038
  %2083 = vst.msk [vmem:[%s3 + $0x58] sm:$0xff] %vm2071, %v2039
  %2084 = vst.msk [vmem:[%s3 + $0x60] sm:$0xff] %vm2071, %v2040
  %2085 = vst.msk [vmem:[%s3 + $0x68] sm:$0xff] %vm2071, %v2041
  %2086 = vst.msk [vmem:[%s3 + $0x70] sm:$0xff] %vm2071, %v2042
  %2087 = vst.msk [vmem:[%s3 + $0x78] sm:$0xff] %vm2071, %v2043
  %2088 = vst.msk [vmem:[%s3 + $0x80] sm:$0xff] %vm2071, %v2044
  %2089 = vst.msk [vmem:[%s3 + $0x88] sm:$0xff] %vm2071, %v2045
  %2090 = vst.msk [vmem:[%s3 + $0x90] sm:$0xff] %vm2071, %v2046
  %2091 = vst.msk [vmem:[%s3 + $0x98] sm:$0xff] %vm2071, %v2047
  %2092 = vst.msk [vmem:[%s3 + $0xa0] sm:$0xff] %vm2071, %v2048
  %2093 = vst.msk [vmem:[%s3 + $0xa8] sm:$0xff] %vm2071, %v2049
  %2094 = vst.msk [vmem:[%s3 + $0xb0] sm:$0xff] %vm2071, %v2050
  %2095 = vst.msk [vmem:[%s3 + $0xb8] sm:$0xff] %vm2071, %v2051
  %2096 = vst.msk [vmem:[%s3 + $0xc0] sm:$0xff] %vm2071, %v2052
  %2097 = vst.msk [vmem:[%s3 + $0xc8] sm:$0xff] %vm2071, %v2053
  %2098 = vst.msk [vmem:[%s3 + $0xd0] sm:$0xff] %vm2071, %v2054
  %2099 = vst.msk [vmem:[%s3 + $0xd8] sm:$0xff] %vm2071, %v2055
  %2100 = vst.msk [vmem:[%s3 + $0xe0] sm:$0xff] %vm2071, %v2056
  %2101 = vst.msk [vmem:[%s3 + $0xe8] sm:$0xff] %vm2071, %v2057
  %2102 = vst.msk [vmem:[%s3 + $0xf0] sm:$0xff] %vm2071, %v2058
  %2103 = vst.msk [vmem:[%s3 + $0xf8] sm:$0xff] %vm2071, %v2059
  %2104 = vst.msk [vmem:[%s3 + $0x100] sm:$0xff] %vm2071, %v2060
  %2105 = vst.msk [vmem:[%s3 + $0x108] sm:$0xff] %vm2071, %v2061
  %2106 = vst.msk [vmem:[%s3 + $0x110] sm:$0xff] %vm2071, %v2062
  %2107 = vst.msk [vmem:[%s3 + $0x118] sm:$0xff] %vm2071, %v2063
  %2108 = vst.msk [vmem:[%s3 + $0x120] sm:$0xff] %vm2071, %v2064
  %2109 = vst.msk [vmem:[%s3 + $0x128] sm:$0xff] %vm2071, %v2065
  %2110 = vst.msk [vmem:[%s3 + $0x130] sm:$0xff] %vm2071, %v2066
  %2111 = vst.msk [vmem:[%s3 + $0x138] sm:$0xff] %vm2071, %v2067
  %2112 = vst.msk [vmem:[%s3 + $0x140] sm:$0xff] %vm2071, %v2068
  %2113 = vst.msk [vmem:[%s3 + $0x148] sm:$0xff] %vm2071, %v2069
  %vm2114 = vcmask 402432
  %2115 = vst.msk [vmem:[%s3 + $0x150] sm:$0x3] %vm2114, %v2070
  // Predicated region
  $region14: #{digitalnet1_forward.3} parent=0 // pred_check
    _
  $region15: #{digitalnet1_forward.3} parent=0 // pred_check_branch
    %2117 = sbr.rel (0) target = $region17
  $region16: #{digitalnet1_forward.3} parent=0 // pred_region
    _
  $region17: #{digitalnet1_forward.3} parent=0 // pred_fallthru
    _
  // Predicated region
  $region18: #{digitalnet1_forward.3} parent=0 // pred_check
    _
  $region19: #{digitalnet1_forward.3} parent=0 // pred_check_branch
    %2119 = sbr.rel (0) target = $region21
  $region20: #{digitalnet1_forward.3} parent=0 // pred_region
    _
  $region21: #{digitalnet1_forward.3} parent=0 // pred_fallthru
    _

// kernel: digitalnet1_forward.4
$region0: #{digitalnet1_forward.4}
  #allocation0 [shape = 'u32[]', space=smem, size = 0x4, offset = 0x4, fixed_abs, tag = 'smem constant byte address 0x4 - core index']
  #allocation1 [shape = 'u32[144,128]{1,0:T(1,128)}', space=vmem, size = 0x12000, scoped, tag = 'internal scratch']
  %s0 = inlined_call_operand.vmem [shape: f32[72,450], index: 0, kind: input, shape index: {}]
  %s1 = inlined_call_operand.vmem [shape: f32[450,50], index: 1, kind: input, shape index: {}]
  %s2 = inlined_call_operand.vmem [shape: f32[1,50], index: 2, kind: input, shape index: {}]
  %s3 = inlined_call_operand.vmem [shape: f32[72,50], index: 3, kind: output, shape index: {}]
  %s4 = sld [smem:[#allocation0]]
  $region22: #{digitalnet1_forward.4} parent=0
    _
  %s6 = ssub.s32 1, %s4
  %s7 = scalar_select 0, %s6, %s4
  // Predicated region
  $region2: #{digitalnet1_forward.4} parent=0 // pred_check
    _
  $region3: #{digitalnet1_forward.4} parent=0 // pred_check_branch
    %9 = sbr.rel (0) target = $region5
  $region4: #{digitalnet1_forward.4} parent=0 // pred_region
    _
  $region5: #{digitalnet1_forward.4} parent=0 // pred_fallthru
    _
  // Predicated region
  $region6: #{digitalnet1_forward.4} parent=0 // pred_check
    _
  $region7: #{digitalnet1_forward.4} parent=0 // pred_check_branch
    %11 = sbr.rel (0) target = $region9
  $region8: #{digitalnet1_forward.4} parent=0 // pred_region
    _
  $region9: #{digitalnet1_forward.4} parent=0 // pred_fallthru
    _
  // Predicated region
  $region10: #{digitalnet1_forward.4} parent=0 // pred_check
    _
  $region11: #{digitalnet1_forward.4} parent=0 // pred_check_branch
    %13 = sbr.rel (0) target = $region13
  $region12: #{digitalnet1_forward.4} parent=0 // pred_region
    _
  $region13: #{digitalnet1_forward.4} parent=0 // pred_fallthru
    _
  %v14 = vld [vmem:[%s0] sm:$0xff]
  %v15 = vld [vmem:[%s0 + $0x8] sm:$0xff]
  %v16 = vld [vmem:[%s0 + $0x10] sm:$0xff]
  %v17 = vld [vmem:[%s0 + $0x18] sm:$0xff]
  %v18 = vld [vmem:[%s0 + $0x20] sm:$0xff]
  %v19 = vld [vmem:[%s0 + $0x28] sm:$0xff]
  %v20 = vld [vmem:[%s0 + $0x30] sm:$0xff]
  %v21 = vld [vmem:[%s0 + $0x38] sm:$0xff]
  %v22 = vld [vmem:[%s0 + $0x40] sm:$0xff]
  %v23 = vld [vmem:[%s0 + $0x48] sm:$0xff]
  %v24 = vld [vmem:[%s0 + $0x50] sm:$0xff]
  %v25 = vld [vmem:[%s0 + $0x58] sm:$0xff]
  %v26 = vld [vmem:[%s0 + $0x60] sm:$0xff]
  %v27 = vld [vmem:[%s0 + $0x68] sm:$0xff]
  %v28 = vld [vmem:[%s0 + $0x70] sm:$0xff]
  %v29 = vld [vmem:[%s0 + $0x78] sm:$0xff]
  %v30 = vld [vmem:[%s0 + $0x80] sm:$0xff]
  %v31 = vld [vmem:[%s0 + $0x88] sm:$0xff]
  %v32 = vld [vmem:[%s0 + $0x90] sm:$0xff]
  %v33 = vld [vmem:[%s0 + $0x98] sm:$0xff]
  %v34 = vld [vmem:[%s0 + $0xa0] sm:$0xff]
  %v35 = vld [vmem:[%s0 + $0xa8] sm:$0xff]
  %v36 = vld [vmem:[%s0 + $0xb0] sm:$0xff]
  %v37 = vld [vmem:[%s0 + $0xb8] sm:$0xff]
  %v38 = vld [vmem:[%s0 + $0xc0] sm:$0xff]
  %v39 = vld [vmem:[%s0 + $0xc8] sm:$0xff]
  %v40 = vld [vmem:[%s0 + $0xd0] sm:$0xff]
  %v41 = vld [vmem:[%s0 + $0xd8] sm:$0xff]
  %v42 = vld [vmem:[%s0 + $0xe0] sm:$0xff]
  %v43 = vld [vmem:[%s0 + $0xe8] sm:$0xff]
  %v44 = vld [vmem:[%s0 + $0xf0] sm:$0xff]
  %v45 = vld [vmem:[%s0 + $0xf8] sm:$0xff]
  %v46 = vld [vmem:[%s0 + $0x100] sm:$0xff]
  %v47 = vld [vmem:[%s0 + $0x108] sm:$0xff]
  %v48 = vld [vmem:[%s0 + $0x110] sm:$0xff]
  %v49 = vld [vmem:[%s0 + $0x118] sm:$0xff]
  %v50 = vld [vmem:[%s1] sm:$0xff]
  %v51 = vld [vmem:[%s1 + $0x8] sm:$0xff]
  %v52 = vld [vmem:[%s1 + $0x10] sm:$0xff]
  %v53 = vld [vmem:[%s1 + $0x18] sm:$0xff]
  %v54 = vld [vmem:[%s1 + $0x20] sm:$0xff]
  %v55 = vld [vmem:[%s1 + $0x28] sm:$0xff]
  %v56 = vld [vmem:[%s1 + $0x30] sm:$0xff]
  %v57 = vld [vmem:[%s1 + $0x38] sm:$0xff]
  %v58 = vld [vmem:[%s1 + $0x40] sm:$0xff]
  %v59 = vld [vmem:[%s1 + $0x48] sm:$0xff]
  %v60 = vld [vmem:[%s1 + $0x50] sm:$0xff]
  %v61 = vld [vmem:[%s1 + $0x58] sm:$0xff]
  %v62 = vld [vmem:[%s1 + $0x60] sm:$0xff]
  %v63 = vld [vmem:[%s1 + $0x68] sm:$0xff]
  %v64 = vld [vmem:[%s1 + $0x70] sm:$0xff]
  %v65 = vld [vmem:[%s1 + $0x78] sm:$0xff]
  %v66 = vld [vmem:[%s1 + $0x80] sm:$0xff]
  %v67 = vld [vmem:[%s1 + $0x88] sm:$0xff]
  %v68 = vld [vmem:[%s1 + $0x90] sm:$0xff]
  %v69 = vld [vmem:[%s1 + $0x98] sm:$0xff]
  %v70 = vld [vmem:[%s1 + $0xa0] sm:$0xff]
  %v71 = vld [vmem:[%s1 + $0xa8] sm:$0xff]
  %v72 = vld [vmem:[%s1 + $0xb0] sm:$0xff]
  %v73 = vld [vmem:[%s1 + $0xb8] sm:$0xff]
  %v74 = vld [vmem:[%s1 + $0xc0] sm:$0xff]
  %v75 = vld [vmem:[%s1 + $0xc8] sm:$0xff]
  %v76 = vld [vmem:[%s1 + $0xd0] sm:$0xff]
  %v77 = vld [vmem:[%s1 + $0xd8] sm:$0xff]
  %v78 = vld [vmem:[%s1 + $0xe0] sm:$0xff]
  %v79 = vld [vmem:[%s1 + $0xe8] sm:$0xff]
  %v80 = vld [vmem:[%s1 + $0xf0] sm:$0xff]
  %v81 = vld [vmem:[%s1 + $0xf8] sm:$0xff]
  %v82 = vld [vmem:[%s1 + $0x100] sm:$0xff]
  %v83 = vld [vmem:[%s1 + $0x108] sm:$0xff]
  %v84 = vld [vmem:[%s1 + $0x110] sm:$0xff]
  %v85 = vld [vmem:[%s1 + $0x118] sm:$0xff]
  %v86 = vld [vmem:[%s1 + $0x120] sm:$0xff]
  %v87 = vld [vmem:[%s1 + $0x128] sm:$0xff]
  %v88 = vld [vmem:[%s1 + $0x130] sm:$0xff]
  %v89 = vld [vmem:[%s1 + $0x138] sm:$0xff]
  %v90 = vld [vmem:[%s1 + $0x140] sm:$0xff]
  %v91 = vld [vmem:[%s1 + $0x148] sm:$0xff]
  %v92 = vld [vmem:[%s1 + $0x150] sm:$0xff]
  %v93 = vld [vmem:[%s1 + $0x158] sm:$0xff]
  %v94 = vld [vmem:[%s1 + $0x160] sm:$0xff]
  %v95 = vld [vmem:[%s1 + $0x168] sm:$0xff]
  %v96 = vld [vmem:[%s1 + $0x170] sm:$0xff]
  %v97 = vld [vmem:[%s1 + $0x178] sm:$0xff]
  %v98 = vld [vmem:[%s1 + $0x180] sm:$0xff]
  %v99 = vld [vmem:[%s1 + $0x188] sm:$0xff]
  %v100 = vld [vmem:[%s1 + $0x190] sm:$0xff]
  %v101 = vld [vmem:[%s1 + $0x198] sm:$0xff]
  %v102 = vld [vmem:[%s1 + $0x1a0] sm:$0xff]
  %v103 = vld [vmem:[%s1 + $0x1a8] sm:$0xff]
  %v104 = vld [vmem:[%s1 + $0x1b0] sm:$0xff]
  %v105 = vld [vmem:[%s1 + $0x1b8] sm:$0xff]
  %v106 = vld [vmem:[%s1 + $0x1c0] sm:$0x3]
  %v107 = vld [vmem:[%s2] sm:$0x1]
  %v109 = vlaneseq
  %v110 = vshrl.u32 %v109, 7
  %v111 = vsub.s32 0, %v110
  %v112 = vrot.slane %v107, %v111
  %vm114 = vcmask 539648
  %v116 = vsel %vm114, %v17, 0
  %v119 = vsel %vm114, %v21, 0
  %v122 = vsel %vm114, %v25, 0
  %v125 = vsel %vm114, %v29, 0
  %v128 = vsel %vm114, %v33, 0
  %v131 = vsel %vm114, %v37, 0
  %v134 = vsel %vm114, %v41, 0
  %v137 = vsel %vm114, %v45, 0
  %v140 = vsel %vm114, %v49, 0
  %vm142 = vcmask 1041408
  %v144 = vsel %vm142, %v106, 0
  %146 = vmatprep.subr.mxu0 0.0
  %147 = vmatpush1.msra.mxu0 %v50
  %148 = vmatprep.subr.mxu0 0.0
  %149 = vmatpush1.msra.mxu0 %v51
  %150 = vmatprep.subr.mxu0 0.0
  %151 = vmatpush1.msra.mxu0 %v52
  %152 = vmatprep.subr.mxu0 0.0
  %153 = vmatpush1.msra.mxu0 %v53
  %154 = vmatprep.subr.mxu0 0.0
  %155 = vmatpush1.msra.mxu0 %v54
  %156 = vmatprep.subr.mxu0 0.0
  %157 = vmatpush1.msra.mxu0 %v55
  %158 = vmatprep.subr.mxu0 0.0
  %159 = vmatpush1.msra.mxu0 %v56
  %160 = vmatprep.subr.mxu0 0.0
  %161 = vmatpush1.msra.mxu0 %v57
  %162 = vmatprep.subr.mxu0 0.0
  %163 = vmatpush1.msra.mxu0 %v58
  %164 = vmatprep.subr.mxu0 0.0
  %165 = vmatpush1.msra.mxu0 %v59
  %166 = vmatprep.subr.mxu0 0.0
  %167 = vmatpush1.msra.mxu0 %v60
  %168 = vmatprep.subr.mxu0 0.0
  %169 = vmatpush1.msra.mxu0 %v61
  %170 = vmatprep.subr.mxu0 0.0
  %171 = vmatpush1.msra.mxu0 %v62
  %172 = vmatprep.subr.mxu0 0.0
  %173 = vmatpush1.msra.mxu0 %v63
  %174 = vmatprep.subr.mxu0 0.0
  %175 = vmatpush1.msra.mxu0 %v64
  %176 = vmatprep.subr.mxu0 0.0
  %177 = vmatpush1.msra.mxu0 %v65
  %178 = vmatprep.subr.mxu0 0.0
  %179 = vmatpush1.msra.mxu0 %v66
  %180 = vmatprep.subr.mxu0 0.0
  %181 = vmatpush1.msra.mxu0 %v67
  %182 = vmatprep.subr.mxu0 0.0
  %183 = vmatpush1.msra.mxu0 %v68
  %184 = vmatprep.subr.mxu0 0.0
  %185 = vmatpush1.msra.mxu0 %v69
  %186 = vmatprep.subr.mxu0 0.0
  %187 = vmatpush1.msra.mxu0 %v70
  %188 = vmatprep.subr.mxu0 0.0
  %189 = vmatpush1.msra.mxu0 %v71
  %190 = vmatprep.subr.mxu0 0.0
  %191 = vmatpush1.msra.mxu0 %v72
  %192 = vmatprep.subr.mxu0 0.0
  %193 = vmatpush1.msra.mxu0 %v73
  %194 = vmatprep.subr.mxu0 0.0
  %195 = vmatpush1.msra.mxu0 %v74
  %196 = vmatprep.subr.mxu0 0.0
  %197 = vmatpush1.msra.mxu0 %v75
  %198 = vmatprep.subr.mxu0 0.0
  %199 = vmatpush1.msra.mxu0 %v76
  %200 = vmatprep.subr.mxu0 0.0
  %201 = vmatpush1.msra.mxu0 %v77
  %202 = vmatprep.subr.mxu0 0.0
  %203 = vmatpush1.msra.mxu0 %v78
  %204 = vmatprep.subr.mxu0 0.0
  %205 = vmatpush1.msra.mxu0 %v79
  %206 = vmatprep.subr.mxu0 0.0
  %207 = vmatpush1.msra.mxu0 %v80
  %208 = vmatprep.subr.mxu0 0.0
  %209 = vmatpush1.msra.mxu0 %v81
  %210 = vmatprep.mubr.f32.mxu0 %v15
  %211 = vmatmul.mubr.f32.gmra.mrb[0].mxu0 %v14
  %v212 = vpop.f32.mrb[0].mxu0
  %v213 = vadd.f32 %v112, %v212
  %v214 = vpop.f32.mrb[0].mxu0
  %215 = vmatprep.mubr.f32.mxu0 %v19
  %216 = vmatmul.mubr.f32.gmra.mrb[0].mxu0 %v18
  %v217 = vpop.f32.mrb[0].mxu0
  %v218 = vadd.f32 %v112, %v217
  %v219 = vpop.f32.mrb[0].mxu0
  %220 = vmatprep.mubr.f32.mxu0 %v23
  %221 = vmatmul.mubr.f32.gmra.mrb[0].mxu0 %v22
  %v222 = vpop.f32.mrb[0].mxu0
  %v223 = vadd.f32 %v112, %v222
  %v224 = vpop.f32.mrb[0].mxu0
  %225 = vmatprep.mubr.f32.mxu0 %v27
  %226 = vmatmul.mubr.f32.gmra.mrb[0].mxu0 %v26
  %v227 = vpop.f32.mrb[0].mxu0
  %v228 = vadd.f32 %v112, %v227
  %v229 = vpop.f32.mrb[0].mxu0
  %230 = vmatprep.mubr.f32.mxu0 %v31
  %231 = vmatmul.mubr.f32.gmra.mrb[0].mxu0 %v30
  %v232 = vpop.f32.mrb[0].mxu0
  %v233 = vadd.f32 %v112, %v232
  %v234 = vpop.f32.mrb[0].mxu0
  %235 = vmatprep.mubr.f32.mxu0 %v35
  %236 = vmatmul.mubr.f32.gmra.mrb[0].mxu0 %v34
  %v237 = vpop.f32.mrb[0].mxu0
  %v238 = vadd.f32 %v112, %v237
  %v239 = vpop.f32.mrb[0].mxu0
  %240 = vmatprep.mubr.f32.mxu0 %v39
  %241 = vmatmul.mubr.f32.gmra.mrb[0].mxu0 %v38
  %v242 = vpop.f32.mrb[0].mxu0
  %v243 = vadd.f32 %v112, %v242
  %v244 = vpop.f32.mrb[0].mxu0
  %245 = vmatprep.mubr.f32.mxu0 %v43
  %246 = vmatmul.mubr.f32.gmra.mrb[0].mxu0 %v42
  %v247 = vpop.f32.mrb[0].mxu0
  %v248 = vadd.f32 %v112, %v247
  %v249 = vpop.f32.mrb[0].mxu0
  %250 = vmatprep.mubr.f32.mxu0 %v47
  %251 = vmatmul.mubr.f32.gmra.mrb[0].mxu0 %v46
  %v252 = vpop.f32.mrb[0].mxu0
  %v253 = vadd.f32 %v112, %v252
  %v254 = vpop.f32.mrb[0].mxu0
  %255 = vdwg.mxu0
  %256 = vmatprep.subr.mxu0 0.0
  %257 = vmatpush1.msra.mxu0 %v82
  %258 = vmatprep.subr.mxu0 0.0
  %259 = vmatpush1.msra.mxu0 %v83
  %260 = vmatprep.subr.mxu0 0.0
  %261 = vmatpush1.msra.mxu0 %v84
  %262 = vmatprep.subr.mxu0 0.0
  %263 = vmatpush1.msra.mxu0 %v85
  %264 = vmatprep.subr.mxu0 0.0
  %265 = vmatpush1.msra.mxu0 %v86
  %266 = vmatprep.subr.mxu0 0.0
  %267 = vmatpush1.msra.mxu0 %v87
  %268 = vmatprep.subr.mxu0 0.0
  %269 = vmatpush1.msra.mxu0 %v88
  %270 = vmatprep.subr.mxu0 0.0
  %271 = vmatpush1.msra.mxu0 %v89
  %272 = vmatprep.subr.mxu0 0.0
  %273 = vmatpush1.msra.mxu0 %v90
  %274 = vmatprep.subr.mxu0 0.0
  %275 = vmatpush1.msra.mxu0 %v91
  %276 = vmatprep.subr.mxu0 0.0
  %277 = vmatpush1.msra.mxu0 %v92
  %278 = vmatprep.subr.mxu0 0.0
  %279 = vmatpush1.msra.mxu0 %v93
  %280 = vmatprep.subr.mxu0 0.0
  %281 = vmatpush1.msra.mxu0 %v94
  %282 = vmatprep.subr.mxu0 0.0
  %283 = vmatpush1.msra.mxu0 %v95
  %284 = vmatprep.subr.mxu0 0.0
  %285 = vmatpush1.msra.mxu0 %v96
  %286 = vmatprep.subr.mxu0 0.0
  %287 = vmatpush1.msra.mxu0 %v97
  %288 = vmatprep.subr.mxu0 0.0
  %289 = vmatpush1.msra.mxu0 %v98
  %290 = vmatprep.subr.mxu0 0.0
  %291 = vmatpush1.msra.mxu0 %v99
  %292 = vmatprep.subr.mxu0 0.0
  %293 = vmatpush1.msra.mxu0 %v100
  %294 = vmatprep.subr.mxu0 0.0
  %295 = vmatpush1.msra.mxu0 %v101
  %296 = vmatprep.subr.mxu0 0.0
  %297 = vmatpush1.msra.mxu0 %v102
  %298 = vmatprep.subr.mxu0 0.0
  %299 = vmatpush1.msra.mxu0 %v103
  %300 = vmatprep.subr.mxu0 0.0
  %301 = vmatpush1.msra.mxu0 %v104
  %302 = vmatprep.subr.mxu0 0.0
  %303 = vmatpush1.msra.mxu0 %v105
  %304 = vmatprep.subr.mxu0 0.0
  %305 = vmatpush1.msra.mxu0 %v144
  %306 = vmatprep.subr.mxu0 0.0
  %307 = vmatpush1.msra.mxu0 0.0
  %308 = vmatprep.subr.mxu0 0.0
  %309 = vmatpush1.msra.mxu0 0.0
  %310 = vmatprep.subr.mxu0 0.0
  %311 = vmatpush1.msra.mxu0 0.0
  %312 = vmatprep.subr.mxu0 0.0
  %313 = vmatpush1.msra.mxu0 0.0
  %314 = vmatprep.subr.mxu0 0.0
  %315 = vmatpush1.msra.mxu0 0.0
  %316 = vmatprep.subr.mxu0 0.0
  %317 = vmatpush1.msra.mxu0 0.0
  %318 = vmatprep.subr.mxu0 0.0
  %319 = vmatpush1.msra.mxu0 0.0
  %320 = vmatprep.mubr.f32.mxu0 %v116
  %321 = vmatmul.mubr.f32.gmra.mrb[0].mxu0 %v16
  %v322 = vpop.f32.mrb[0].mxu0
  %v323 = vadd.f32 %v213, %v322
  %v324 = vpop.f32.mrb[0].mxu0
  %325 = vmatprep.mubr.f32.mxu0 %v119
  %326 = vmatmul.mubr.f32.gmra.mrb[0].mxu0 %v20
  %v327 = vpop.f32.mrb[0].mxu0
  %v328 = vadd.f32 %v218, %v327
  %v329 = vpop.f32.mrb[0].mxu0
  %330 = vmatprep.mubr.f32.mxu0 %v122
  %331 = vmatmul.mubr.f32.gmra.mrb[0].mxu0 %v24
  %v332 = vpop.f32.mrb[0].mxu0
  %v333 = vadd.f32 %v223, %v332
  %v334 = vpop.f32.mrb[0].mxu0
  %335 = vmatprep.mubr.f32.mxu0 %v125
  %336 = vmatmul.mubr.f32.gmra.mrb[0].mxu0 %v28
  %v337 = vpop.f32.mrb[0].mxu0
  %v338 = vadd.f32 %v228, %v337
  %v339 = vpop.f32.mrb[0].mxu0
  %340 = vmatprep.mubr.f32.mxu0 %v128
  %341 = vmatmul.mubr.f32.gmra.mrb[0].mxu0 %v32
  %v342 = vpop.f32.mrb[0].mxu0
  %v343 = vadd.f32 %v233, %v342
  %v344 = vpop.f32.mrb[0].mxu0
  %345 = vmatprep.mubr.f32.mxu0 %v131
  %346 = vmatmul.mubr.f32.gmra.mrb[0].mxu0 %v36
  %v347 = vpop.f32.mrb[0].mxu0
  %v348 = vadd.f32 %v238, %v347
  %v349 = vpop.f32.mrb[0].mxu0
  %350 = vmatprep.mubr.f32.mxu0 %v134
  %351 = vmatmul.mubr.f32.gmra.mrb[0].mxu0 %v40
  %v352 = vpop.f32.mrb[0].mxu0
  %v353 = vadd.f32 %v243, %v352
  %v354 = vpop.f32.mrb[0].mxu0
  %355 = vmatprep.mubr.f32.mxu0 %v137
  %356 = vmatmul.mubr.f32.gmra.mrb[0].mxu0 %v44
  %v357 = vpop.f32.mrb[0].mxu0
  %v358 = vadd.f32 %v248, %v357
  %v359 = vpop.f32.mrb[0].mxu0
  %360 = vmatprep.mubr.f32.mxu0 %v140
  %361 = vmatmul.mubr.f32.gmra.mrb[0].mxu0 %v48
  %v362 = vpop.f32.mrb[0].mxu0
  %v363 = vadd.f32 %v253, %v362
  %v364 = vpop.f32.mrb[0].mxu0
  %365 = vdwg.mxu0
  %v366 = vmul.f32 %v323, %v323
  %v367 = vmul.f32 %v328, %v328
  %v368 = vmul.f32 %v333, %v333
  %v369 = vmul.f32 %v338, %v338
  %v370 = vmul.f32 %v343, %v343
  %v371 = vmul.f32 %v348, %v348
  %v372 = vmul.f32 %v353, %v353
  %v373 = vmul.f32 %v358, %v358
  %v374 = vmul.f32 %v363, %v363
  %v375 = vmul.f32 %v366, 0.0022222223
  %v376 = vmul.f32 %v367, 0.0022222223
  %v377 = vmul.f32 %v368, 0.0022222223
  %v378 = vmul.f32 %v369, 0.0022222223
  %v379 = vmul.f32 %v370, 0.0022222223
  %v380 = vmul.f32 %v371, 0.0022222223
  %v381 = vmul.f32 %v372, 0.0022222223
  %v382 = vmul.f32 %v373, 0.0022222223
  %v383 = vmul.f32 %v374, 0.0022222223
  %v384 = vsub.f32 %v323, %v375
  %v385 = vsub.f32 %v328, %v376
  %v386 = vsub.f32 %v333, %v377
  %v387 = vsub.f32 %v338, %v378
  %v388 = vsub.f32 %v343, %v379
  %v389 = vsub.f32 %v348, %v380
  %v390 = vsub.f32 %v353, %v381
  %v391 = vsub.f32 %v358, %v382
  %v392 = vsub.f32 %v363, %v383
  %v393 = vadd.f32 %v384, 1e-06
  %v394 = vadd.f32 %v385, 1e-06
  %v395 = vadd.f32 %v386, 1e-06
  %v396 = vadd.f32 %v387, 1e-06
  %v397 = vadd.f32 %v388, 1e-06
  %v398 = vadd.f32 %v389, 1e-06
  %v399 = vadd.f32 %v390, 1e-06
  %v400 = vadd.f32 %v391, 1e-06
  %v401 = vadd.f32 %v392, 1e-06
  %v402 = vmax.f32 %v393, 1e-06
  %v403 = vmax.f32 %v394, 1e-06
  %v404 = vmax.f32 %v395, 1e-06
  %v405 = vmax.f32 %v396, 1e-06
  %v406 = vmax.f32 %v397, 1e-06
  %v407 = vmax.f32 %v398, 1e-06
  %v408 = vmax.f32 %v399, 1e-06
  %v409 = vmax.f32 %v400, 1e-06
  %v410 = vmax.f32 %v401, 1e-06
  %v411 = vsub.f32 224.5, %v323
  %v412 = vsub.f32 224.5, %v328
  %v413 = vsub.f32 224.5, %v333
  %v414 = vsub.f32 224.5, %v338
  %v415 = vsub.f32 224.5, %v343
  %v416 = vsub.f32 224.5, %v348
  %v417 = vsub.f32 224.5, %v353
  %v418 = vsub.f32 224.5, %v358
  %v419 = vsub.f32 224.5, %v363
  %v420 = vmul.f32 %v402, 2.0
  %v421 = vmul.f32 %v403, 2.0
  %v422 = vmul.f32 %v404, 2.0
  %v423 = vmul.f32 %v405, 2.0
  %v424 = vmul.f32 %v406, 2.0
  %v425 = vmul.f32 %v407, 2.0
  %v426 = vmul.f32 %v408, 2.0
  %v427 = vmul.f32 %v409, 2.0
  %v428 = vmul.f32 %v410, 2.0
  %v429 = vrsqrt.pop %v420
  %v430 = vrsqrt.pop %v421
  %v431 = vrsqrt.pop %v422
  %v432 = vrsqrt.pop %v423
  %v433 = vrsqrt.pop %v424
  %v434 = vrsqrt.pop %v425
  %v435 = vrsqrt.pop %v426
  %v436 = vrsqrt.pop %v427
  %v437 = vrsqrt.pop %v428
  %v438 = vmul.f32 %v411, %v429
  %v439 = vmul.f32 %v412, %v430
  %v440 = vmul.f32 %v413, %v431
  %v441 = vmul.f32 %v414, %v432
  %v442 = vmul.f32 %v415, %v433
  %v443 = vmul.f32 %v416, %v434
  %v444 = vmul.f32 %v417, %v435
  %v445 = vmul.f32 %v418, %v436
  %v446 = vmul.f32 %v419, %v437
  %v447 = vmax.f32 %v438, -4.0
  %v448 = vmax.f32 %v439, -4.0
  %v449 = vmax.f32 %v440, -4.0
  %v450 = vmax.f32 %v441, -4.0
  %v451 = vmax.f32 %v442, -4.0
  %v452 = vmax.f32 %v443, -4.0
  %v453 = vmax.f32 %v444, -4.0
  %v454 = vmax.f32 %v445, -4.0
  %v455 = vmax.f32 %v446, -4.0
  %v456 = vmin.f32 %v447, 4.0
  %v457 = vmin.f32 %v448, 4.0
  %v458 = vmin.f32 %v449, 4.0
  %v459 = vmin.f32 %v450, 4.0
  %v460 = vmin.f32 %v451, 4.0
  %v461 = vmin.f32 %v452, 4.0
  %v462 = vmin.f32 %v453, 4.0
  %v463 = vmin.f32 %v454, 4.0
  %v464 = vmin.f32 %v455, 4.0
  %v465 = vmul.f32 %v456, %v456
  %v466 = vmul.f32 %v457, %v457
  %v467 = vmul.f32 %v458, %v458
  %v468 = vmul.f32 %v459, %v459
  %v469 = vmul.f32 %v460, %v460
  %v470 = vmul.f32 %v461, %v461
  %v471 = vmul.f32 %v462, %v462
  %v472 = vmul.f32 %v463, %v463
  %v473 = vmul.f32 %v464, %v464
  %v474 = vmul.f32 %v465, 0.00022905065
  %v475 = vmul.f32 %v466, 0.00022905065
  %v476 = vmul.f32 %v467, 0.00022905065
  %v477 = vmul.f32 %v468, 0.00022905065
  %v478 = vmul.f32 %v469, 0.00022905065
  %v479 = vmul.f32 %v470, 0.00022905065
  %v480 = vmul.f32 %v471, 0.00022905065
  %v481 = vmul.f32 %v472, 0.00022905065
  %v482 = vmul.f32 %v473, 0.00022905065
  %v483 = vadd.f32 %v474, 0.003408291
  %v484 = vadd.f32 %v475, 0.003408291
  %v485 = vadd.f32 %v476, 0.003408291
  %v486 = vadd.f32 %v477, 0.003408291
  %v487 = vadd.f32 %v478, 0.003408291
  %v488 = vadd.f32 %v479, 0.003408291
  %v489 = vadd.f32 %v480, 0.003408291
  %v490 = vadd.f32 %v481, 0.003408291
  %v491 = vadd.f32 %v482, 0.003408291
  %v492 = vmul.f32 %v483, %v465
  %v493 = vmul.f32 %v484, %v466
  %v494 = vmul.f32 %v485, %v467
  %v495 = vmul.f32 %v486, %v468
  %v496 = vmul.f32 %v487, %v469
  %v497 = vmul.f32 %v488, %v470
  %v498 = vmul.f32 %v489, %v471
  %v499 = vmul.f32 %v490, %v472
  %v500 = vmul.f32 %v491, %v473
  %v501 = vadd.f32 %v492, 0.050955694
  %v502 = vadd.f32 %v493, 0.050955694
  %v503 = vadd.f32 %v494, 0.050955694
  %v504 = vadd.f32 %v495, 0.050955694
  %v505 = vadd.f32 %v496, 0.050955694
  %v506 = vadd.f32 %v497, 0.050955694
  %v507 = vadd.f32 %v498, 0.050955694
  %v508 = vadd.f32 %v499, 0.050955694
  %v509 = vadd.f32 %v500, 0.050955694
  %v510 = vmul.f32 %v501, %v465
  %v511 = vmul.f32 %v502, %v466
  %v512 = vmul.f32 %v503, %v467
  %v513 = vmul.f32 %v504, %v468
  %v514 = vmul.f32 %v505, %v469
  %v515 = vmul.f32 %v506, %v470
  %v516 = vmul.f32 %v507, %v471
  %v517 = vmul.f32 %v508, %v472
  %v518 = vmul.f32 %v509, %v473
  %v519 = vadd.f32 %v510, 0.18520832
  %v520 = vadd.f32 %v511, 0.18520832
  %v521 = vadd.f32 %v512, 0.18520832
  %v522 = vadd.f32 %v513, 0.18520832
  %v523 = vadd.f32 %v514, 0.18520832
  %v524 = vadd.f32 %v515, 0.18520832
  %v525 = vadd.f32 %v516, 0.18520832
  %v526 = vadd.f32 %v517, 0.18520832
  %v527 = vadd.f32 %v518, 0.18520832
  %v528 = vmul.f32 %v519, %v465
  %v529 = vmul.f32 %v520, %v466
  %v530 = vmul.f32 %v521, %v467
  %v531 = vmul.f32 %v522, %v468
  %v532 = vmul.f32 %v523, %v469
  %v533 = vmul.f32 %v524, %v470
  %v534 = vmul.f32 %v525, %v471
  %v535 = vmul.f32 %v526, %v472
  %v536 = vmul.f32 %v527, %v473
  %v537 = vadd.f32 %v528, 1.1283791
  %v538 = vadd.f32 %v529, 1.1283791
  %v539 = vadd.f32 %v530, 1.1283791
  %v540 = vadd.f32 %v531, 1.1283791
  %v541 = vadd.f32 %v532, 1.1283791
  %v542 = vadd.f32 %v533, 1.1283791
  %v543 = vadd.f32 %v534, 1.1283791
  %v544 = vadd.f32 %v535, 1.1283791
  %v545 = vadd.f32 %v536, 1.1283791
  %v546 = vmul.f32 %v465, -1.1791603e-07
  %v547 = vmul.f32 %v466, -1.1791603e-07
  %v548 = vmul.f32 %v467, -1.1791603e-07
  %v549 = vmul.f32 %v468, -1.1791603e-07
  %v550 = vmul.f32 %v469, -1.1791603e-07
  %v551 = vmul.f32 %v470, -1.1791603e-07
  %v552 = vmul.f32 %v471, -1.1791603e-07
  %v553 = vmul.f32 %v472, -1.1791603e-07
  %v554 = vmul.f32 %v473, -1.1791603e-07
  %v555 = vadd.f32 %v546, 2.3547966e-05
  %v556 = vadd.f32 %v547, 2.3547966e-05
  %v557 = vadd.f32 %v548, 2.3547966e-05
  %v558 = vadd.f32 %v549, 2.3547966e-05
  %v559 = vadd.f32 %v550, 2.3547966e-05
  %v560 = vadd.f32 %v551, 2.3547966e-05
  %v561 = vadd.f32 %v552, 2.3547966e-05
  %v562 = vadd.f32 %v553, 2.3547966e-05
  %v563 = vadd.f32 %v554, 2.3547966e-05
  %v564 = vmul.f32 %v555, %v465
  %v565 = vmul.f32 %v556, %v466
  %v566 = vmul.f32 %v557, %v467
  %v567 = vmul.f32 %v558, %v468
  %v568 = vmul.f32 %v559, %v469
  %v569 = vmul.f32 %v560, %v470
  %v570 = vmul.f32 %v561, %v471
  %v571 = vmul.f32 %v562, %v472
  %v572 = vmul.f32 %v563, %v473
  %v573 = vadd.f32 %v564, 0.0010179626
  %v574 = vadd.f32 %v565, 0.0010179626
  %v575 = vadd.f32 %v566, 0.0010179626
  %v576 = vadd.f32 %v567, 0.0010179626
  %v577 = vadd.f32 %v568, 0.0010179626
  %v578 = vadd.f32 %v569, 0.0010179626
  %v579 = vadd.f32 %v570, 0.0010179626
  %v580 = vadd.f32 %v571, 0.0010179626
  %v581 = vadd.f32 %v572, 0.0010179626
  %v582 = vmul.f32 %v573, %v465
  %v583 = vmul.f32 %v574, %v466
  %v584 = vmul.f32 %v575, %v467
  %v585 = vmul.f32 %v576, %v468
  %v586 = vmul.f32 %v577, %v469
  %v587 = vmul.f32 %v578, %v470
  %v588 = vmul.f32 %v579, %v471
  %v589 = vmul.f32 %v580, %v472
  %v590 = vmul.f32 %v581, %v473
  %v591 = vadd.f32 %v582, 0.01407047
  %v592 = vadd.f32 %v583, 0.01407047
  %v593 = vadd.f32 %v584, 0.01407047
  %v594 = vadd.f32 %v585, 0.01407047
  %v595 = vadd.f32 %v586, 0.01407047
  %v596 = vadd.f32 %v587, 0.01407047
  %v597 = vadd.f32 %v588, 0.01407047
  %v598 = vadd.f32 %v589, 0.01407047
  %v599 = vadd.f32 %v590, 0.01407047
  %v600 = vmul.f32 %v591, %v465
  %v601 = vmul.f32 %v592, %v466
  %v602 = vmul.f32 %v593, %v467
  %v603 = vmul.f32 %v594, %v468
  %v604 = vmul.f32 %v595, %v469
  %v605 = vmul.f32 %v596, %v470
  %v606 = vmul.f32 %v597, %v471
  %v607 = vmul.f32 %v598, %v472
  %v608 = vmul.f32 %v599, %v473
  %v609 = vadd.f32 %v600, 0.11098505
  %v610 = vadd.f32 %v601, 0.11098505
  %v611 = vadd.f32 %v602, 0.11098505
  %v612 = vadd.f32 %v603, 0.11098505
  %v613 = vadd.f32 %v604, 0.11098505
  %v614 = vadd.f32 %v605, 0.11098505
  %v615 = vadd.f32 %v606, 0.11098505
  %v616 = vadd.f32 %v607, 0.11098505
  %v617 = vadd.f32 %v608, 0.11098505
  %v618 = vmul.f32 %v609, %v465
  %v619 = vmul.f32 %v610, %v466
  %v620 = vmul.f32 %v611, %v467
  %v621 = vmul.f32 %v612, %v468
  %v622 = vmul.f32 %v613, %v469
  %v623 = vmul.f32 %v614, %v470
  %v624 = vmul.f32 %v615, %v471
  %v625 = vmul.f32 %v616, %v472
  %v626 = vmul.f32 %v617, %v473
  %v627 = vadd.f32 %v618, 0.49746925
  %v628 = vadd.f32 %v619, 0.49746925
  %v629 = vadd.f32 %v620, 0.49746925
  %v630 = vadd.f32 %v621, 0.49746925
  %v631 = vadd.f32 %v622, 0.49746925
  %v632 = vadd.f32 %v623, 0.49746925
  %v633 = vadd.f32 %v624, 0.49746925
  %v634 = vadd.f32 %v625, 0.49746925
  %v635 = vadd.f32 %v626, 0.49746925
  %v636 = vmul.f32 %v627, %v465
  %v637 = vmul.f32 %v628, %v466
  %v638 = vmul.f32 %v629, %v467
  %v639 = vmul.f32 %v630, %v468
  %v640 = vmul.f32 %v631, %v469
  %v641 = vmul.f32 %v632, %v470
  %v642 = vmul.f32 %v633, %v471
  %v643 = vmul.f32 %v634, %v472
  %v644 = vmul.f32 %v635, %v473
  %v645 = vadd.f32 %v636, 1.0
  %v646 = vadd.f32 %v637, 1.0
  %v647 = vadd.f32 %v638, 1.0
  %v648 = vadd.f32 %v639, 1.0
  %v649 = vadd.f32 %v640, 1.0
  %v650 = vadd.f32 %v641, 1.0
  %v651 = vadd.f32 %v642, 1.0
  %v652 = vadd.f32 %v643, 1.0
  %v653 = vadd.f32 %v644, 1.0
  %v654 = vmul.f32 %v456, %v537
  %v655 = vmul.f32 %v457, %v538
  %v656 = vmul.f32 %v458, %v539
  %v657 = vmul.f32 %v459, %v540
  %v658 = vmul.f32 %v460, %v541
  %v659 = vmul.f32 %v461, %v542
  %v660 = vmul.f32 %v462, %v543
  %v661 = vmul.f32 %v463, %v544
  %v662 = vmul.f32 %v464, %v545
  %v663 = vrcp.pop %v645
  %v664 = vrcp.pop %v646
  %v665 = vrcp.pop %v647
  %v666 = vrcp.pop %v648
  %v667 = vrcp.pop %v649
  %v668 = vrcp.pop %v650
  %v669 = vrcp.pop %v651
  %v670 = vrcp.pop %v652
  %v671 = vrcp.pop %v653
  %v672 = vmul.f32 %v654, %v663
  %v673 = vmul.f32 %v655, %v664
  %v674 = vmul.f32 %v656, %v665
  %v675 = vmul.f32 %v657, %v666
  %v676 = vmul.f32 %v658, %v667
  %v677 = vmul.f32 %v659, %v668
  %v678 = vmul.f32 %v660, %v669
  %v679 = vmul.f32 %v661, %v670
  %v680 = vmul.f32 %v662, %v671
  %v681 = vmul.f32 %v672, 0.5
  %v682 = vmul.f32 %v673, 0.5
  %v683 = vmul.f32 %v674, 0.5
  %v684 = vmul.f32 %v675, 0.5
  %v685 = vmul.f32 %v676, 0.5
  %v686 = vmul.f32 %v677, 0.5
  %v687 = vmul.f32 %v678, 0.5
  %v688 = vmul.f32 %v679, 0.5
  %v689 = vmul.f32 %v680, 0.5
  %v690 = vsub.f32 0.5, %v681
  %v691 = vsub.f32 0.5, %v682
  %v692 = vsub.f32 0.5, %v683
  %v693 = vsub.f32 0.5, %v684
  %v694 = vsub.f32 0.5, %v685
  %v695 = vsub.f32 0.5, %v686
  %v696 = vsub.f32 0.5, %v687
  %v697 = vsub.f32 0.5, %v688
  %v698 = vsub.f32 0.5, %v689
  %vm699 = vcmask 408576
  %700 = vst.msk [vmem:[%s3] sm:$0xff] %vm699, %v690
  %701 = vst.msk [vmem:[%s3 + $0x8] sm:$0xff] %vm699, %v691
  %702 = vst.msk [vmem:[%s3 + $0x10] sm:$0xff] %vm699, %v692
  %703 = vst.msk [vmem:[%s3 + $0x18] sm:$0xff] %vm699, %v693
  %704 = vst.msk [vmem:[%s3 + $0x20] sm:$0xff] %vm699, %v694
  %705 = vst.msk [vmem:[%s3 + $0x28] sm:$0xff] %vm699, %v695
  %706 = vst.msk [vmem:[%s3 + $0x30] sm:$0xff] %vm699, %v696
  %707 = vst.msk [vmem:[%s3 + $0x38] sm:$0xff] %vm699, %v697
  %708 = vst.msk [vmem:[%s3 + $0x40] sm:$0xff] %vm699, %v698
  // Predicated region
  $region14: #{digitalnet1_forward.4} parent=0 // pred_check
    _
  $region15: #{digitalnet1_forward.4} parent=0 // pred_check_branch
    %710 = sbr.rel (0) target = $region17
  $region16: #{digitalnet1_forward.4} parent=0 // pred_region
    _
  $region17: #{digitalnet1_forward.4} parent=0 // pred_fallthru
    _
  // Predicated region
  $region18: #{digitalnet1_forward.4} parent=0 // pred_check
    _
  $region19: #{digitalnet1_forward.4} parent=0 // pred_check_branch
    %712 = sbr.rel (0) target = $region21
  $region20: #{digitalnet1_forward.4} parent=0 // pred_region
    _
  $region21: #{digitalnet1_forward.4} parent=0 // pred_fallthru
    _

// kernel: digitalnet1_forward.5
$region0: #{digitalnet1_forward.5}
  #allocation0 [shape = 'u32[]', space=smem, size = 0x4, offset = 0x4, fixed_abs, tag = 'smem constant byte address 0x4 - core index']
  #allocation1 [shape = 'u32[144,128]{1,0:T(1,128)}', space=vmem, size = 0x12000, scoped, tag = 'internal scratch']
  %s0 = inlined_call_operand.vmem [shape: f32[2,1800], index: 0, kind: input, shape index: {}]
  %s1 = inlined_call_operand.vmem [shape: f32[1800,500], index: 1, kind: input, shape index: {}]
  %s2 = inlined_call_operand.vmem [shape: f32[1,500], index: 2, kind: input, shape index: {}]
  %s3 = inlined_call_operand.vmem [shape: f32[500,4], index: 3, kind: input, shape index: {}]
  %s4 = inlined_call_operand.vmem [shape: f32[1,4], index: 4, kind: input, shape index: {}]
  %s5 = inlined_call_operand.hbm [shape: f32[2,4], index: 5, kind: output, shape index: {}]
  %s6 = sld [smem:[#allocation0]]
  $region30: #{digitalnet1_forward.5} parent=0
    _
  %s8 = ssub.s32 1, %s6
  %s9 = scalar_select 0, %s8, %s6
  $region1: #{digitalnet1_forward.5} parent=0
    #allocation2 [shape = 'u8[1024]{0}', space=vmem, size = 0x400, scoped, tag = 'output window, operand 0, single buffered']
    #allocation3 [shape = 's32[1]{0}', space=sflag, size = 0x4, scoped, tag = 'scoped memory for digitalnet1_forward.5']
    %10 = vsyncpa [#allocation3], 0
    // Predicated region
    $region2: #{digitalnet1_forward.5} parent=1 // pred_check
      _
    $region3: #{digitalnet1_forward.5} parent=1 // pred_check_branch
      %12 = sbr.rel (0) target = $region5
    $region4: #{digitalnet1_forward.5} parent=1 // pred_region
      _
    $region5: #{digitalnet1_forward.5} parent=1 // pred_fallthru
      _
    // Predicated region
    $region6: #{digitalnet1_forward.5} parent=1 // pred_check
      _
    $region7: #{digitalnet1_forward.5} parent=1 // pred_check_branch
      %14 = sbr.rel (0) target = $region9
    $region8: #{digitalnet1_forward.5} parent=1 // pred_region
      _
    $region9: #{digitalnet1_forward.5} parent=1 // pred_fallthru
      _
    // Predicated region
    $region10: #{digitalnet1_forward.5} parent=1 // pred_check
      _
    $region11: #{digitalnet1_forward.5} parent=1 // pred_check_branch
      %16 = sbr.rel (0) target = $region13
    $region12: #{digitalnet1_forward.5} parent=1 // pred_region
      _
    $region13: #{digitalnet1_forward.5} parent=1 // pred_fallthru
      _
    // Predicated region
    $region14: #{digitalnet1_forward.5} parent=1 // pred_check
      _
    $region15: #{digitalnet1_forward.5} parent=1 // pred_check_branch
      %18 = sbr.rel (0) target = $region17
    $region16: #{digitalnet1_forward.5} parent=1 // pred_region
      _
    $region17: #{digitalnet1_forward.5} parent=1 // pred_fallthru
      _
    // Predicated region
    $region18: #{digitalnet1_forward.5} parent=1 // pred_check
      _
    $region19: #{digitalnet1_forward.5} parent=1 // pred_check_branch
      %20 = sbr.rel (0) target = $region21
    $region20: #{digitalnet1_forward.5} parent=1 // pred_region
      _
    $region21: #{digitalnet1_forward.5} parent=1 // pred_fallthru
      _
    %v21 = vld [vmem:[%s0] sm:$0xff]
    %v22 = vld [vmem:[%s0 + $0x8] sm:$0xff]
    %v23 = vld [vmem:[%s0 + $0x10] sm:$0xff]
    %v24 = vld [vmem:[%s0 + $0x18] sm:$0x3f]
    %v25 = vld [vmem:[%s1] sm:$0xff]
    %v26 = vld [vmem:[%s1 + $0x8] sm:$0xff]
    %v27 = vld [vmem:[%s1 + $0x10] sm:$0xff]
    %v28 = vld [vmem:[%s1 + $0x18] sm:$0xff]
    %v29 = vld [vmem:[%s1 + $0x20] sm:$0xff]
    %v30 = vld [vmem:[%s1 + $0x28] sm:$0xff]
    %v31 = vld [vmem:[%s1 + $0x30] sm:$0xff]
    %v32 = vld [vmem:[%s1 + $0x38] sm:$0xff]
    %v33 = vld [vmem:[%s1 + $0x40] sm:$0xff]
    %v34 = vld [vmem:[%s1 + $0x48] sm:$0xff]
    %v35 = vld [vmem:[%s1 + $0x50] sm:$0xff]
    %v36 = vld [vmem:[%s1 + $0x58] sm:$0xff]
    %v37 = vld [vmem:[%s1 + $0x60] sm:$0xff]
    %v38 = vld [vmem:[%s1 + $0x68] sm:$0xff]
    %v39 = vld [vmem:[%s1 + $0x70] sm:$0xff]
    %v40 = vld [vmem:[%s1 + $0x78] sm:$0xff]
    %v41 = vld [vmem:[%s1 + $0x80] sm:$0xff]
    %v42 = vld [vmem:[%s1 + $0x88] sm:$0xff]
    %v43 = vld [vmem:[%s1 + $0x90] sm:$0xff]
    %v44 = vld [vmem:[%s1 + $0x98] sm:$0xff]
    %v45 = vld [vmem:[%s1 + $0xa0] sm:$0xff]
    %v46 = vld [vmem:[%s1 + $0xa8] sm:$0xff]
    %v47 = vld [vmem:[%s1 + $0xb0] sm:$0xff]
    %v48 = vld [vmem:[%s1 + $0xb8] sm:$0xff]
    %v49 = vld [vmem:[%s1 + $0xc0] sm:$0xff]
    %v50 = vld [vmem:[%s1 + $0xc8] sm:$0xff]
    %v51 = vld [vmem:[%s1 + $0xd0] sm:$0xff]
    %v52 = vld [vmem:[%s1 + $0xd8] sm:$0xff]
    %v53 = vld [vmem:[%s1 + $0xe0] sm:$0xff]
    %v54 = vld [vmem:[%s1 + $0xe8] sm:$0xff]
    %v55 = vld [vmem:[%s1 + $0xf0] sm:$0xff]
    %v56 = vld [vmem:[%s1 + $0xf8] sm:$0xff]
    %v57 = vld [vmem:[%s1 + $0x100] sm:$0xff]
    %v58 = vld [vmem:[%s1 + $0x108] sm:$0xff]
    %v59 = vld [vmem:[%s1 + $0x110] sm:$0xff]
    %v60 = vld [vmem:[%s1 + $0x118] sm:$0xff]
    %v61 = vld [vmem:[%s1 + $0x120] sm:$0xff]
    %v62 = vld [vmem:[%s1 + $0x128] sm:$0xff]
    %v63 = vld [vmem:[%s1 + $0x130] sm:$0xff]
    %v64 = vld [vmem:[%s1 + $0x138] sm:$0xff]
    %v65 = vld [vmem:[%s1 + $0x140] sm:$0xff]
    %v66 = vld [vmem:[%s1 + $0x148] sm:$0xff]
    %v67 = vld [vmem:[%s1 + $0x150] sm:$0xff]
    %v68 = vld [vmem:[%s1 + $0x158] sm:$0xff]
    %v69 = vld [vmem:[%s1 + $0x160] sm:$0xff]
    %v70 = vld [vmem:[%s1 + $0x168] sm:$0xff]
    %v71 = vld [vmem:[%s1 + $0x170] sm:$0xff]
    %v72 = vld [vmem:[%s1 + $0x178] sm:$0xff]
    %v73 = vld [vmem:[%s1 + $0x180] sm:$0xff]
    %v74 = vld [vmem:[%s1 + $0x188] sm:$0xff]
    %v75 = vld [vmem:[%s1 + $0x190] sm:$0xff]
    %v76 = vld [vmem:[%s1 + $0x198] sm:$0xff]
    %v77 = vld [vmem:[%s1 + $0x1a0] sm:$0xff]
    %v78 = vld [vmem:[%s1 + $0x1a8] sm:$0xff]
    %v79 = vld [vmem:[%s1 + $0x1b0] sm:$0xff]
    %v80 = vld [vmem:[%s1 + $0x1b8] sm:$0xff]
    %v81 = vld [vmem:[%s1 + $0x1c0] sm:$0xff]
    %v82 = vld [vmem:[%s1 + $0x1c8] sm:$0xff]
    %v83 = vld [vmem:[%s1 + $0x1d0] sm:$0xff]
    %v84 = vld [vmem:[%s1 + $0x1d8] sm:$0xff]
    %v85 = vld [vmem:[%s1 + $0x1e0] sm:$0xff]
    %v86 = vld [vmem:[%s1 + $0x1e8] sm:$0xff]
    %v87 = vld [vmem:[%s1 + $0x1f0] sm:$0xff]
    %v88 = vld [vmem:[%s1 + $0x1f8] sm:$0xff]
    %v89 = vld [vmem:[%s1 + $0x200] sm:$0xff]
    %v90 = vld [vmem:[%s1 + $0x208] sm:$0xff]
    %v91 = vld [vmem:[%s1 + $0x210] sm:$0xff]
    %v92 = vld [vmem:[%s1 + $0x218] sm:$0xff]
    %v93 = vld [vmem:[%s1 + $0x220] sm:$0xff]
    %v94 = vld [vmem:[%s1 + $0x228] sm:$0xff]
    %v95 = vld [vmem:[%s1 + $0x230] sm:$0xff]
    %v96 = vld [vmem:[%s1 + $0x238] sm:$0xff]
    %v97 = vld [vmem:[%s1 + $0x240] sm:$0xff]
    %v98 = vld [vmem:[%s1 + $0x248] sm:$0xff]
    %v99 = vld [vmem:[%s1 + $0x250] sm:$0xff]
    %v100 = vld [vmem:[%s1 + $0x258] sm:$0xff]
    %v101 = vld [vmem:[%s1 + $0x260] sm:$0xff]
    %v102 = vld [vmem:[%s1 + $0x268] sm:$0xff]
    %v103 = vld [vmem:[%s1 + $0x270] sm:$0xff]
    %v104 = vld [vmem:[%s1 + $0x278] sm:$0xff]
    %v105 = vld [vmem:[%s1 + $0x280] sm:$0xff]
    %v106 = vld [vmem:[%s1 + $0x288] sm:$0xff]
    %v107 = vld [vmem:[%s1 + $0x290] sm:$0xff]
    %v108 = vld [vmem:[%s1 + $0x298] sm:$0xff]
    %v109 = vld [vmem:[%s1 + $0x2a0] sm:$0xff]
    %v110 = vld [vmem:[%s1 + $0x2a8] sm:$0xff]
    %v111 = vld [vmem:[%s1 + $0x2b0] sm:$0xff]
    %v112 = vld [vmem:[%s1 + $0x2b8] sm:$0xff]
    %v113 = vld [vmem:[%s1 + $0x2c0] sm:$0xff]
    %v114 = vld [vmem:[%s1 + $0x2c8] sm:$0xff]
    %v115 = vld [vmem:[%s1 + $0x2d0] sm:$0xff]
    %v116 = vld [vmem:[%s1 + $0x2d8] sm:$0xff]
    %v117 = vld [vmem:[%s1 + $0x2e0] sm:$0xff]
    %v118 = vld [vmem:[%s1 + $0x2e8] sm:$0xff]
    %v119 = vld [vmem:[%s1 + $0x2f0] sm:$0xff]
    %v120 = vld [vmem:[%s1 + $0x2f8] sm:$0xff]
    %v121 = vld [vmem:[%s1 + $0x300] sm:$0xff]
    %v122 = vld [vmem:[%s1 + $0x308] sm:$0xff]
    %v123 = vld [vmem:[%s1 + $0x310] sm:$0xff]
    %v124 = vld [vmem:[%s1 + $0x318] sm:$0xff]
    %v125 = vld [vmem:[%s1 + $0x320] sm:$0xff]
    %v126 = vld [vmem:[%s1 + $0x328] sm:$0xff]
    %v127 = vld [vmem:[%s1 + $0x330] sm:$0xff]
    %v128 = vld [vmem:[%s1 + $0x338] sm:$0xff]
    %v129 = vld [vmem:[%s1 + $0x340] sm:$0xff]
    %v130 = vld [vmem:[%s1 + $0x348] sm:$0xff]
    %v131 = vld [vmem:[%s1 + $0x350] sm:$0xff]
    %v132 = vld [vmem:[%s1 + $0x358] sm:$0xff]
    %v133 = vld [vmem:[%s1 + $0x360] sm:$0xff]
    %v134 = vld [vmem:[%s1 + $0x368] sm:$0xff]
    %v135 = vld [vmem:[%s1 + $0x370] sm:$0xff]
    %v136 = vld [vmem:[%s1 + $0x378] sm:$0xff]
    %v137 = vld [vmem:[%s1 + $0x380] sm:$0xff]
    %v138 = vld [vmem:[%s1 + $0x388] sm:$0xff]
    %v139 = vld [vmem:[%s1 + $0x390] sm:$0xff]
    %v140 = vld [vmem:[%s1 + $0x398] sm:$0xff]
    %v141 = vld [vmem:[%s1 + $0x3a0] sm:$0xff]
    %v142 = vld [vmem:[%s1 + $0x3a8] sm:$0xff]
    %v143 = vld [vmem:[%s1 + $0x3b0] sm:$0xff]
    %v144 = vld [vmem:[%s1 + $0x3b8] sm:$0xff]
    %v145 = vld [vmem:[%s1 + $0x3c0] sm:$0xff]
    %v146 = vld [vmem:[%s1 + $0x3c8] sm:$0xff]
    %v147 = vld [vmem:[%s1 + $0x3d0] sm:$0xff]
    %v148 = vld [vmem:[%s1 + $0x3d8] sm:$0xff]
    %v149 = vld [vmem:[%s1 + $0x3e0] sm:$0xff]
    %v150 = vld [vmem:[%s1 + $0x3e8] sm:$0xff]
    %v151 = vld [vmem:[%s1 + $0x3f0] sm:$0xff]
    %v152 = vld [vmem:[%s1 + $0x3f8] sm:$0xff]
    %v153 = vld [vmem:[%s1 + $0x400] sm:$0xff]
    %v154 = vld [vmem:[%s1 + $0x408] sm:$0xff]
    %v155 = vld [vmem:[%s1 + $0x410] sm:$0xff]
    %v156 = vld [vmem:[%s1 + $0x418] sm:$0xff]
    %v157 = vld [vmem:[%s1 + $0x420] sm:$0xff]
    %v158 = vld [vmem:[%s1 + $0x428] sm:$0xff]
    %v159 = vld [vmem:[%s1 + $0x430] sm:$0xff]
    %v160 = vld [vmem:[%s1 + $0x438] sm:$0xff]
    %v161 = vld [vmem:[%s1 + $0x440] sm:$0xff]
    %v162 = vld [vmem:[%s1 + $0x448] sm:$0xff]
    %v163 = vld [vmem:[%s1 + $0x450] sm:$0xff]
    %v164 = vld [vmem:[%s1 + $0x458] sm:$0xff]
    %v165 = vld [vmem:[%s1 + $0x460] sm:$0xff]
    %v166 = vld [vmem:[%s1 + $0x468] sm:$0xff]
    %v167 = vld [vmem:[%s1 + $0x470] sm:$0xff]
    %v168 = vld [vmem:[%s1 + $0x478] sm:$0xff]
    %v169 = vld [vmem:[%s1 + $0x480] sm:$0xff]
    %v170 = vld [vmem:[%s1 + $0x488] sm:$0xff]
    %v171 = vld [vmem:[%s1 + $0x490] sm:$0xff]
    %v172 = vld [vmem:[%s1 + $0x498] sm:$0xff]
    %v173 = vld [vmem:[%s1 + $0x4a0] sm:$0xff]
    %v174 = vld [vmem:[%s1 + $0x4a8] sm:$0xff]
    %v175 = vld [vmem:[%s1 + $0x4b0] sm:$0xff]
    %v176 = vld [vmem:[%s1 + $0x4b8] sm:$0xff]
    %v177 = vld [vmem:[%s1 + $0x4c0] sm:$0xff]
    %v178 = vld [vmem:[%s1 + $0x4c8] sm:$0xff]
    %v179 = vld [vmem:[%s1 + $0x4d0] sm:$0xff]
    %v180 = vld [vmem:[%s1 + $0x4d8] sm:$0xff]
    %v181 = vld [vmem:[%s1 + $0x4e0] sm:$0xff]
    %v182 = vld [vmem:[%s1 + $0x4e8] sm:$0xff]
    %v183 = vld [vmem:[%s1 + $0x4f0] sm:$0xff]
    %v184 = vld [vmem:[%s1 + $0x4f8] sm:$0xff]
    %v185 = vld [vmem:[%s1 + $0x500] sm:$0xff]
    %v186 = vld [vmem:[%s1 + $0x508] sm:$0xff]
    %v187 = vld [vmem:[%s1 + $0x510] sm:$0xff]
    %v188 = vld [vmem:[%s1 + $0x518] sm:$0xff]
    %v189 = vld [vmem:[%s1 + $0x520] sm:$0xff]
    %v190 = vld [vmem:[%s1 + $0x528] sm:$0xff]
    %v191 = vld [vmem:[%s1 + $0x530] sm:$0xff]
    %v192 = vld [vmem:[%s1 + $0x538] sm:$0xff]
    %v193 = vld [vmem:[%s1 + $0x540] sm:$0xff]
    %v194 = vld [vmem:[%s1 + $0x548] sm:$0xff]
    %v195 = vld [vmem:[%s1 + $0x550] sm:$0xff]
    %v196 = vld [vmem:[%s1 + $0x558] sm:$0xff]
    %v197 = vld [vmem:[%s1 + $0x560] sm:$0xff]
    %v198 = vld [vmem:[%s1 + $0x568] sm:$0xff]
    %v199 = vld [vmem:[%s1 + $0x570] sm:$0xff]
    %v200 = vld [vmem:[%s1 + $0x578] sm:$0xff]
    %v201 = vld [vmem:[%s1 + $0x580] sm:$0xff]
    %v202 = vld [vmem:[%s1 + $0x588] sm:$0xff]
    %v203 = vld [vmem:[%s1 + $0x590] sm:$0xff]
    %v204 = vld [vmem:[%s1 + $0x598] sm:$0xff]
    %v205 = vld [vmem:[%s1 + $0x5a0] sm:$0xff]
    %v206 = vld [vmem:[%s1 + $0x5a8] sm:$0xff]
    %v207 = vld [vmem:[%s1 + $0x5b0] sm:$0xff]
    %v208 = vld [vmem:[%s1 + $0x5b8] sm:$0xff]
    %v209 = vld [vmem:[%s1 + $0x5c0] sm:$0xff]
    %v210 = vld [vmem:[%s1 + $0x5c8] sm:$0xff]
    %v211 = vld [vmem:[%s1 + $0x5d0] sm:$0xff]
    %v212 = vld [vmem:[%s1 + $0x5d8] sm:$0xff]
    %v213 = vld [vmem:[%s1 + $0x5e0] sm:$0xff]
    %v214 = vld [vmem:[%s1 + $0x5e8] sm:$0xff]
    %v215 = vld [vmem:[%s1 + $0x5f0] sm:$0xff]
    %v216 = vld [vmem:[%s1 + $0x5f8] sm:$0xff]
    %v217 = vld [vmem:[%s1 + $0x600] sm:$0xff]
    %v218 = vld [vmem:[%s1 + $0x608] sm:$0xff]
    %v219 = vld [vmem:[%s1 + $0x610] sm:$0xff]
    %v220 = vld [vmem:[%s1 + $0x618] sm:$0xff]
    %v221 = vld [vmem:[%s1 + $0x620] sm:$0xff]
    %v222 = vld [vmem:[%s1 + $0x628] sm:$0xff]
    %v223 = vld [vmem:[%s1 + $0x630] sm:$0xff]
    %v224 = vld [vmem:[%s1 + $0x638] sm:$0xff]
    %v225 = vld [vmem:[%s1 + $0x640] sm:$0xff]
    %v226 = vld [vmem:[%s1 + $0x648] sm:$0xff]
    %v227 = vld [vmem:[%s1 + $0x650] sm:$0xff]
    %v228 = vld [vmem:[%s1 + $0x658] sm:$0xff]
    %v229 = vld [vmem:[%s1 + $0x660] sm:$0xff]
    %v230 = vld [vmem:[%s1 + $0x668] sm:$0xff]
    %v231 = vld [vmem:[%s1 + $0x670] sm:$0xff]
    %v232 = vld [vmem:[%s1 + $0x678] sm:$0xff]
    %v233 = vld [vmem:[%s1 + $0x680] sm:$0xff]
    %v234 = vld [vmem:[%s1 + $0x688] sm:$0xff]
    %v235 = vld [vmem:[%s1 + $0x690] sm:$0xff]
    %v236 = vld [vmem:[%s1 + $0x698] sm:$0xff]
    %v237 = vld [vmem:[%s1 + $0x6a0] sm:$0xff]
    %v238 = vld [vmem:[%s1 + $0x6a8] sm:$0xff]
    %v239 = vld [vmem:[%s1 + $0x6b0] sm:$0xff]
    %v240 = vld [vmem:[%s1 + $0x6b8] sm:$0xff]
    %v241 = vld [vmem:[%s1 + $0x6c0] sm:$0xff]
    %v242 = vld [vmem:[%s1 + $0x6c8] sm:$0xff]
    %v243 = vld [vmem:[%s1 + $0x6d0] sm:$0xff]
    %v244 = vld [vmem:[%s1 + $0x6d8] sm:$0xff]
    %v245 = vld [vmem:[%s1 + $0x6e0] sm:$0xff]
    %v246 = vld [vmem:[%s1 + $0x6e8] sm:$0xff]
    %v247 = vld [vmem:[%s1 + $0x6f0] sm:$0xff]
    %v248 = vld [vmem:[%s1 + $0x6f8] sm:$0xff]
    %v249 = vld [vmem:[%s1 + $0x700] sm:$0xff]
    %v250 = vld [vmem:[%s1 + $0x708] sm:$0xff]
    %v251 = vld [vmem:[%s1 + $0x710] sm:$0xff]
    %v252 = vld [vmem:[%s1 + $0x718] sm:$0xff]
    %v253 = vld [vmem:[%s1 + $0x720] sm:$0xff]
    %v254 = vld [vmem:[%s1 + $0x728] sm:$0xff]
    %v255 = vld [vmem:[%s1 + $0x730] sm:$0xff]
    %v256 = vld [vmem:[%s1 + $0x738] sm:$0xff]
    %v257 = vld [vmem:[%s1 + $0x740] sm:$0xff]
    %v258 = vld [vmem:[%s1 + $0x748] sm:$0xff]
    %v259 = vld [vmem:[%s1 + $0x750] sm:$0xff]
    %v260 = vld [vmem:[%s1 + $0x758] sm:$0xff]
    %v261 = vld [vmem:[%s1 + $0x760] sm:$0xff]
    %v262 = vld [vmem:[%s1 + $0x768] sm:$0xff]
    %v263 = vld [vmem:[%s1 + $0x770] sm:$0xff]
    %v264 = vld [vmem:[%s1 + $0x778] sm:$0xff]
    %v265 = vld [vmem:[%s1 + $0x780] sm:$0xff]
    %v266 = vld [vmem:[%s1 + $0x788] sm:$0xff]
    %v267 = vld [vmem:[%s1 + $0x790] sm:$0xff]
    %v268 = vld [vmem:[%s1 + $0x798] sm:$0xff]
    %v269 = vld [vmem:[%s1 + $0x7a0] sm:$0xff]
    %v270 = vld [vmem:[%s1 + $0x7a8] sm:$0xff]
    %v271 = vld [vmem:[%s1 + $0x7b0] sm:$0xff]
    %v272 = vld [vmem:[%s1 + $0x7b8] sm:$0xff]
    %v273 = vld [vmem:[%s1 + $0x7c0] sm:$0xff]
    %v274 = vld [vmem:[%s1 + $0x7c8] sm:$0xff]
    %v275 = vld [vmem:[%s1 + $0x7d0] sm:$0xff]
    %v276 = vld [vmem:[%s1 + $0x7d8] sm:$0xff]
    %v277 = vld [vmem:[%s1 + $0x7e0] sm:$0xff]
    %v278 = vld [vmem:[%s1 + $0x7e8] sm:$0xff]
    %v279 = vld [vmem:[%s1 + $0x7f0] sm:$0xff]
    %v280 = vld [vmem:[%s1 + $0x7f8] sm:$0xff]
    %v281 = vld [vmem:[%s1 + $0x800] sm:$0xff]
    %v282 = vld [vmem:[%s1 + $0x808] sm:$0xff]
    %v283 = vld [vmem:[%s1 + $0x810] sm:$0xff]
    %v284 = vld [vmem:[%s1 + $0x818] sm:$0xff]
    %v285 = vld [vmem:[%s1 + $0x820] sm:$0xff]
    %v286 = vld [vmem:[%s1 + $0x828] sm:$0xff]
    %v287 = vld [vmem:[%s1 + $0x830] sm:$0xff]
    %v288 = vld [vmem:[%s1 + $0x838] sm:$0xff]
    %v289 = vld [vmem:[%s1 + $0x840] sm:$0xff]
    %v290 = vld [vmem:[%s1 + $0x848] sm:$0xff]
    %v291 = vld [vmem:[%s1 + $0x850] sm:$0xff]
    %v292 = vld [vmem:[%s1 + $0x858] sm:$0xff]
    %v293 = vld [vmem:[%s1 + $0x860] sm:$0xff]
    %v294 = vld [vmem:[%s1 + $0x868] sm:$0xff]
    %v295 = vld [vmem:[%s1 + $0x870] sm:$0xff]
    %v296 = vld [vmem:[%s1 + $0x878] sm:$0xff]
    %v297 = vld [vmem:[%s1 + $0x880] sm:$0xff]
    %v298 = vld [vmem:[%s1 + $0x888] sm:$0xff]
    %v299 = vld [vmem:[%s1 + $0x890] sm:$0xff]
    %v300 = vld [vmem:[%s1 + $0x898] sm:$0xff]
    %v301 = vld [vmem:[%s1 + $0x8a0] sm:$0xff]
    %v302 = vld [vmem:[%s1 + $0x8a8] sm:$0xff]
    %v303 = vld [vmem:[%s1 + $0x8b0] sm:$0xff]
    %v304 = vld [vmem:[%s1 + $0x8b8] sm:$0xff]
    %v305 = vld [vmem:[%s1 + $0x8c0] sm:$0xff]
    %v306 = vld [vmem:[%s1 + $0x8c8] sm:$0xff]
    %v307 = vld [vmem:[%s1 + $0x8d0] sm:$0xff]
    %v308 = vld [vmem:[%s1 + $0x8d8] sm:$0xff]
    %v309 = vld [vmem:[%s1 + $0x8e0] sm:$0xff]
    %v310 = vld [vmem:[%s1 + $0x8e8] sm:$0xff]
    %v311 = vld [vmem:[%s1 + $0x8f0] sm:$0xff]
    %v312 = vld [vmem:[%s1 + $0x8f8] sm:$0xff]
    %v313 = vld [vmem:[%s1 + $0x900] sm:$0xff]
    %v314 = vld [vmem:[%s1 + $0x908] sm:$0xff]
    %v315 = vld [vmem:[%s1 + $0x910] sm:$0xff]
    %v316 = vld [vmem:[%s1 + $0x918] sm:$0xff]
    %v317 = vld [vmem:[%s1 + $0x920] sm:$0xff]
    %v318 = vld [vmem:[%s1 + $0x928] sm:$0xff]
    %v319 = vld [vmem:[%s1 + $0x930] sm:$0xff]
    %v320 = vld [vmem:[%s1 + $0x938] sm:$0xff]
    %v321 = vld [vmem:[%s1 + $0x940] sm:$0xff]
    %v322 = vld [vmem:[%s1 + $0x948] sm:$0xff]
    %v323 = vld [vmem:[%s1 + $0x950] sm:$0xff]
    %v324 = vld [vmem:[%s1 + $0x958] sm:$0xff]
    %v325 = vld [vmem:[%s1 + $0x960] sm:$0xff]
    %v326 = vld [vmem:[%s1 + $0x968] sm:$0xff]
    %v327 = vld [vmem:[%s1 + $0x970] sm:$0xff]
    %v328 = vld [vmem:[%s1 + $0x978] sm:$0xff]
    %v329 = vld [vmem:[%s1 + $0x980] sm:$0xff]
    %v330 = vld [vmem:[%s1 + $0x988] sm:$0xff]
    %v331 = vld [vmem:[%s1 + $0x990] sm:$0xff]
    %v332 = vld [vmem:[%s1 + $0x998] sm:$0xff]
    %v333 = vld [vmem:[%s1 + $0x9a0] sm:$0xff]
    %v334 = vld [vmem:[%s1 + $0x9a8] sm:$0xff]
    %v335 = vld [vmem:[%s1 + $0x9b0] sm:$0xff]
    %v336 = vld [vmem:[%s1 + $0x9b8] sm:$0xff]
    %v337 = vld [vmem:[%s1 + $0x9c0] sm:$0xff]
    %v338 = vld [vmem:[%s1 + $0x9c8] sm:$0xff]
    %v339 = vld [vmem:[%s1 + $0x9d0] sm:$0xff]
    %v340 = vld [vmem:[%s1 + $0x9d8] sm:$0xff]
    %v341 = vld [vmem:[%s1 + $0x9e0] sm:$0xff]
    %v342 = vld [vmem:[%s1 + $0x9e8] sm:$0xff]
    %v343 = vld [vmem:[%s1 + $0x9f0] sm:$0xff]
    %v344 = vld [vmem:[%s1 + $0x9f8] sm:$0xff]
    %v345 = vld [vmem:[%s1 + $0xa00] sm:$0xff]
    %v346 = vld [vmem:[%s1 + $0xa08] sm:$0xff]
    %v347 = vld [vmem:[%s1 + $0xa10] sm:$0xff]
    %v348 = vld [vmem:[%s1 + $0xa18] sm:$0xff]
    %v349 = vld [vmem:[%s1 + $0xa20] sm:$0xff]
    %v350 = vld [vmem:[%s1 + $0xa28] sm:$0xff]
    %v351 = vld [vmem:[%s1 + $0xa30] sm:$0xff]
    %v352 = vld [vmem:[%s1 + $0xa38] sm:$0xff]
    %v353 = vld [vmem:[%s1 + $0xa40] sm:$0xff]
    %v354 = vld [vmem:[%s1 + $0xa48] sm:$0xff]
    %v355 = vld [vmem:[%s1 + $0xa50] sm:$0xff]
    %v356 = vld [vmem:[%s1 + $0xa58] sm:$0xff]
    %v357 = vld [vmem:[%s1 + $0xa60] sm:$0xff]
    %v358 = vld [vmem:[%s1 + $0xa68] sm:$0xff]
    %v359 = vld [vmem:[%s1 + $0xa70] sm:$0xff]
    %v360 = vld [vmem:[%s1 + $0xa78] sm:$0xff]
    %v361 = vld [vmem:[%s1 + $0xa80] sm:$0xff]
    %v362 = vld [vmem:[%s1 + $0xa88] sm:$0xff]
    %v363 = vld [vmem:[%s1 + $0xa90] sm:$0xff]
    %v364 = vld [vmem:[%s1 + $0xa98] sm:$0xff]
    %v365 = vld [vmem:[%s1 + $0xaa0] sm:$0xff]
    %v366 = vld [vmem:[%s1 + $0xaa8] sm:$0xff]
    %v367 = vld [vmem:[%s1 + $0xab0] sm:$0xff]
    %v368 = vld [vmem:[%s1 + $0xab8] sm:$0xff]
    %v369 = vld [vmem:[%s1 + $0xac0] sm:$0xff]
    %v370 = vld [vmem:[%s1 + $0xac8] sm:$0xff]
    %v371 = vld [vmem:[%s1 + $0xad0] sm:$0xff]
    %v372 = vld [vmem:[%s1 + $0xad8] sm:$0xff]
    %v373 = vld [vmem:[%s1 + $0xae0] sm:$0xff]
    %v374 = vld [vmem:[%s1 + $0xae8] sm:$0xff]
    %v375 = vld [vmem:[%s1 + $0xaf0] sm:$0xff]
    %v376 = vld [vmem:[%s1 + $0xaf8] sm:$0xff]
    %v377 = vld [vmem:[%s1 + $0xb00] sm:$0xff]
    %v378 = vld [vmem:[%s1 + $0xb08] sm:$0xff]
    %v379 = vld [vmem:[%s1 + $0xb10] sm:$0xff]
    %v380 = vld [vmem:[%s1 + $0xb18] sm:$0xff]
    %v381 = vld [vmem:[%s1 + $0xb20] sm:$0xff]
    %v382 = vld [vmem:[%s1 + $0xb28] sm:$0xff]
    %v383 = vld [vmem:[%s1 + $0xb30] sm:$0xff]
    %v384 = vld [vmem:[%s1 + $0xb38] sm:$0xff]
    %v385 = vld [vmem:[%s1 + $0xb40] sm:$0xff]
    %v386 = vld [vmem:[%s1 + $0xb48] sm:$0xff]
    %v387 = vld [vmem:[%s1 + $0xb50] sm:$0xff]
    %v388 = vld [vmem:[%s1 + $0xb58] sm:$0xff]
    %v389 = vld [vmem:[%s1 + $0xb60] sm:$0xff]
    %v390 = vld [vmem:[%s1 + $0xb68] sm:$0xff]
    %v391 = vld [vmem:[%s1 + $0xb70] sm:$0xff]
    %v392 = vld [vmem:[%s1 + $0xb78] sm:$0xff]
    %v393 = vld [vmem:[%s1 + $0xb80] sm:$0xff]
    %v394 = vld [vmem:[%s1 + $0xb88] sm:$0xff]
    %v395 = vld [vmem:[%s1 + $0xb90] sm:$0xff]
    %v396 = vld [vmem:[%s1 + $0xb98] sm:$0xff]
    %v397 = vld [vmem:[%s1 + $0xba0] sm:$0xff]
    %v398 = vld [vmem:[%s1 + $0xba8] sm:$0xff]
    %v399 = vld [vmem:[%s1 + $0xbb0] sm:$0xff]
    %v400 = vld [vmem:[%s1 + $0xbb8] sm:$0xff]
    %v401 = vld [vmem:[%s1 + $0xbc0] sm:$0xff]
    %v402 = vld [vmem:[%s1 + $0xbc8] sm:$0xff]
    %v403 = vld [vmem:[%s1 + $0xbd0] sm:$0xff]
    %v404 = vld [vmem:[%s1 + $0xbd8] sm:$0xff]
    %v405 = vld [vmem:[%s1 + $0xbe0] sm:$0xff]
    %v406 = vld [vmem:[%s1 + $0xbe8] sm:$0xff]
    %v407 = vld [vmem:[%s1 + $0xbf0] sm:$0xff]
    %v408 = vld [vmem:[%s1 + $0xbf8] sm:$0xff]
    %v409 = vld [vmem:[%s1 + $0xc00] sm:$0xff]
    %v410 = vld [vmem:[%s1 + $0xc08] sm:$0xff]
    %v411 = vld [vmem:[%s1 + $0xc10] sm:$0xff]
    %v412 = vld [vmem:[%s1 + $0xc18] sm:$0xff]
    %v413 = vld [vmem:[%s1 + $0xc20] sm:$0xff]
    %v414 = vld [vmem:[%s1 + $0xc28] sm:$0xff]
    %v415 = vld [vmem:[%s1 + $0xc30] sm:$0xff]
    %v416 = vld [vmem:[%s1 + $0xc38] sm:$0xff]
    %v417 = vld [vmem:[%s1 + $0xc40] sm:$0xff]
    %v418 = vld [vmem:[%s1 + $0xc48] sm:$0xff]
    %v419 = vld [vmem:[%s1 + $0xc50] sm:$0xff]
    %v420 = vld [vmem:[%s1 + $0xc58] sm:$0xff]
    %v421 = vld [vmem:[%s1 + $0xc60] sm:$0xff]
    %v422 = vld [vmem:[%s1 + $0xc68] sm:$0xff]
    %v423 = vld [vmem:[%s1 + $0xc70] sm:$0xff]
    %v424 = vld [vmem:[%s1 + $0xc78] sm:$0xff]
    %v425 = vld [vmem:[%s1 + $0xc80] sm:$0xff]
    %v426 = vld [vmem:[%s1 + $0xc88] sm:$0xff]
    %v427 = vld [vmem:[%s1 + $0xc90] sm:$0xff]
    %v428 = vld [vmem:[%s1 + $0xc98] sm:$0xff]
    %v429 = vld [vmem:[%s1 + $0xca0] sm:$0xff]
    %v430 = vld [vmem:[%s1 + $0xca8] sm:$0xff]
    %v431 = vld [vmem:[%s1 + $0xcb0] sm:$0xff]
    %v432 = vld [vmem:[%s1 + $0xcb8] sm:$0xff]
    %v433 = vld [vmem:[%s1 + $0xcc0] sm:$0xff]
    %v434 = vld [vmem:[%s1 + $0xcc8] sm:$0xff]
    %v435 = vld [vmem:[%s1 + $0xcd0] sm:$0xff]
    %v436 = vld [vmem:[%s1 + $0xcd8] sm:$0xff]
    %v437 = vld [vmem:[%s1 + $0xce0] sm:$0xff]
    %v438 = vld [vmem:[%s1 + $0xce8] sm:$0xff]
    %v439 = vld [vmem:[%s1 + $0xcf0] sm:$0xff]
    %v440 = vld [vmem:[%s1 + $0xcf8] sm:$0xff]
    %v441 = vld [vmem:[%s1 + $0xd00] sm:$0xff]
    %v442 = vld [vmem:[%s1 + $0xd08] sm:$0xff]
    %v443 = vld [vmem:[%s1 + $0xd10] sm:$0xff]
    %v444 = vld [vmem:[%s1 + $0xd18] sm:$0xff]
    %v445 = vld [vmem:[%s1 + $0xd20] sm:$0xff]
    %v446 = vld [vmem:[%s1 + $0xd28] sm:$0xff]
    %v447 = vld [vmem:[%s1 + $0xd30] sm:$0xff]
    %v448 = vld [vmem:[%s1 + $0xd38] sm:$0xff]
    %v449 = vld [vmem:[%s1 + $0xd40] sm:$0xff]
    %v450 = vld [vmem:[%s1 + $0xd48] sm:$0xff]
    %v451 = vld [vmem:[%s1 + $0xd50] sm:$0xff]
    %v452 = vld [vmem:[%s1 + $0xd58] sm:$0xff]
    %v453 = vld [vmem:[%s1 + $0xd60] sm:$0xff]
    %v454 = vld [vmem:[%s1 + $0xd68] sm:$0xff]
    %v455 = vld [vmem:[%s1 + $0xd70] sm:$0xff]
    %v456 = vld [vmem:[%s1 + $0xd78] sm:$0xff]
    %v457 = vld [vmem:[%s1 + $0xd80] sm:$0xff]
    %v458 = vld [vmem:[%s1 + $0xd88] sm:$0xff]
    %v459 = vld [vmem:[%s1 + $0xd90] sm:$0xff]
    %v460 = vld [vmem:[%s1 + $0xd98] sm:$0xff]
    %v461 = vld [vmem:[%s1 + $0xda0] sm:$0xff]
    %v462 = vld [vmem:[%s1 + $0xda8] sm:$0xff]
    %v463 = vld [vmem:[%s1 + $0xdb0] sm:$0xff]
    %v464 = vld [vmem:[%s1 + $0xdb8] sm:$0xff]
    %v465 = vld [vmem:[%s1 + $0xdc0] sm:$0xff]
    %v466 = vld [vmem:[%s1 + $0xdc8] sm:$0xff]
    %v467 = vld [vmem:[%s1 + $0xdd0] sm:$0xff]
    %v468 = vld [vmem:[%s1 + $0xdd8] sm:$0xff]
    %v469 = vld [vmem:[%s1 + $0xde0] sm:$0xff]
    %v470 = vld [vmem:[%s1 + $0xde8] sm:$0xff]
    %v471 = vld [vmem:[%s1 + $0xdf0] sm:$0xff]
    %v472 = vld [vmem:[%s1 + $0xdf8] sm:$0xff]
    %v473 = vld [vmem:[%s1 + $0xe00] sm:$0xff]
    %v474 = vld [vmem:[%s1 + $0xe08] sm:$0xff]
    %v475 = vld [vmem:[%s1 + $0xe10] sm:$0xff]
    %v476 = vld [vmem:[%s1 + $0xe18] sm:$0xff]
    %v477 = vld [vmem:[%s1 + $0xe20] sm:$0xff]
    %v478 = vld [vmem:[%s1 + $0xe28] sm:$0xff]
    %v479 = vld [vmem:[%s1 + $0xe30] sm:$0xff]
    %v480 = vld [vmem:[%s1 + $0xe38] sm:$0xff]
    %v481 = vld [vmem:[%s1 + $0xe40] sm:$0xff]
    %v482 = vld [vmem:[%s1 + $0xe48] sm:$0xff]
    %v483 = vld [vmem:[%s1 + $0xe50] sm:$0xff]
    %v484 = vld [vmem:[%s1 + $0xe58] sm:$0xff]
    %v485 = vld [vmem:[%s1 + $0xe60] sm:$0xff]
    %v486 = vld [vmem:[%s1 + $0xe68] sm:$0xff]
    %v487 = vld [vmem:[%s1 + $0xe70] sm:$0xff]
    %v488 = vld [vmem:[%s1 + $0xe78] sm:$0xff]
    %v489 = vld [vmem:[%s1 + $0xe80] sm:$0xff]
    %v490 = vld [vmem:[%s1 + $0xe88] sm:$0xff]
    %v491 = vld [vmem:[%s1 + $0xe90] sm:$0xff]
    %v492 = vld [vmem:[%s1 + $0xe98] sm:$0xff]
    %v493 = vld [vmem:[%s1 + $0xea0] sm:$0xff]
    %v494 = vld [vmem:[%s1 + $0xea8] sm:$0xff]
    %v495 = vld [vmem:[%s1 + $0xeb0] sm:$0xff]
    %v496 = vld [vmem:[%s1 + $0xeb8] sm:$0xff]
    %v497 = vld [vmem:[%s1 + $0xec0] sm:$0xff]
    %v498 = vld [vmem:[%s1 + $0xec8] sm:$0xff]
    %v499 = vld [vmem:[%s1 + $0xed0] sm:$0xff]
    %v500 = vld [vmem:[%s1 + $0xed8] sm:$0xff]
    %v501 = vld [vmem:[%s1 + $0xee0] sm:$0xff]
    %v502 = vld [vmem:[%s1 + $0xee8] sm:$0xff]
    %v503 = vld [vmem:[%s1 + $0xef0] sm:$0xff]
    %v504 = vld [vmem:[%s1 + $0xef8] sm:$0xff]
    %v505 = vld [vmem:[%s1 + $0xf00] sm:$0xff]
    %v506 = vld [vmem:[%s1 + $0xf08] sm:$0xff]
    %v507 = vld [vmem:[%s1 + $0xf10] sm:$0xff]
    %v508 = vld [vmem:[%s1 + $0xf18] sm:$0xff]
    %v509 = vld [vmem:[%s1 + $0xf20] sm:$0xff]
    %v510 = vld [vmem:[%s1 + $0xf28] sm:$0xff]
    %v511 = vld [vmem:[%s1 + $0xf30] sm:$0xff]
    %v512 = vld [vmem:[%s1 + $0xf38] sm:$0xff]
    %v513 = vld [vmem:[%s1 + $0xf40] sm:$0xff]
    %v514 = vld [vmem:[%s1 + $0xf48] sm:$0xff]
    %v515 = vld [vmem:[%s1 + $0xf50] sm:$0xff]
    %v516 = vld [vmem:[%s1 + $0xf58] sm:$0xff]
    %v517 = vld [vmem:[%s1 + $0xf60] sm:$0xff]
    %v518 = vld [vmem:[%s1 + $0xf68] sm:$0xff]
    %v519 = vld [vmem:[%s1 + $0xf70] sm:$0xff]
    %v520 = vld [vmem:[%s1 + $0xf78] sm:$0xff]
    %v521 = vld [vmem:[%s1 + $0xf80] sm:$0xff]
    %v522 = vld [vmem:[%s1 + $0xf88] sm:$0xff]
    %v523 = vld [vmem:[%s1 + $0xf90] sm:$0xff]
    %v524 = vld [vmem:[%s1 + $0xf98] sm:$0xff]
    %v525 = vld [vmem:[%s1 + $0xfa0] sm:$0xff]
    %v526 = vld [vmem:[%s1 + $0xfa8] sm:$0xff]
    %v527 = vld [vmem:[%s1 + $0xfb0] sm:$0xff]
    %v528 = vld [vmem:[%s1 + $0xfb8] sm:$0xff]
    %v529 = vld [vmem:[%s1 + $0xfc0] sm:$0xff]
    %v530 = vld [vmem:[%s1 + $0xfc8] sm:$0xff]
    %v531 = vld [vmem:[%s1 + $0xfd0] sm:$0xff]
    %v532 = vld [vmem:[%s1 + $0xfd8] sm:$0xff]
    %v533 = vld [vmem:[%s1 + $0xfe0] sm:$0xff]
    %v534 = vld [vmem:[%s1 + $0xfe8] sm:$0xff]
    %v535 = vld [vmem:[%s1 + $0xff0] sm:$0xff]
    %v536 = vld [vmem:[%s1 + $0xff8] sm:$0xff]
    %v537 = vld [vmem:[%s1 + $0x1000] sm:$0xff]
    %v538 = vld [vmem:[%s1 + $0x1008] sm:$0xff]
    %v539 = vld [vmem:[%s1 + $0x1010] sm:$0xff]
    %v540 = vld [vmem:[%s1 + $0x1018] sm:$0xff]
    %v541 = vld [vmem:[%s1 + $0x1020] sm:$0xff]
    %v542 = vld [vmem:[%s1 + $0x1028] sm:$0xff]
    %v543 = vld [vmem:[%s1 + $0x1030] sm:$0xff]
    %v544 = vld [vmem:[%s1 + $0x1038] sm:$0xff]
    %v545 = vld [vmem:[%s1 + $0x1040] sm:$0xff]
    %v546 = vld [vmem:[%s1 + $0x1048] sm:$0xff]
    %v547 = vld [vmem:[%s1 + $0x1050] sm:$0xff]
    %v548 = vld [vmem:[%s1 + $0x1058] sm:$0xff]
    %v549 = vld [vmem:[%s1 + $0x1060] sm:$0xff]
    %v550 = vld [vmem:[%s1 + $0x1068] sm:$0xff]
    %v551 = vld [vmem:[%s1 + $0x1070] sm:$0xff]
    %v552 = vld [vmem:[%s1 + $0x1078] sm:$0xff]
    %v553 = vld [vmem:[%s1 + $0x1080] sm:$0xff]
    %v554 = vld [vmem:[%s1 + $0x1088] sm:$0xff]
    %v555 = vld [vmem:[%s1 + $0x1090] sm:$0xff]
    %v556 = vld [vmem:[%s1 + $0x1098] sm:$0xff]
    %v557 = vld [vmem:[%s1 + $0x10a0] sm:$0xff]
    %v558 = vld [vmem:[%s1 + $0x10a8] sm:$0xff]
    %v559 = vld [vmem:[%s1 + $0x10b0] sm:$0xff]
    %v560 = vld [vmem:[%s1 + $0x10b8] sm:$0xff]
    %v561 = vld [vmem:[%s1 + $0x10c0] sm:$0xff]
    %v562 = vld [vmem:[%s1 + $0x10c8] sm:$0xff]
    %v563 = vld [vmem:[%s1 + $0x10d0] sm:$0xff]
    %v564 = vld [vmem:[%s1 + $0x10d8] sm:$0xff]
    %v565 = vld [vmem:[%s1 + $0x10e0] sm:$0xff]
    %v566 = vld [vmem:[%s1 + $0x10e8] sm:$0xff]
    %v567 = vld [vmem:[%s1 + $0x10f0] sm:$0xff]
    %v568 = vld [vmem:[%s1 + $0x10f8] sm:$0xff]
    %v569 = vld [vmem:[%s1 + $0x1100] sm:$0xff]
    %v570 = vld [vmem:[%s1 + $0x1108] sm:$0xff]
    %v571 = vld [vmem:[%s1 + $0x1110] sm:$0xff]
    %v572 = vld [vmem:[%s1 + $0x1118] sm:$0xff]
    %v573 = vld [vmem:[%s1 + $0x1120] sm:$0xff]
    %v574 = vld [vmem:[%s1 + $0x1128] sm:$0xff]
    %v575 = vld [vmem:[%s1 + $0x1130] sm:$0xff]
    %v576 = vld [vmem:[%s1 + $0x1138] sm:$0xff]
    %v577 = vld [vmem:[%s1 + $0x1140] sm:$0xff]
    %v578 = vld [vmem:[%s1 + $0x1148] sm:$0xff]
    %v579 = vld [vmem:[%s1 + $0x1150] sm:$0xff]
    %v580 = vld [vmem:[%s1 + $0x1158] sm:$0xff]
    %v581 = vld [vmem:[%s1 + $0x1160] sm:$0xff]
    %v582 = vld [vmem:[%s1 + $0x1168] sm:$0xff]
    %v583 = vld [vmem:[%s1 + $0x1170] sm:$0xff]
    %v584 = vld [vmem:[%s1 + $0x1178] sm:$0xff]
    %v585 = vld [vmem:[%s1 + $0x1180] sm:$0xff]
    %v586 = vld [vmem:[%s1 + $0x1188] sm:$0xff]
    %v587 = vld [vmem:[%s1 + $0x1190] sm:$0xff]
    %v588 = vld [vmem:[%s1 + $0x1198] sm:$0xff]
    %v589 = vld [vmem:[%s1 + $0x11a0] sm:$0xff]
    %v590 = vld [vmem:[%s1 + $0x11a8] sm:$0xff]
    %v591 = vld [vmem:[%s1 + $0x11b0] sm:$0xff]
    %v592 = vld [vmem:[%s1 + $0x11b8] sm:$0xff]
    %v593 = vld [vmem:[%s1 + $0x11c0] sm:$0xff]
    %v594 = vld [vmem:[%s1 + $0x11c8] sm:$0xff]
    %v595 = vld [vmem:[%s1 + $0x11d0] sm:$0xff]
    %v596 = vld [vmem:[%s1 + $0x11d8] sm:$0xff]
    %v597 = vld [vmem:[%s1 + $0x11e0] sm:$0xff]
    %v598 = vld [vmem:[%s1 + $0x11e8] sm:$0xff]
    %v599 = vld [vmem:[%s1 + $0x11f0] sm:$0xff]
    %v600 = vld [vmem:[%s1 + $0x11f8] sm:$0xff]
    %v601 = vld [vmem:[%s1 + $0x1200] sm:$0xff]
    %v602 = vld [vmem:[%s1 + $0x1208] sm:$0xff]
    %v603 = vld [vmem:[%s1 + $0x1210] sm:$0xff]
    %v604 = vld [vmem:[%s1 + $0x1218] sm:$0xff]
    %v605 = vld [vmem:[%s1 + $0x1220] sm:$0xff]
    %v606 = vld [vmem:[%s1 + $0x1228] sm:$0xff]
    %v607 = vld [vmem:[%s1 + $0x1230] sm:$0xff]
    %v608 = vld [vmem:[%s1 + $0x1238] sm:$0xff]
    %v609 = vld [vmem:[%s1 + $0x1240] sm:$0xff]
    %v610 = vld [vmem:[%s1 + $0x1248] sm:$0xff]
    %v611 = vld [vmem:[%s1 + $0x1250] sm:$0xff]
    %v612 = vld [vmem:[%s1 + $0x1258] sm:$0xff]
    %v613 = vld [vmem:[%s1 + $0x1260] sm:$0xff]
    %v614 = vld [vmem:[%s1 + $0x1268] sm:$0xff]
    %v615 = vld [vmem:[%s1 + $0x1270] sm:$0xff]
    %v616 = vld [vmem:[%s1 + $0x1278] sm:$0xff]
    %v617 = vld [vmem:[%s1 + $0x1280] sm:$0xff]
    %v618 = vld [vmem:[%s1 + $0x1288] sm:$0xff]
    %v619 = vld [vmem:[%s1 + $0x1290] sm:$0xff]
    %v620 = vld [vmem:[%s1 + $0x1298] sm:$0xff]
    %v621 = vld [vmem:[%s1 + $0x12a0] sm:$0xff]
    %v622 = vld [vmem:[%s1 + $0x12a8] sm:$0xff]
    %v623 = vld [vmem:[%s1 + $0x12b0] sm:$0xff]
    %v624 = vld [vmem:[%s1 + $0x12b8] sm:$0xff]
    %v625 = vld [vmem:[%s1 + $0x12c0] sm:$0xff]
    %v626 = vld [vmem:[%s1 + $0x12c8] sm:$0xff]
    %v627 = vld [vmem:[%s1 + $0x12d0] sm:$0xff]
    %v628 = vld [vmem:[%s1 + $0x12d8] sm:$0xff]
    %v629 = vld [vmem:[%s1 + $0x12e0] sm:$0xff]
    %v630 = vld [vmem:[%s1 + $0x12e8] sm:$0xff]
    %v631 = vld [vmem:[%s1 + $0x12f0] sm:$0xff]
    %v632 = vld [vmem:[%s1 + $0x12f8] sm:$0xff]
    %v633 = vld [vmem:[%s1 + $0x1300] sm:$0xff]
    %v634 = vld [vmem:[%s1 + $0x1308] sm:$0xff]
    %v635 = vld [vmem:[%s1 + $0x1310] sm:$0xff]
    %v636 = vld [vmem:[%s1 + $0x1318] sm:$0xff]
    %v637 = vld [vmem:[%s1 + $0x1320] sm:$0xff]
    %v638 = vld [vmem:[%s1 + $0x1328] sm:$0xff]
    %v639 = vld [vmem:[%s1 + $0x1330] sm:$0xff]
    %v640 = vld [vmem:[%s1 + $0x1338] sm:$0xff]
    %v641 = vld [vmem:[%s1 + $0x1340] sm:$0xff]
    %v642 = vld [vmem:[%s1 + $0x1348] sm:$0xff]
    %v643 = vld [vmem:[%s1 + $0x1350] sm:$0xff]
    %v644 = vld [vmem:[%s1 + $0x1358] sm:$0xff]
    %v645 = vld [vmem:[%s1 + $0x1360] sm:$0xff]
    %v646 = vld [vmem:[%s1 + $0x1368] sm:$0xff]
    %v647 = vld [vmem:[%s1 + $0x1370] sm:$0xff]
    %v648 = vld [vmem:[%s1 + $0x1378] sm:$0xff]
    %v649 = vld [vmem:[%s1 + $0x1380] sm:$0xff]
    %v650 = vld [vmem:[%s1 + $0x1388] sm:$0xff]
    %v651 = vld [vmem:[%s1 + $0x1390] sm:$0xff]
    %v652 = vld [vmem:[%s1 + $0x1398] sm:$0xff]
    %v653 = vld [vmem:[%s1 + $0x13a0] sm:$0xff]
    %v654 = vld [vmem:[%s1 + $0x13a8] sm:$0xff]
    %v655 = vld [vmem:[%s1 + $0x13b0] sm:$0xff]
    %v656 = vld [vmem:[%s1 + $0x13b8] sm:$0xff]
    %v657 = vld [vmem:[%s1 + $0x13c0] sm:$0xff]
    %v658 = vld [vmem:[%s1 + $0x13c8] sm:$0xff]
    %v659 = vld [vmem:[%s1 + $0x13d0] sm:$0xff]
    %v660 = vld [vmem:[%s1 + $0x13d8] sm:$0xff]
    %v661 = vld [vmem:[%s1 + $0x13e0] sm:$0xff]
    %v662 = vld [vmem:[%s1 + $0x13e8] sm:$0xff]
    %v663 = vld [vmem:[%s1 + $0x13f0] sm:$0xff]
    %v664 = vld [vmem:[%s1 + $0x13f8] sm:$0xff]
    %v665 = vld [vmem:[%s1 + $0x1400] sm:$0xff]
    %v666 = vld [vmem:[%s1 + $0x1408] sm:$0xff]
    %v667 = vld [vmem:[%s1 + $0x1410] sm:$0xff]
    %v668 = vld [vmem:[%s1 + $0x1418] sm:$0xff]
    %v669 = vld [vmem:[%s1 + $0x1420] sm:$0xff]
    %v670 = vld [vmem:[%s1 + $0x1428] sm:$0xff]
    %v671 = vld [vmem:[%s1 + $0x1430] sm:$0xff]
    %v672 = vld [vmem:[%s1 + $0x1438] sm:$0xff]
    %v673 = vld [vmem:[%s1 + $0x1440] sm:$0xff]
    %v674 = vld [vmem:[%s1 + $0x1448] sm:$0xff]
    %v675 = vld [vmem:[%s1 + $0x1450] sm:$0xff]
    %v676 = vld [vmem:[%s1 + $0x1458] sm:$0xff]
    %v677 = vld [vmem:[%s1 + $0x1460] sm:$0xff]
    %v678 = vld [vmem:[%s1 + $0x1468] sm:$0xff]
    %v679 = vld [vmem:[%s1 + $0x1470] sm:$0xff]
    %v680 = vld [vmem:[%s1 + $0x1478] sm:$0xff]
    %v681 = vld [vmem:[%s1 + $0x1480] sm:$0xff]
    %v682 = vld [vmem:[%s1 + $0x1488] sm:$0xff]
    %v683 = vld [vmem:[%s1 + $0x1490] sm:$0xff]
    %v684 = vld [vmem:[%s1 + $0x1498] sm:$0xff]
    %v685 = vld [vmem:[%s1 + $0x14a0] sm:$0xff]
    %v686 = vld [vmem:[%s1 + $0x14a8] sm:$0xff]
    %v687 = vld [vmem:[%s1 + $0x14b0] sm:$0xff]
    %v688 = vld [vmem:[%s1 + $0x14b8] sm:$0xff]
    %v689 = vld [vmem:[%s1 + $0x14c0] sm:$0xff]
    %v690 = vld [vmem:[%s1 + $0x14c8] sm:$0xff]
    %v691 = vld [vmem:[%s1 + $0x14d0] sm:$0xff]
    %v692 = vld [vmem:[%s1 + $0x14d8] sm:$0xff]
    %v693 = vld [vmem:[%s1 + $0x14e0] sm:$0xff]
    %v694 = vld [vmem:[%s1 + $0x14e8] sm:$0xff]
    %v695 = vld [vmem:[%s1 + $0x14f0] sm:$0xff]
    %v696 = vld [vmem:[%s1 + $0x14f8] sm:$0xff]
    %v697 = vld [vmem:[%s1 + $0x1500] sm:$0xff]
    %v698 = vld [vmem:[%s1 + $0x1508] sm:$0xff]
    %v699 = vld [vmem:[%s1 + $0x1510] sm:$0xff]
    %v700 = vld [vmem:[%s1 + $0x1518] sm:$0xff]
    %v701 = vld [vmem:[%s1 + $0x1520] sm:$0xff]
    %v702 = vld [vmem:[%s1 + $0x1528] sm:$0xff]
    %v703 = vld [vmem:[%s1 + $0x1530] sm:$0xff]
    %v704 = vld [vmem:[%s1 + $0x1538] sm:$0xff]
    %v705 = vld [vmem:[%s1 + $0x1540] sm:$0xff]
    %v706 = vld [vmem:[%s1 + $0x1548] sm:$0xff]
    %v707 = vld [vmem:[%s1 + $0x1550] sm:$0xff]
    %v708 = vld [vmem:[%s1 + $0x1558] sm:$0xff]
    %v709 = vld [vmem:[%s1 + $0x1560] sm:$0xff]
    %v710 = vld [vmem:[%s1 + $0x1568] sm:$0xff]
    %v711 = vld [vmem:[%s1 + $0x1570] sm:$0xff]
    %v712 = vld [vmem:[%s1 + $0x1578] sm:$0xff]
    %v713 = vld [vmem:[%s1 + $0x1580] sm:$0xff]
    %v714 = vld [vmem:[%s1 + $0x1588] sm:$0xff]
    %v715 = vld [vmem:[%s1 + $0x1590] sm:$0xff]
    %v716 = vld [vmem:[%s1 + $0x1598] sm:$0xff]
    %v717 = vld [vmem:[%s1 + $0x15a0] sm:$0xff]
    %v718 = vld [vmem:[%s1 + $0x15a8] sm:$0xff]
    %v719 = vld [vmem:[%s1 + $0x15b0] sm:$0xff]
    %v720 = vld [vmem:[%s1 + $0x15b8] sm:$0xff]
    %v721 = vld [vmem:[%s1 + $0x15c0] sm:$0xff]
    %v722 = vld [vmem:[%s1 + $0x15c8] sm:$0xff]
    %v723 = vld [vmem:[%s1 + $0x15d0] sm:$0xff]
    %v724 = vld [vmem:[%s1 + $0x15d8] sm:$0xff]
    %v725 = vld [vmem:[%s1 + $0x15e0] sm:$0xff]
    %v726 = vld [vmem:[%s1 + $0x15e8] sm:$0xff]
    %v727 = vld [vmem:[%s1 + $0x15f0] sm:$0xff]
    %v728 = vld [vmem:[%s1 + $0x15f8] sm:$0xff]
    %v729 = vld [vmem:[%s1 + $0x1600] sm:$0xff]
    %v730 = vld [vmem:[%s1 + $0x1608] sm:$0xff]
    %v731 = vld [vmem:[%s1 + $0x1610] sm:$0xff]
    %v732 = vld [vmem:[%s1 + $0x1618] sm:$0xff]
    %v733 = vld [vmem:[%s1 + $0x1620] sm:$0xff]
    %v734 = vld [vmem:[%s1 + $0x1628] sm:$0xff]
    %v735 = vld [vmem:[%s1 + $0x1630] sm:$0xff]
    %v736 = vld [vmem:[%s1 + $0x1638] sm:$0xff]
    %v737 = vld [vmem:[%s1 + $0x1640] sm:$0xff]
    %v738 = vld [vmem:[%s1 + $0x1648] sm:$0xff]
    %v739 = vld [vmem:[%s1 + $0x1650] sm:$0xff]
    %v740 = vld [vmem:[%s1 + $0x1658] sm:$0xff]
    %v741 = vld [vmem:[%s1 + $0x1660] sm:$0xff]
    %v742 = vld [vmem:[%s1 + $0x1668] sm:$0xff]
    %v743 = vld [vmem:[%s1 + $0x1670] sm:$0xff]
    %v744 = vld [vmem:[%s1 + $0x1678] sm:$0xff]
    %v745 = vld [vmem:[%s1 + $0x1680] sm:$0xff]
    %v746 = vld [vmem:[%s1 + $0x1688] sm:$0xff]
    %v747 = vld [vmem:[%s1 + $0x1690] sm:$0xff]
    %v748 = vld [vmem:[%s1 + $0x1698] sm:$0xff]
    %v749 = vld [vmem:[%s1 + $0x16a0] sm:$0xff]
    %v750 = vld [vmem:[%s1 + $0x16a8] sm:$0xff]
    %v751 = vld [vmem:[%s1 + $0x16b0] sm:$0xff]
    %v752 = vld [vmem:[%s1 + $0x16b8] sm:$0xff]
    %v753 = vld [vmem:[%s1 + $0x16c0] sm:$0xff]
    %v754 = vld [vmem:[%s1 + $0x16c8] sm:$0xff]
    %v755 = vld [vmem:[%s1 + $0x16d0] sm:$0xff]
    %v756 = vld [vmem:[%s1 + $0x16d8] sm:$0xff]
    %v757 = vld [vmem:[%s1 + $0x16e0] sm:$0xff]
    %v758 = vld [vmem:[%s1 + $0x16e8] sm:$0xff]
    %v759 = vld [vmem:[%s1 + $0x16f0] sm:$0xff]
    %v760 = vld [vmem:[%s1 + $0x16f8] sm:$0xff]
    %v761 = vld [vmem:[%s1 + $0x1700] sm:$0xff]
    %v762 = vld [vmem:[%s1 + $0x1708] sm:$0xff]
    %v763 = vld [vmem:[%s1 + $0x1710] sm:$0xff]
    %v764 = vld [vmem:[%s1 + $0x1718] sm:$0xff]
    %v765 = vld [vmem:[%s1 + $0x1720] sm:$0xff]
    %v766 = vld [vmem:[%s1 + $0x1728] sm:$0xff]
    %v767 = vld [vmem:[%s1 + $0x1730] sm:$0xff]
    %v768 = vld [vmem:[%s1 + $0x1738] sm:$0xff]
    %v769 = vld [vmem:[%s1 + $0x1740] sm:$0xff]
    %v770 = vld [vmem:[%s1 + $0x1748] sm:$0xff]
    %v771 = vld [vmem:[%s1 + $0x1750] sm:$0xff]
    %v772 = vld [vmem:[%s1 + $0x1758] sm:$0xff]
    %v773 = vld [vmem:[%s1 + $0x1760] sm:$0xff]
    %v774 = vld [vmem:[%s1 + $0x1768] sm:$0xff]
    %v775 = vld [vmem:[%s1 + $0x1770] sm:$0xff]
    %v776 = vld [vmem:[%s1 + $0x1778] sm:$0xff]
    %v777 = vld [vmem:[%s1 + $0x1780] sm:$0xff]
    %v778 = vld [vmem:[%s1 + $0x1788] sm:$0xff]
    %v779 = vld [vmem:[%s1 + $0x1790] sm:$0xff]
    %v780 = vld [vmem:[%s1 + $0x1798] sm:$0xff]
    %v781 = vld [vmem:[%s1 + $0x17a0] sm:$0xff]
    %v782 = vld [vmem:[%s1 + $0x17a8] sm:$0xff]
    %v783 = vld [vmem:[%s1 + $0x17b0] sm:$0xff]
    %v784 = vld [vmem:[%s1 + $0x17b8] sm:$0xff]
    %v785 = vld [vmem:[%s1 + $0x17c0] sm:$0xff]
    %v786 = vld [vmem:[%s1 + $0x17c8] sm:$0xff]
    %v787 = vld [vmem:[%s1 + $0x17d0] sm:$0xff]
    %v788 = vld [vmem:[%s1 + $0x17d8] sm:$0xff]
    %v789 = vld [vmem:[%s1 + $0x17e0] sm:$0xff]
    %v790 = vld [vmem:[%s1 + $0x17e8] sm:$0xff]
    %v791 = vld [vmem:[%s1 + $0x17f0] sm:$0xff]
    %v792 = vld [vmem:[%s1 + $0x17f8] sm:$0xff]
    %v793 = vld [vmem:[%s1 + $0x1800] sm:$0xff]
    %v794 = vld [vmem:[%s1 + $0x1808] sm:$0xff]
    %v795 = vld [vmem:[%s1 + $0x1810] sm:$0xff]
    %v796 = vld [vmem:[%s1 + $0x1818] sm:$0xff]
    %v797 = vld [vmem:[%s1 + $0x1820] sm:$0xff]
    %v798 = vld [vmem:[%s1 + $0x1828] sm:$0xff]
    %v799 = vld [vmem:[%s1 + $0x1830] sm:$0xff]
    %v800 = vld [vmem:[%s1 + $0x1838] sm:$0xff]
    %v801 = vld [vmem:[%s1 + $0x1840] sm:$0xff]
    %v802 = vld [vmem:[%s1 + $0x1848] sm:$0xff]
    %v803 = vld [vmem:[%s1 + $0x1850] sm:$0xff]
    %v804 = vld [vmem:[%s1 + $0x1858] sm:$0xff]
    %v805 = vld [vmem:[%s1 + $0x1860] sm:$0xff]
    %v806 = vld [vmem:[%s1 + $0x1868] sm:$0xff]
    %v807 = vld [vmem:[%s1 + $0x1870] sm:$0xff]
    %v808 = vld [vmem:[%s1 + $0x1878] sm:$0xff]
    %v809 = vld [vmem:[%s1 + $0x1880] sm:$0xff]
    %v810 = vld [vmem:[%s1 + $0x1888] sm:$0xff]
    %v811 = vld [vmem:[%s1 + $0x1890] sm:$0xff]
    %v812 = vld [vmem:[%s1 + $0x1898] sm:$0xff]
    %v813 = vld [vmem:[%s1 + $0x18a0] sm:$0xff]
    %v814 = vld [vmem:[%s1 + $0x18a8] sm:$0xff]
    %v815 = vld [vmem:[%s1 + $0x18b0] sm:$0xff]
    %v816 = vld [vmem:[%s1 + $0x18b8] sm:$0xff]
    %v817 = vld [vmem:[%s1 + $0x18c0] sm:$0xff]
    %v818 = vld [vmem:[%s1 + $0x18c8] sm:$0xff]
    %v819 = vld [vmem:[%s1 + $0x18d0] sm:$0xff]
    %v820 = vld [vmem:[%s1 + $0x18d8] sm:$0xff]
    %v821 = vld [vmem:[%s1 + $0x18e0] sm:$0xff]
    %v822 = vld [vmem:[%s1 + $0x18e8] sm:$0xff]
    %v823 = vld [vmem:[%s1 + $0x18f0] sm:$0xff]
    %v824 = vld [vmem:[%s1 + $0x18f8] sm:$0xff]
    %v825 = vld [vmem:[%s1 + $0x1900] sm:$0xff]
    %v826 = vld [vmem:[%s1 + $0x1908] sm:$0xff]
    %v827 = vld [vmem:[%s1 + $0x1910] sm:$0xff]
    %v828 = vld [vmem:[%s1 + $0x1918] sm:$0xff]
    %v829 = vld [vmem:[%s1 + $0x1920] sm:$0xff]
    %v830 = vld [vmem:[%s1 + $0x1928] sm:$0xff]
    %v831 = vld [vmem:[%s1 + $0x1930] sm:$0xff]
    %v832 = vld [vmem:[%s1 + $0x1938] sm:$0xff]
    %v833 = vld [vmem:[%s1 + $0x1940] sm:$0xff]
    %v834 = vld [vmem:[%s1 + $0x1948] sm:$0xff]
    %v835 = vld [vmem:[%s1 + $0x1950] sm:$0xff]
    %v836 = vld [vmem:[%s1 + $0x1958] sm:$0xff]
    %v837 = vld [vmem:[%s1 + $0x1960] sm:$0xff]
    %v838 = vld [vmem:[%s1 + $0x1968] sm:$0xff]
    %v839 = vld [vmem:[%s1 + $0x1970] sm:$0xff]
    %v840 = vld [vmem:[%s1 + $0x1978] sm:$0xff]
    %v841 = vld [vmem:[%s1 + $0x1980] sm:$0xff]
    %v842 = vld [vmem:[%s1 + $0x1988] sm:$0xff]
    %v843 = vld [vmem:[%s1 + $0x1990] sm:$0xff]
    %v844 = vld [vmem:[%s1 + $0x1998] sm:$0xff]
    %v845 = vld [vmem:[%s1 + $0x19a0] sm:$0xff]
    %v846 = vld [vmem:[%s1 + $0x19a8] sm:$0xff]
    %v847 = vld [vmem:[%s1 + $0x19b0] sm:$0xff]
    %v848 = vld [vmem:[%s1 + $0x19b8] sm:$0xff]
    %v849 = vld [vmem:[%s1 + $0x19c0] sm:$0xff]
    %v850 = vld [vmem:[%s1 + $0x19c8] sm:$0xff]
    %v851 = vld [vmem:[%s1 + $0x19d0] sm:$0xff]
    %v852 = vld [vmem:[%s1 + $0x19d8] sm:$0xff]
    %v853 = vld [vmem:[%s1 + $0x19e0] sm:$0xff]
    %v854 = vld [vmem:[%s1 + $0x19e8] sm:$0xff]
    %v855 = vld [vmem:[%s1 + $0x19f0] sm:$0xff]
    %v856 = vld [vmem:[%s1 + $0x19f8] sm:$0xff]
    %v857 = vld [vmem:[%s1 + $0x1a00] sm:$0xff]
    %v858 = vld [vmem:[%s1 + $0x1a08] sm:$0xff]
    %v859 = vld [vmem:[%s1 + $0x1a10] sm:$0xff]
    %v860 = vld [vmem:[%s1 + $0x1a18] sm:$0xff]
    %v861 = vld [vmem:[%s1 + $0x1a20] sm:$0xff]
    %v862 = vld [vmem:[%s1 + $0x1a28] sm:$0xff]
    %v863 = vld [vmem:[%s1 + $0x1a30] sm:$0xff]
    %v864 = vld [vmem:[%s1 + $0x1a38] sm:$0xff]
    %v865 = vld [vmem:[%s1 + $0x1a40] sm:$0xff]
    %v866 = vld [vmem:[%s1 + $0x1a48] sm:$0xff]
    %v867 = vld [vmem:[%s1 + $0x1a50] sm:$0xff]
    %v868 = vld [vmem:[%s1 + $0x1a58] sm:$0xff]
    %v869 = vld [vmem:[%s1 + $0x1a60] sm:$0xff]
    %v870 = vld [vmem:[%s1 + $0x1a68] sm:$0xff]
    %v871 = vld [vmem:[%s1 + $0x1a70] sm:$0xff]
    %v872 = vld [vmem:[%s1 + $0x1a78] sm:$0xff]
    %v873 = vld [vmem:[%s1 + $0x1a80] sm:$0xff]
    %v874 = vld [vmem:[%s1 + $0x1a88] sm:$0xff]
    %v875 = vld [vmem:[%s1 + $0x1a90] sm:$0xff]
    %v876 = vld [vmem:[%s1 + $0x1a98] sm:$0xff]
    %v877 = vld [vmem:[%s1 + $0x1aa0] sm:$0xff]
    %v878 = vld [vmem:[%s1 + $0x1aa8] sm:$0xff]
    %v879 = vld [vmem:[%s1 + $0x1ab0] sm:$0xff]
    %v880 = vld [vmem:[%s1 + $0x1ab8] sm:$0xff]
    %v881 = vld [vmem:[%s1 + $0x1ac0] sm:$0xff]
    %v882 = vld [vmem:[%s1 + $0x1ac8] sm:$0xff]
    %v883 = vld [vmem:[%s1 + $0x1ad0] sm:$0xff]
    %v884 = vld [vmem:[%s1 + $0x1ad8] sm:$0xff]
    %v885 = vld [vmem:[%s1 + $0x1ae0] sm:$0xff]
    %v886 = vld [vmem:[%s1 + $0x1ae8] sm:$0xff]
    %v887 = vld [vmem:[%s1 + $0x1af0] sm:$0xff]
    %v888 = vld [vmem:[%s1 + $0x1af8] sm:$0xff]
    %v889 = vld [vmem:[%s1 + $0x1b00] sm:$0xff]
    %v890 = vld [vmem:[%s1 + $0x1b08] sm:$0xff]
    %v891 = vld [vmem:[%s1 + $0x1b10] sm:$0xff]
    %v892 = vld [vmem:[%s1 + $0x1b18] sm:$0xff]
    %v893 = vld [vmem:[%s1 + $0x1b20] sm:$0xff]
    %v894 = vld [vmem:[%s1 + $0x1b28] sm:$0xff]
    %v895 = vld [vmem:[%s1 + $0x1b30] sm:$0xff]
    %v896 = vld [vmem:[%s1 + $0x1b38] sm:$0xff]
    %v897 = vld [vmem:[%s1 + $0x1b40] sm:$0xff]
    %v898 = vld [vmem:[%s1 + $0x1b48] sm:$0xff]
    %v899 = vld [vmem:[%s1 + $0x1b50] sm:$0xff]
    %v900 = vld [vmem:[%s1 + $0x1b58] sm:$0xff]
    %v901 = vld [vmem:[%s1 + $0x1b60] sm:$0xff]
    %v902 = vld [vmem:[%s1 + $0x1b68] sm:$0xff]
    %v903 = vld [vmem:[%s1 + $0x1b70] sm:$0xff]
    %v904 = vld [vmem:[%s1 + $0x1b78] sm:$0xff]
    %v905 = vld [vmem:[%s1 + $0x1b80] sm:$0xff]
    %v906 = vld [vmem:[%s1 + $0x1b88] sm:$0xff]
    %v907 = vld [vmem:[%s1 + $0x1b90] sm:$0xff]
    %v908 = vld [vmem:[%s1 + $0x1b98] sm:$0xff]
    %v909 = vld [vmem:[%s1 + $0x1ba0] sm:$0xff]
    %v910 = vld [vmem:[%s1 + $0x1ba8] sm:$0xff]
    %v911 = vld [vmem:[%s1 + $0x1bb0] sm:$0xff]
    %v912 = vld [vmem:[%s1 + $0x1bb8] sm:$0xff]
    %v913 = vld [vmem:[%s1 + $0x1bc0] sm:$0xff]
    %v914 = vld [vmem:[%s1 + $0x1bc8] sm:$0xff]
    %v915 = vld [vmem:[%s1 + $0x1bd0] sm:$0xff]
    %v916 = vld [vmem:[%s1 + $0x1bd8] sm:$0xff]
    %v917 = vld [vmem:[%s1 + $0x1be0] sm:$0xff]
    %v918 = vld [vmem:[%s1 + $0x1be8] sm:$0xff]
    %v919 = vld [vmem:[%s1 + $0x1bf0] sm:$0xff]
    %v920 = vld [vmem:[%s1 + $0x1bf8] sm:$0xff]
    %v921 = vld [vmem:[%s1 + $0x1c00] sm:$0xff]
    %v922 = vld [vmem:[%s1 + $0x1c08] sm:$0xff]
    %v923 = vld [vmem:[%s1 + $0x1c10] sm:$0xff]
    %v924 = vld [vmem:[%s1 + $0x1c18] sm:$0xff]
    %v925 = vld [vmem:[%s2] sm:$0xf]
    %v927 = vlaneseq
    %v928 = vshrl.u32 %v927, 7
    %v929 = vsub.s32 0, %v928
    %v930 = vrot.slane %v925, %v929
    %v931 = vlaneseq
    %v932 = vshrl.u32 %v931, 7
    %v933 = vsub.s32 1, %v932
    %v934 = vrot.slane %v925, %v933
    %v935 = vlaneseq
    %v936 = vshrl.u32 %v935, 7
    %v937 = vsub.s32 2, %v936
    %v938 = vrot.slane %v925, %v937
    %v939 = vlaneseq
    %v940 = vshrl.u32 %v939, 7
    %v941 = vsub.s32 3, %v940
    %v942 = vrot.slane %v925, %v941
    %v951 = vcombine.high %v21, %v21
    %v953 = vunpack.c.l.s4 1983009808
    %v954 = vunpack.c.0.s8 %v953
    %v955 = vlaneseq
    %v956 = vshrl.u32 %v955, 7
    %v957 = vsub.s32 %v954, %v956
    %v958 = vrot.slane %v21, %v957
    %v960 = vunpack.c.l.s4 1983009808
    %v961 = vunpack.c.0.s8 %v960
    %v962 = vlaneseq
    %v963 = vshrl.u32 %v962, 7
    %v964 = vsub.s32 %v961, %v963
    %v965 = vrot.slane %v951, %v964
    %v966 = vcombine.high %v958, %v958
    %v967 = vcombine.high %v965, %v965
    %v968 = vcombine.high %v22, %v22
    %v970 = vunpack.c.l.s4 1983009808
    %v971 = vunpack.c.0.s8 %v970
    %v972 = vlaneseq
    %v973 = vshrl.u32 %v972, 7
    %v974 = vsub.s32 %v971, %v973
    %v975 = vrot.slane %v22, %v974
    %v977 = vunpack.c.l.s4 1983009808
    %v978 = vunpack.c.0.s8 %v977
    %v979 = vlaneseq
    %v980 = vshrl.u32 %v979, 7
    %v981 = vsub.s32 %v978, %v980
    %v982 = vrot.slane %v968, %v981
    %v983 = vcombine.high %v975, %v975
    %v984 = vcombine.high %v982, %v982
    %v985 = vcombine.high %v23, %v23
    %v987 = vunpack.c.l.s4 1983009808
    %v988 = vunpack.c.0.s8 %v987
    %v989 = vlaneseq
    %v990 = vshrl.u32 %v989, 7
    %v991 = vsub.s32 %v988, %v990
    %v992 = vrot.slane %v23, %v991
    %v994 = vunpack.c.l.s4 1983009808
    %v995 = vunpack.c.0.s8 %v994
    %v996 = vlaneseq
    %v997 = vshrl.u32 %v996, 7
    %v998 = vsub.s32 %v995, %v997
    %v999 = vrot.slane %v985, %v998
    %v1000 = vcombine.high %v992, %v992
    %v1001 = vcombine.high %v999, %v999
    %v1002 = vcombine.high %v24, %v24
    %v1004 = vunpack.c.l.s4 1983009808
    %v1005 = vunpack.c.0.s8 %v1004
    %v1006 = vlaneseq
    %v1007 = vshrl.u32 %v1006, 7
    %v1008 = vsub.s32 %v1005, %v1007
    %v1009 = vrot.slane %v24, %v1008
    %v1011 = vunpack.c.l.s4 1983009808
    %v1012 = vunpack.c.0.s8 %v1011
    %v1013 = vlaneseq
    %v1014 = vshrl.u32 %v1013, 7
    %v1015 = vsub.s32 %v1012, %v1014
    %v1016 = vrot.slane %v1002, %v1015
    %v1017 = vcombine.high %v1009, %v1009
    %vm1032 = vcmask 64512
    %v1033 = vsel %vm1032, %v1016, 0
    %1035 = vmatprep.subr.mxu0 %v26
    %1036 = vmatpush1.msra.mxu0 %v25
    %1037 = vmatprep.subr.mxu0 %v30
    %1038 = vmatpush1.msra.mxu0 %v29
    %1039 = vmatprep.subr.mxu0 %v34
    %1040 = vmatpush1.msra.mxu0 %v33
    %1041 = vmatprep.subr.mxu0 %v38
    %1042 = vmatpush1.msra.mxu0 %v37
    %1043 = vmatprep.subr.mxu0 %v42
    %1044 = vmatpush1.msra.mxu0 %v41
    %1045 = vmatprep.subr.mxu0 %v46
    %1046 = vmatpush1.msra.mxu0 %v45
    %1047 = vmatprep.subr.mxu0 %v50
    %1048 = vmatpush1.msra.mxu0 %v49
    %1049 = vmatprep.subr.mxu0 %v54
    %1050 = vmatpush1.msra.mxu0 %v53
    %1051 = vmatprep.subr.mxu0 %v58
    %1052 = vmatpush1.msra.mxu0 %v57
    %1053 = vmatprep.subr.mxu0 %v62
    %1054 = vmatpush1.msra.mxu0 %v61
    %1055 = vmatprep.subr.mxu0 %v66
    %1056 = vmatpush1.msra.mxu0 %v65
    %1057 = vmatprep.subr.mxu0 %v70
    %1058 = vmatpush1.msra.mxu0 %v69
    %1059 = vmatprep.subr.mxu0 %v74
    %1060 = vmatpush1.msra.mxu0 %v73
    %1061 = vmatprep.subr.mxu0 %v78
    %1062 = vmatpush1.msra.mxu0 %v77
    %1063 = vmatprep.subr.mxu0 %v82
    %1064 = vmatpush1.msra.mxu0 %v81
    %1065 = vmatprep.subr.mxu0 %v86
    %1066 = vmatpush1.msra.mxu0 %v85
    %1067 = vmatprep.subr.mxu0 %v90
    %1068 = vmatpush1.msra.mxu0 %v89
    %1069 = vmatprep.subr.mxu0 %v94
    %1070 = vmatpush1.msra.mxu0 %v93
    %1071 = vmatprep.subr.mxu0 %v98
    %1072 = vmatpush1.msra.mxu0 %v97
    %1073 = vmatprep.subr.mxu0 %v102
    %1074 = vmatpush1.msra.mxu0 %v101
    %1075 = vmatprep.subr.mxu0 %v106
    %1076 = vmatpush1.msra.mxu0 %v105
    %1077 = vmatprep.subr.mxu0 %v110
    %1078 = vmatpush1.msra.mxu0 %v109
    %1079 = vmatprep.subr.mxu0 %v114
    %1080 = vmatpush1.msra.mxu0 %v113
    %1081 = vmatprep.subr.mxu0 %v118
    %1082 = vmatpush1.msra.mxu0 %v117
    %1083 = vmatprep.subr.mxu0 %v122
    %1084 = vmatpush1.msra.mxu0 %v121
    %1085 = vmatprep.subr.mxu0 %v126
    %1086 = vmatpush1.msra.mxu0 %v125
    %1087 = vmatprep.subr.mxu0 %v130
    %1088 = vmatpush1.msra.mxu0 %v129
    %1089 = vmatprep.subr.mxu0 %v134
    %1090 = vmatpush1.msra.mxu0 %v133
    %1091 = vmatprep.subr.mxu0 %v138
    %1092 = vmatpush1.msra.mxu0 %v137
    %1093 = vmatprep.subr.mxu0 %v142
    %1094 = vmatpush1.msra.mxu0 %v141
    %1095 = vmatprep.subr.mxu0 %v146
    %1096 = vmatpush1.msra.mxu0 %v145
    %1097 = vmatprep.subr.mxu0 %v150
    %1098 = vmatpush1.msra.mxu0 %v149
    %1099 = vmatprep.mubr.f32.mxu0 %v966
    %1100 = vmatmul.mubr.f32.gmra.mrb[0].mxu0 %v958
    %v1101 = vpop.f32.mrb[0].mxu0
    %v1102 = vadd.f32 %v930, %v1101
    %v1103 = vpop.f32.mrb[0].mxu0
    %v1104 = vadd.f32 %v934, %v1103
    %1105 = vdwg.mxu0
    %1106 = vmatprep.subr.mxu0 %v154
    %1107 = vmatpush1.msra.mxu0 %v153
    %1108 = vmatprep.subr.mxu0 %v158
    %1109 = vmatpush1.msra.mxu0 %v157
    %1110 = vmatprep.subr.mxu0 %v162
    %1111 = vmatpush1.msra.mxu0 %v161
    %1112 = vmatprep.subr.mxu0 %v166
    %1113 = vmatpush1.msra.mxu0 %v165
    %1114 = vmatprep.subr.mxu0 %v170
    %1115 = vmatpush1.msra.mxu0 %v169
    %1116 = vmatprep.subr.mxu0 %v174
    %1117 = vmatpush1.msra.mxu0 %v173
    %1118 = vmatprep.subr.mxu0 %v178
    %1119 = vmatpush1.msra.mxu0 %v177
    %1120 = vmatprep.subr.mxu0 %v182
    %1121 = vmatpush1.msra.mxu0 %v181
    %1122 = vmatprep.subr.mxu0 %v186
    %1123 = vmatpush1.msra.mxu0 %v185
    %1124 = vmatprep.subr.mxu0 %v190
    %1125 = vmatpush1.msra.mxu0 %v189
    %1126 = vmatprep.subr.mxu0 %v194
    %1127 = vmatpush1.msra.mxu0 %v193
    %1128 = vmatprep.subr.mxu0 %v198
    %1129 = vmatpush1.msra.mxu0 %v197
    %1130 = vmatprep.subr.mxu0 %v202
    %1131 = vmatpush1.msra.mxu0 %v201
    %1132 = vmatprep.subr.mxu0 %v206
    %1133 = vmatpush1.msra.mxu0 %v205
    %1134 = vmatprep.subr.mxu0 %v210
    %1135 = vmatpush1.msra.mxu0 %v209
    %1136 = vmatprep.subr.mxu0 %v214
    %1137 = vmatpush1.msra.mxu0 %v213
    %1138 = vmatprep.subr.mxu0 %v218
    %1139 = vmatpush1.msra.mxu0 %v217
    %1140 = vmatprep.subr.mxu0 %v222
    %1141 = vmatpush1.msra.mxu0 %v221
    %1142 = vmatprep.subr.mxu0 %v226
    %1143 = vmatpush1.msra.mxu0 %v225
    %1144 = vmatprep.subr.mxu0 %v230
    %1145 = vmatpush1.msra.mxu0 %v229
    %1146 = vmatprep.subr.mxu0 %v234
    %1147 = vmatpush1.msra.mxu0 %v233
    %1148 = vmatprep.subr.mxu0 %v238
    %1149 = vmatpush1.msra.mxu0 %v237
    %1150 = vmatprep.subr.mxu0 %v242
    %1151 = vmatpush1.msra.mxu0 %v241
    %1152 = vmatprep.subr.mxu0 %v246
    %1153 = vmatpush1.msra.mxu0 %v245
    %1154 = vmatprep.subr.mxu0 %v250
    %1155 = vmatpush1.msra.mxu0 %v249
    %1156 = vmatprep.subr.mxu0 %v254
    %1157 = vmatpush1.msra.mxu0 %v253
    %1158 = vmatprep.subr.mxu0 %v258
    %1159 = vmatpush1.msra.mxu0 %v257
    %1160 = vmatprep.subr.mxu0 %v262
    %1161 = vmatpush1.msra.mxu0 %v261
    %1162 = vmatprep.subr.mxu0 %v266
    %1163 = vmatpush1.msra.mxu0 %v265
    %1164 = vmatprep.subr.mxu0 %v270
    %1165 = vmatpush1.msra.mxu0 %v269
    %1166 = vmatprep.subr.mxu0 %v274
    %1167 = vmatpush1.msra.mxu0 %v273
    %1168 = vmatprep.subr.mxu0 %v278
    %1169 = vmatpush1.msra.mxu0 %v277
    %1170 = vmatprep.mubr.f32.mxu0 %v967
    %1171 = vmatmul.mubr.f32.gmra.mrb[0].mxu0 %v965
    %v1172 = vpop.f32.mrb[0].mxu0
    %v1173 = vadd.f32 %v1102, %v1172
    %v1174 = vpop.f32.mrb[0].mxu0
    %v1175 = vadd.f32 %v1104, %v1174
    %1176 = vdwg.mxu0
    %1177 = vmatprep.subr.mxu0 %v282
    %1178 = vmatpush1.msra.mxu0 %v281
    %1179 = vmatprep.subr.mxu0 %v286
    %1180 = vmatpush1.msra.mxu0 %v285
    %1181 = vmatprep.subr.mxu0 %v290
    %1182 = vmatpush1.msra.mxu0 %v289
    %1183 = vmatprep.subr.mxu0 %v294
    %1184 = vmatpush1.msra.mxu0 %v293
    %1185 = vmatprep.subr.mxu0 %v298
    %1186 = vmatpush1.msra.mxu0 %v297
    %1187 = vmatprep.subr.mxu0 %v302
    %1188 = vmatpush1.msra.mxu0 %v301
    %1189 = vmatprep.subr.mxu0 %v306
    %1190 = vmatpush1.msra.mxu0 %v305
    %1191 = vmatprep.subr.mxu0 %v310
    %1192 = vmatpush1.msra.mxu0 %v309
    %1193 = vmatprep.subr.mxu0 %v314
    %1194 = vmatpush1.msra.mxu0 %v313
    %1195 = vmatprep.subr.mxu0 %v318
    %1196 = vmatpush1.msra.mxu0 %v317
    %1197 = vmatprep.subr.mxu0 %v322
    %1198 = vmatpush1.msra.mxu0 %v321
    %1199 = vmatprep.subr.mxu0 %v326
    %1200 = vmatpush1.msra.mxu0 %v325
    %1201 = vmatprep.subr.mxu0 %v330
    %1202 = vmatpush1.msra.mxu0 %v329
    %1203 = vmatprep.subr.mxu0 %v334
    %1204 = vmatpush1.msra.mxu0 %v333
    %1205 = vmatprep.subr.mxu0 %v338
    %1206 = vmatpush1.msra.mxu0 %v337
    %1207 = vmatprep.subr.mxu0 %v342
    %1208 = vmatpush1.msra.mxu0 %v341
    %1209 = vmatprep.subr.mxu0 %v346
    %1210 = vmatpush1.msra.mxu0 %v345
    %1211 = vmatprep.subr.mxu0 %v350
    %1212 = vmatpush1.msra.mxu0 %v349
    %1213 = vmatprep.subr.mxu0 %v354
    %1214 = vmatpush1.msra.mxu0 %v353
    %1215 = vmatprep.subr.mxu0 %v358
    %1216 = vmatpush1.msra.mxu0 %v357
    %1217 = vmatprep.subr.mxu0 %v362
    %1218 = vmatpush1.msra.mxu0 %v361
    %1219 = vmatprep.subr.mxu0 %v366
    %1220 = vmatpush1.msra.mxu0 %v365
    %1221 = vmatprep.subr.mxu0 %v370
    %1222 = vmatpush1.msra.mxu0 %v369
    %1223 = vmatprep.subr.mxu0 %v374
    %1224 = vmatpush1.msra.mxu0 %v373
    %1225 = vmatprep.subr.mxu0 %v378
    %1226 = vmatpush1.msra.mxu0 %v377
    %1227 = vmatprep.subr.mxu0 %v382
    %1228 = vmatpush1.msra.mxu0 %v381
    %1229 = vmatprep.subr.mxu0 %v386
    %1230 = vmatpush1.msra.mxu0 %v385
    %1231 = vmatprep.subr.mxu0 %v390
    %1232 = vmatpush1.msra.mxu0 %v389
    %1233 = vmatprep.subr.mxu0 %v394
    %1234 = vmatpush1.msra.mxu0 %v393
    %1235 = vmatprep.subr.mxu0 %v398
    %1236 = vmatpush1.msra.mxu0 %v397
    %1237 = vmatprep.subr.mxu0 %v402
    %1238 = vmatpush1.msra.mxu0 %v401
    %1239 = vmatprep.subr.mxu0 %v406
    %1240 = vmatpush1.msra.mxu0 %v405
    %1241 = vmatprep.mubr.f32.mxu0 %v983
    %1242 = vmatmul.mubr.f32.gmra.mrb[0].mxu0 %v975
    %v1243 = vpop.f32.mrb[0].mxu0
    %v1244 = vadd.f32 %v1173, %v1243
    %v1245 = vpop.f32.mrb[0].mxu0
    %v1246 = vadd.f32 %v1175, %v1245
    %1247 = vdwg.mxu0
    %1248 = vmatprep.subr.mxu0 %v410
    %1249 = vmatpush1.msra.mxu0 %v409
    %1250 = vmatprep.subr.mxu0 %v414
    %1251 = vmatpush1.msra.mxu0 %v413
    %1252 = vmatprep.subr.mxu0 %v418
    %1253 = vmatpush1.msra.mxu0 %v417
    %1254 = vmatprep.subr.mxu0 %v422
    %1255 = vmatpush1.msra.mxu0 %v421
    %1256 = vmatprep.subr.mxu0 %v426
    %1257 = vmatpush1.msra.mxu0 %v425
    %1258 = vmatprep.subr.mxu0 %v430
    %1259 = vmatpush1.msra.mxu0 %v429
    %1260 = vmatprep.subr.mxu0 %v434
    %1261 = vmatpush1.msra.mxu0 %v433
    %1262 = vmatprep.subr.mxu0 %v438
    %1263 = vmatpush1.msra.mxu0 %v437
    %1264 = vmatprep.subr.mxu0 %v442
    %1265 = vmatpush1.msra.mxu0 %v441
    %1266 = vmatprep.subr.mxu0 %v446
    %1267 = vmatpush1.msra.mxu0 %v445
    %1268 = vmatprep.subr.mxu0 %v450
    %1269 = vmatpush1.msra.mxu0 %v449
    %1270 = vmatprep.subr.mxu0 %v454
    %1271 = vmatpush1.msra.mxu0 %v453
    %1272 = vmatprep.subr.mxu0 %v458
    %1273 = vmatpush1.msra.mxu0 %v457
    %1274 = vmatprep.subr.mxu0 %v462
    %1275 = vmatpush1.msra.mxu0 %v461
    %1276 = vmatprep.subr.mxu0 %v466
    %1277 = vmatpush1.msra.mxu0 %v465
    %1278 = vmatprep.subr.mxu0 %v470
    %1279 = vmatpush1.msra.mxu0 %v469
    %1280 = vmatprep.subr.mxu0 %v474
    %1281 = vmatpush1.msra.mxu0 %v473
    %1282 = vmatprep.subr.mxu0 %v478
    %1283 = vmatpush1.msra.mxu0 %v477
    %1284 = vmatprep.subr.mxu0 %v482
    %1285 = vmatpush1.msra.mxu0 %v481
    %1286 = vmatprep.subr.mxu0 %v486
    %1287 = vmatpush1.msra.mxu0 %v485
    %1288 = vmatprep.subr.mxu0 %v490
    %1289 = vmatpush1.msra.mxu0 %v489
    %1290 = vmatprep.subr.mxu0 %v494
    %1291 = vmatpush1.msra.mxu0 %v493
    %1292 = vmatprep.subr.mxu0 %v498
    %1293 = vmatpush1.msra.mxu0 %v497
    %1294 = vmatprep.subr.mxu0 %v502
    %1295 = vmatpush1.msra.mxu0 %v501
    %1296 = vmatprep.subr.mxu0 %v506
    %1297 = vmatpush1.msra.mxu0 %v505
    %1298 = vmatprep.subr.mxu0 %v510
    %1299 = vmatpush1.msra.mxu0 %v509
    %1300 = vmatprep.subr.mxu0 %v514
    %1301 = vmatpush1.msra.mxu0 %v513
    %1302 = vmatprep.subr.mxu0 %v518
    %1303 = vmatpush1.msra.mxu0 %v517
    %1304 = vmatprep.subr.mxu0 %v522
    %1305 = vmatpush1.msra.mxu0 %v521
    %1306 = vmatprep.subr.mxu0 %v526
    %1307 = vmatpush1.msra.mxu0 %v525
    %1308 = vmatprep.subr.mxu0 %v530
    %1309 = vmatpush1.msra.mxu0 %v529
    %1310 = vmatprep.subr.mxu0 %v534
    %1311 = vmatpush1.msra.mxu0 %v533
    %1312 = vmatprep.mubr.f32.mxu0 %v984
    %1313 = vmatmul.mubr.f32.gmra.mrb[0].mxu0 %v982
    %v1314 = vpop.f32.mrb[0].mxu0
    %v1315 = vadd.f32 %v1244, %v1314
    %v1316 = vpop.f32.mrb[0].mxu0
    %v1317 = vadd.f32 %v1246, %v1316
    %1318 = vdwg.mxu0
    %1319 = vmatprep.subr.mxu0 %v538
    %1320 = vmatpush1.msra.mxu0 %v537
    %1321 = vmatprep.subr.mxu0 %v542
    %1322 = vmatpush1.msra.mxu0 %v541
    %1323 = vmatprep.subr.mxu0 %v546
    %1324 = vmatpush1.msra.mxu0 %v545
    %1325 = vmatprep.subr.mxu0 %v550
    %1326 = vmatpush1.msra.mxu0 %v549
    %1327 = vmatprep.subr.mxu0 %v554
    %1328 = vmatpush1.msra.mxu0 %v553
    %1329 = vmatprep.subr.mxu0 %v558
    %1330 = vmatpush1.msra.mxu0 %v557
    %1331 = vmatprep.subr.mxu0 %v562
    %1332 = vmatpush1.msra.mxu0 %v561
    %1333 = vmatprep.subr.mxu0 %v566
    %1334 = vmatpush1.msra.mxu0 %v565
    %1335 = vmatprep.subr.mxu0 %v570
    %1336 = vmatpush1.msra.mxu0 %v569
    %1337 = vmatprep.subr.mxu0 %v574
    %1338 = vmatpush1.msra.mxu0 %v573
    %1339 = vmatprep.subr.mxu0 %v578
    %1340 = vmatpush1.msra.mxu0 %v577
    %1341 = vmatprep.subr.mxu0 %v582
    %1342 = vmatpush1.msra.mxu0 %v581
    %1343 = vmatprep.subr.mxu0 %v586
    %1344 = vmatpush1.msra.mxu0 %v585
    %1345 = vmatprep.subr.mxu0 %v590
    %1346 = vmatpush1.msra.mxu0 %v589
    %1347 = vmatprep.subr.mxu0 %v594
    %1348 = vmatpush1.msra.mxu0 %v593
    %1349 = vmatprep.subr.mxu0 %v598
    %1350 = vmatpush1.msra.mxu0 %v597
    %1351 = vmatprep.subr.mxu0 %v602
    %1352 = vmatpush1.msra.mxu0 %v601
    %1353 = vmatprep.subr.mxu0 %v606
    %1354 = vmatpush1.msra.mxu0 %v605
    %1355 = vmatprep.subr.mxu0 %v610
    %1356 = vmatpush1.msra.mxu0 %v609
    %1357 = vmatprep.subr.mxu0 %v614
    %1358 = vmatpush1.msra.mxu0 %v613
    %1359 = vmatprep.subr.mxu0 %v618
    %1360 = vmatpush1.msra.mxu0 %v617
    %1361 = vmatprep.subr.mxu0 %v622
    %1362 = vmatpush1.msra.mxu0 %v621
    %1363 = vmatprep.subr.mxu0 %v626
    %1364 = vmatpush1.msra.mxu0 %v625
    %1365 = vmatprep.subr.mxu0 %v630
    %1366 = vmatpush1.msra.mxu0 %v629
    %1367 = vmatprep.subr.mxu0 %v634
    %1368 = vmatpush1.msra.mxu0 %v633
    %1369 = vmatprep.subr.mxu0 %v638
    %1370 = vmatpush1.msra.mxu0 %v637
    %1371 = vmatprep.subr.mxu0 %v642
    %1372 = vmatpush1.msra.mxu0 %v641
    %1373 = vmatprep.subr.mxu0 %v646
    %1374 = vmatpush1.msra.mxu0 %v645
    %1375 = vmatprep.subr.mxu0 %v650
    %1376 = vmatpush1.msra.mxu0 %v649
    %1377 = vmatprep.subr.mxu0 %v654
    %1378 = vmatpush1.msra.mxu0 %v653
    %1379 = vmatprep.subr.mxu0 %v658
    %1380 = vmatpush1.msra.mxu0 %v657
    %1381 = vmatprep.subr.mxu0 %v662
    %1382 = vmatpush1.msra.mxu0 %v661
    %1383 = vmatprep.mubr.f32.mxu0 %v1000
    %1384 = vmatmul.mubr.f32.gmra.mrb[0].mxu0 %v992
    %v1385 = vpop.f32.mrb[0].mxu0
    %v1386 = vadd.f32 %v1315, %v1385
    %v1387 = vpop.f32.mrb[0].mxu0
    %v1388 = vadd.f32 %v1317, %v1387
    %1389 = vdwg.mxu0
    %1390 = vmatprep.subr.mxu0 %v666
    %1391 = vmatpush1.msra.mxu0 %v665
    %1392 = vmatprep.subr.mxu0 %v670
    %1393 = vmatpush1.msra.mxu0 %v669
    %1394 = vmatprep.subr.mxu0 %v674
    %1395 = vmatpush1.msra.mxu0 %v673
    %1396 = vmatprep.subr.mxu0 %v678
    %1397 = vmatpush1.msra.mxu0 %v677
    %1398 = vmatprep.subr.mxu0 %v682
    %1399 = vmatpush1.msra.mxu0 %v681
    %1400 = vmatprep.subr.mxu0 %v686
    %1401 = vmatpush1.msra.mxu0 %v685
    %1402 = vmatprep.subr.mxu0 %v690
    %1403 = vmatpush1.msra.mxu0 %v689
    %1404 = vmatprep.subr.mxu0 %v694
    %1405 = vmatpush1.msra.mxu0 %v693
    %1406 = vmatprep.subr.mxu0 %v698
    %1407 = vmatpush1.msra.mxu0 %v697
    %1408 = vmatprep.subr.mxu0 %v702
    %1409 = vmatpush1.msra.mxu0 %v701
    %1410 = vmatprep.subr.mxu0 %v706
    %1411 = vmatpush1.msra.mxu0 %v705
    %1412 = vmatprep.subr.mxu0 %v710
    %1413 = vmatpush1.msra.mxu0 %v709
    %1414 = vmatprep.subr.mxu0 %v714
    %1415 = vmatpush1.msra.mxu0 %v713
    %1416 = vmatprep.subr.mxu0 %v718
    %1417 = vmatpush1.msra.mxu0 %v717
    %1418 = vmatprep.subr.mxu0 %v722
    %1419 = vmatpush1.msra.mxu0 %v721
    %1420 = vmatprep.subr.mxu0 %v726
    %1421 = vmatpush1.msra.mxu0 %v725
    %1422 = vmatprep.subr.mxu0 %v730
    %1423 = vmatpush1.msra.mxu0 %v729
    %1424 = vmatprep.subr.mxu0 %v734
    %1425 = vmatpush1.msra.mxu0 %v733
    %1426 = vmatprep.subr.mxu0 %v738
    %1427 = vmatpush1.msra.mxu0 %v737
    %1428 = vmatprep.subr.mxu0 %v742
    %1429 = vmatpush1.msra.mxu0 %v741
    %1430 = vmatprep.subr.mxu0 %v746
    %1431 = vmatpush1.msra.mxu0 %v745
    %1432 = vmatprep.subr.mxu0 %v750
    %1433 = vmatpush1.msra.mxu0 %v749
    %1434 = vmatprep.subr.mxu0 %v754
    %1435 = vmatpush1.msra.mxu0 %v753
    %1436 = vmatprep.subr.mxu0 %v758
    %1437 = vmatpush1.msra.mxu0 %v757
    %1438 = vmatprep.subr.mxu0 %v762
    %1439 = vmatpush1.msra.mxu0 %v761
    %1440 = vmatprep.subr.mxu0 %v766
    %1441 = vmatpush1.msra.mxu0 %v765
    %1442 = vmatprep.subr.mxu0 %v770
    %1443 = vmatpush1.msra.mxu0 %v769
    %1444 = vmatprep.subr.mxu0 %v774
    %1445 = vmatpush1.msra.mxu0 %v773
    %1446 = vmatprep.subr.mxu0 %v778
    %1447 = vmatpush1.msra.mxu0 %v777
    %1448 = vmatprep.subr.mxu0 %v782
    %1449 = vmatpush1.msra.mxu0 %v781
    %1450 = vmatprep.subr.mxu0 %v786
    %1451 = vmatpush1.msra.mxu0 %v785
    %1452 = vmatprep.subr.mxu0 %v790
    %1453 = vmatpush1.msra.mxu0 %v789
    %1454 = vmatprep.mubr.f32.mxu0 %v1001
    %1455 = vmatmul.mubr.f32.gmra.mrb[0].mxu0 %v999
    %v1456 = vpop.f32.mrb[0].mxu0
    %v1457 = vadd.f32 %v1386, %v1456
    %v1458 = vpop.f32.mrb[0].mxu0
    %v1459 = vadd.f32 %v1388, %v1458
    %1460 = vdwg.mxu0
    %1461 = vmatprep.subr.mxu0 %v794
    %1462 = vmatpush1.msra.mxu0 %v793
    %1463 = vmatprep.subr.mxu0 %v798
    %1464 = vmatpush1.msra.mxu0 %v797
    %1465 = vmatprep.subr.mxu0 %v802
    %1466 = vmatpush1.msra.mxu0 %v801
    %1467 = vmatprep.subr.mxu0 %v806
    %1468 = vmatpush1.msra.mxu0 %v805
    %1469 = vmatprep.subr.mxu0 %v810
    %1470 = vmatpush1.msra.mxu0 %v809
    %1471 = vmatprep.subr.mxu0 %v814
    %1472 = vmatpush1.msra.mxu0 %v813
    %1473 = vmatprep.subr.mxu0 %v818
    %1474 = vmatpush1.msra.mxu0 %v817
    %1475 = vmatprep.subr.mxu0 %v822
    %1476 = vmatpush1.msra.mxu0 %v821
    %1477 = vmatprep.subr.mxu0 %v826
    %1478 = vmatpush1.msra.mxu0 %v825
    %1479 = vmatprep.subr.mxu0 %v830
    %1480 = vmatpush1.msra.mxu0 %v829
    %1481 = vmatprep.subr.mxu0 %v834
    %1482 = vmatpush1.msra.mxu0 %v833
    %1483 = vmatprep.subr.mxu0 %v838
    %1484 = vmatpush1.msra.mxu0 %v837
    %1485 = vmatprep.subr.mxu0 %v842
    %1486 = vmatpush1.msra.mxu0 %v841
    %1487 = vmatprep.subr.mxu0 %v846
    %1488 = vmatpush1.msra.mxu0 %v845
    %1489 = vmatprep.subr.mxu0 %v850
    %1490 = vmatpush1.msra.mxu0 %v849
    %1491 = vmatprep.subr.mxu0 %v854
    %1492 = vmatpush1.msra.mxu0 %v853
    %1493 = vmatprep.subr.mxu0 %v858
    %1494 = vmatpush1.msra.mxu0 %v857
    %1495 = vmatprep.subr.mxu0 %v862
    %1496 = vmatpush1.msra.mxu0 %v861
    %1497 = vmatprep.subr.mxu0 %v866
    %1498 = vmatpush1.msra.mxu0 %v865
    %1499 = vmatprep.subr.mxu0 %v870
    %1500 = vmatpush1.msra.mxu0 %v869
    %1501 = vmatprep.subr.mxu0 %v874
    %1502 = vmatpush1.msra.mxu0 %v873
    %1503 = vmatprep.subr.mxu0 %v878
    %1504 = vmatpush1.msra.mxu0 %v877
    %1505 = vmatprep.subr.mxu0 %v882
    %1506 = vmatpush1.msra.mxu0 %v881
    %1507 = vmatprep.subr.mxu0 %v886
    %1508 = vmatpush1.msra.mxu0 %v885
    %1509 = vmatprep.subr.mxu0 %v890
    %1510 = vmatpush1.msra.mxu0 %v889
    %1511 = vmatprep.subr.mxu0 %v894
    %1512 = vmatpush1.msra.mxu0 %v893
    %1513 = vmatprep.subr.mxu0 %v898
    %1514 = vmatpush1.msra.mxu0 %v897
    %1515 = vmatprep.subr.mxu0 %v902
    %1516 = vmatpush1.msra.mxu0 %v901
    %1517 = vmatprep.subr.mxu0 %v906
    %1518 = vmatpush1.msra.mxu0 %v905
    %1519 = vmatprep.subr.mxu0 %v910
    %1520 = vmatpush1.msra.mxu0 %v909
    %1521 = vmatprep.subr.mxu0 %v914
    %1522 = vmatpush1.msra.mxu0 %v913
    %1523 = vmatprep.subr.mxu0 %v918
    %1524 = vmatpush1.msra.mxu0 %v917
    %1525 = vmatprep.mubr.f32.mxu0 %v1017
    %1526 = vmatmul.mubr.f32.gmra.mrb[0].mxu0 %v1009
    %v1527 = vpop.f32.mrb[0].mxu0
    %v1528 = vadd.f32 %v1457, %v1527
    %v1529 = vpop.f32.mrb[0].mxu0
    %v1530 = vadd.f32 %v1459, %v1529
    %1531 = vdwg.mxu0
    %1532 = vmatprep.subr.mxu0 %v922
    %1533 = vmatpush1.msra.mxu0 %v921
    %1534 = vmatprep.subr.mxu0 0.0
    %1535 = vmatpush1.msra.mxu0 0.0
    %1536 = vmatprep.subr.mxu0 0.0
    %1537 = vmatpush1.msra.mxu0 0.0
    %1538 = vmatprep.subr.mxu0 0.0
    %1539 = vmatpush1.msra.mxu0 0.0
    %1540 = vmatprep.subr.mxu0 0.0
    %1541 = vmatpush1.msra.mxu0 0.0
    %1542 = vmatprep.subr.mxu0 0.0
    %1543 = vmatpush1.msra.mxu0 0.0
    %1544 = vmatprep.subr.mxu0 0.0
    %1545 = vmatpush1.msra.mxu0 0.0
    %1546 = vmatprep.subr.mxu0 0.0
    %1547 = vmatpush1.msra.mxu0 0.0
    %1548 = vmatprep.subr.mxu0 0.0
    %1549 = vmatpush1.msra.mxu0 0.0
    %1550 = vmatprep.subr.mxu0 0.0
    %1551 = vmatpush1.msra.mxu0 0.0
    %1552 = vmatprep.subr.mxu0 0.0
    %1553 = vmatpush1.msra.mxu0 0.0
    %1554 = vmatprep.subr.mxu0 0.0
    %1555 = vmatpush1.msra.mxu0 0.0
    %1556 = vmatprep.subr.mxu0 0.0
    %1557 = vmatpush1.msra.mxu0 0.0
    %1558 = vmatprep.subr.mxu0 0.0
    %1559 = vmatpush1.msra.mxu0 0.0
    %1560 = vmatprep.subr.mxu0 0.0
    %1561 = vmatpush1.msra.mxu0 0.0
    %1562 = vmatprep.subr.mxu0 0.0
    %1563 = vmatpush1.msra.mxu0 0.0
    %1564 = vmatprep.subr.mxu0 0.0
    %1565 = vmatpush1.msra.mxu0 0.0
    %1566 = vmatprep.subr.mxu0 0.0
    %1567 = vmatpush1.msra.mxu0 0.0
    %1568 = vmatprep.subr.mxu0 0.0
    %1569 = vmatpush1.msra.mxu0 0.0
    %1570 = vmatprep.subr.mxu0 0.0
    %1571 = vmatpush1.msra.mxu0 0.0
    %1572 = vmatprep.subr.mxu0 0.0
    %1573 = vmatpush1.msra.mxu0 0.0
    %1574 = vmatprep.subr.mxu0 0.0
    %1575 = vmatpush1.msra.mxu0 0.0
    %1576 = vmatprep.subr.mxu0 0.0
    %1577 = vmatpush1.msra.mxu0 0.0
    %1578 = vmatprep.subr.mxu0 0.0
    %1579 = vmatpush1.msra.mxu0 0.0
    %1580 = vmatprep.subr.mxu0 0.0
    %1581 = vmatpush1.msra.mxu0 0.0
    %1582 = vmatprep.subr.mxu0 0.0
    %1583 = vmatpush1.msra.mxu0 0.0
    %1584 = vmatprep.subr.mxu0 0.0
    %1585 = vmatpush1.msra.mxu0 0.0
    %1586 = vmatprep.subr.mxu0 0.0
    %1587 = vmatpush1.msra.mxu0 0.0
    %1588 = vmatprep.subr.mxu0 0.0
    %1589 = vmatpush1.msra.mxu0 0.0
    %1590 = vmatprep.subr.mxu0 0.0
    %1591 = vmatpush1.msra.mxu0 0.0
    %1592 = vmatprep.subr.mxu0 0.0
    %1593 = vmatpush1.msra.mxu0 0.0
    %1594 = vmatprep.subr.mxu0 0.0
    %1595 = vmatpush1.msra.mxu0 0.0
    %1596 = vmatprep.mubr.f32.mxu0 0.0
    %1597 = vmatmul.mubr.f32.gmra.mrb[0].mxu0 %v1033
    %v1598 = vpop.f32.mrb[0].mxu0
    %v1599 = vadd.f32 %v1528, %v1598
    %v1600 = vpop.f32.mrb[0].mxu0
    %v1601 = vadd.f32 %v1530, %v1600
    %1602 = vdwg.mxu0
    %1603 = vmatprep.subr.mxu0 %v28
    %1604 = vmatpush1.msra.mxu0 %v27
    %1605 = vmatprep.subr.mxu0 %v32
    %1606 = vmatpush1.msra.mxu0 %v31
    %1607 = vmatprep.subr.mxu0 %v36
    %1608 = vmatpush1.msra.mxu0 %v35
    %1609 = vmatprep.subr.mxu0 %v40
    %1610 = vmatpush1.msra.mxu0 %v39
    %1611 = vmatprep.subr.mxu0 %v44
    %1612 = vmatpush1.msra.mxu0 %v43
    %1613 = vmatprep.subr.mxu0 %v48
    %1614 = vmatpush1.msra.mxu0 %v47
    %1615 = vmatprep.subr.mxu0 %v52
    %1616 = vmatpush1.msra.mxu0 %v51
    %1617 = vmatprep.subr.mxu0 %v56
    %1618 = vmatpush1.msra.mxu0 %v55
    %1619 = vmatprep.subr.mxu0 %v60
    %1620 = vmatpush1.msra.mxu0 %v59
    %1621 = vmatprep.subr.mxu0 %v64
    %1622 = vmatpush1.msra.mxu0 %v63
    %1623 = vmatprep.subr.mxu0 %v68
    %1624 = vmatpush1.msra.mxu0 %v67
    %1625 = vmatprep.subr.mxu0 %v72
    %1626 = vmatpush1.msra.mxu0 %v71
    %1627 = vmatprep.subr.mxu0 %v76
    %1628 = vmatpush1.msra.mxu0 %v75
    %1629 = vmatprep.subr.mxu0 %v80
    %1630 = vmatpush1.msra.mxu0 %v79
    %1631 = vmatprep.subr.mxu0 %v84
    %1632 = vmatpush1.msra.mxu0 %v83
    %1633 = vmatprep.subr.mxu0 %v88
    %1634 = vmatpush1.msra.mxu0 %v87
    %1635 = vmatprep.subr.mxu0 %v92
    %1636 = vmatpush1.msra.mxu0 %v91
    %1637 = vmatprep.subr.mxu0 %v96
    %1638 = vmatpush1.msra.mxu0 %v95
    %1639 = vmatprep.subr.mxu0 %v100
    %1640 = vmatpush1.msra.mxu0 %v99
    %1641 = vmatprep.subr.mxu0 %v104
    %1642 = vmatpush1.msra.mxu0 %v103
    %1643 = vmatprep.subr.mxu0 %v108
    %1644 = vmatpush1.msra.mxu0 %v107
    %1645 = vmatprep.subr.mxu0 %v112
    %1646 = vmatpush1.msra.mxu0 %v111
    %1647 = vmatprep.subr.mxu0 %v116
    %1648 = vmatpush1.msra.mxu0 %v115
    %1649 = vmatprep.subr.mxu0 %v120
    %1650 = vmatpush1.msra.mxu0 %v119
    %1651 = vmatprep.subr.mxu0 %v124
    %1652 = vmatpush1.msra.mxu0 %v123
    %1653 = vmatprep.subr.mxu0 %v128
    %1654 = vmatpush1.msra.mxu0 %v127
    %1655 = vmatprep.subr.mxu0 %v132
    %1656 = vmatpush1.msra.mxu0 %v131
    %1657 = vmatprep.subr.mxu0 %v136
    %1658 = vmatpush1.msra.mxu0 %v135
    %1659 = vmatprep.subr.mxu0 %v140
    %1660 = vmatpush1.msra.mxu0 %v139
    %1661 = vmatprep.subr.mxu0 %v144
    %1662 = vmatpush1.msra.mxu0 %v143
    %1663 = vmatprep.subr.mxu0 %v148
    %1664 = vmatpush1.msra.mxu0 %v147
    %1665 = vmatprep.subr.mxu0 %v152
    %1666 = vmatpush1.msra.mxu0 %v151
    %1667 = vmatprep.mubr.f32.mxu0 %v966
    %1668 = vmatmul.mubr.f32.gmra.mrb[0].mxu0 %v958
    %v1669 = vpop.f32.mrb[0].mxu0
    %v1670 = vadd.f32 %v938, %v1669
    %v1671 = vpop.f32.mrb[0].mxu0
    %v1672 = vadd.f32 %v942, %v1671
    %1673 = vdwg.mxu0
    %1674 = vmatprep.subr.mxu0 %v156
    %1675 = vmatpush1.msra.mxu0 %v155
    %1676 = vmatprep.subr.mxu0 %v160
    %1677 = vmatpush1.msra.mxu0 %v159
    %1678 = vmatprep.subr.mxu0 %v164
    %1679 = vmatpush1.msra.mxu0 %v163
    %1680 = vmatprep.subr.mxu0 %v168
    %1681 = vmatpush1.msra.mxu0 %v167
    %1682 = vmatprep.subr.mxu0 %v172
    %1683 = vmatpush1.msra.mxu0 %v171
    %1684 = vmatprep.subr.mxu0 %v176
    %1685 = vmatpush1.msra.mxu0 %v175
    %1686 = vmatprep.subr.mxu0 %v180
    %1687 = vmatpush1.msra.mxu0 %v179
    %1688 = vmatprep.subr.mxu0 %v184
    %1689 = vmatpush1.msra.mxu0 %v183
    %1690 = vmatprep.subr.mxu0 %v188
    %1691 = vmatpush1.msra.mxu0 %v187
    %1692 = vmatprep.subr.mxu0 %v192
    %1693 = vmatpush1.msra.mxu0 %v191
    %1694 = vmatprep.subr.mxu0 %v196
    %1695 = vmatpush1.msra.mxu0 %v195
    %1696 = vmatprep.subr.mxu0 %v200
    %1697 = vmatpush1.msra.mxu0 %v199
    %1698 = vmatprep.subr.mxu0 %v204
    %1699 = vmatpush1.msra.mxu0 %v203
    %1700 = vmatprep.subr.mxu0 %v208
    %1701 = vmatpush1.msra.mxu0 %v207
    %1702 = vmatprep.subr.mxu0 %v212
    %1703 = vmatpush1.msra.mxu0 %v211
    %1704 = vmatprep.subr.mxu0 %v216
    %1705 = vmatpush1.msra.mxu0 %v215
    %1706 = vmatprep.subr.mxu0 %v220
    %1707 = vmatpush1.msra.mxu0 %v219
    %1708 = vmatprep.subr.mxu0 %v224
    %1709 = vmatpush1.msra.mxu0 %v223
    %1710 = vmatprep.subr.mxu0 %v228
    %1711 = vmatpush1.msra.mxu0 %v227
    %1712 = vmatprep.subr.mxu0 %v232
    %1713 = vmatpush1.msra.mxu0 %v231
    %1714 = vmatprep.subr.mxu0 %v236
    %1715 = vmatpush1.msra.mxu0 %v235
    %1716 = vmatprep.subr.mxu0 %v240
    %1717 = vmatpush1.msra.mxu0 %v239
    %1718 = vmatprep.subr.mxu0 %v244
    %1719 = vmatpush1.msra.mxu0 %v243
    %1720 = vmatprep.subr.mxu0 %v248
    %1721 = vmatpush1.msra.mxu0 %v247
    %1722 = vmatprep.subr.mxu0 %v252
    %1723 = vmatpush1.msra.mxu0 %v251
    %1724 = vmatprep.subr.mxu0 %v256
    %1725 = vmatpush1.msra.mxu0 %v255
    %1726 = vmatprep.subr.mxu0 %v260
    %1727 = vmatpush1.msra.mxu0 %v259
    %1728 = vmatprep.subr.mxu0 %v264
    %1729 = vmatpush1.msra.mxu0 %v263
    %1730 = vmatprep.subr.mxu0 %v268
    %1731 = vmatpush1.msra.mxu0 %v267
    %1732 = vmatprep.subr.mxu0 %v272
    %1733 = vmatpush1.msra.mxu0 %v271
    %1734 = vmatprep.subr.mxu0 %v276
    %1735 = vmatpush1.msra.mxu0 %v275
    %1736 = vmatprep.subr.mxu0 %v280
    %1737 = vmatpush1.msra.mxu0 %v279
    %1738 = vmatprep.mubr.f32.mxu0 %v967
    %1739 = vmatmul.mubr.f32.gmra.mrb[0].mxu0 %v965
    %v1740 = vpop.f32.mrb[0].mxu0
    %v1741 = vadd.f32 %v1670, %v1740
    %v1742 = vpop.f32.mrb[0].mxu0
    %v1743 = vadd.f32 %v1672, %v1742
    %1744 = vdwg.mxu0
    %1745 = vmatprep.subr.mxu0 %v284
    %1746 = vmatpush1.msra.mxu0 %v283
    %1747 = vmatprep.subr.mxu0 %v288
    %1748 = vmatpush1.msra.mxu0 %v287
    %1749 = vmatprep.subr.mxu0 %v292
    %1750 = vmatpush1.msra.mxu0 %v291
    %1751 = vmatprep.subr.mxu0 %v296
    %1752 = vmatpush1.msra.mxu0 %v295
    %1753 = vmatprep.subr.mxu0 %v300
    %1754 = vmatpush1.msra.mxu0 %v299
    %1755 = vmatprep.subr.mxu0 %v304
    %1756 = vmatpush1.msra.mxu0 %v303
    %1757 = vmatprep.subr.mxu0 %v308
    %1758 = vmatpush1.msra.mxu0 %v307
    %1759 = vmatprep.subr.mxu0 %v312
    %1760 = vmatpush1.msra.mxu0 %v311
    %1761 = vmatprep.subr.mxu0 %v316
    %1762 = vmatpush1.msra.mxu0 %v315
    %1763 = vmatprep.subr.mxu0 %v320
    %1764 = vmatpush1.msra.mxu0 %v319
    %1765 = vmatprep.subr.mxu0 %v324
    %1766 = vmatpush1.msra.mxu0 %v323
    %1767 = vmatprep.subr.mxu0 %v328
    %1768 = vmatpush1.msra.mxu0 %v327
    %1769 = vmatprep.subr.mxu0 %v332
    %1770 = vmatpush1.msra.mxu0 %v331
    %1771 = vmatprep.subr.mxu0 %v336
    %1772 = vmatpush1.msra.mxu0 %v335
    %1773 = vmatprep.subr.mxu0 %v340
    %1774 = vmatpush1.msra.mxu0 %v339
    %1775 = vmatprep.subr.mxu0 %v344
    %1776 = vmatpush1.msra.mxu0 %v343
    %1777 = vmatprep.subr.mxu0 %v348
    %1778 = vmatpush1.msra.mxu0 %v347
    %1779 = vmatprep.subr.mxu0 %v352
    %1780 = vmatpush1.msra.mxu0 %v351
    %1781 = vmatprep.subr.mxu0 %v356
    %1782 = vmatpush1.msra.mxu0 %v355
    %1783 = vmatprep.subr.mxu0 %v360
    %1784 = vmatpush1.msra.mxu0 %v359
    %1785 = vmatprep.subr.mxu0 %v364
    %1786 = vmatpush1.msra.mxu0 %v363
    %1787 = vmatprep.subr.mxu0 %v368
    %1788 = vmatpush1.msra.mxu0 %v367
    %1789 = vmatprep.subr.mxu0 %v372
    %1790 = vmatpush1.msra.mxu0 %v371
    %1791 = vmatprep.subr.mxu0 %v376
    %1792 = vmatpush1.msra.mxu0 %v375
    %1793 = vmatprep.subr.mxu0 %v380
    %1794 = vmatpush1.msra.mxu0 %v379
    %1795 = vmatprep.subr.mxu0 %v384
    %1796 = vmatpush1.msra.mxu0 %v383
    %1797 = vmatprep.subr.mxu0 %v388
    %1798 = vmatpush1.msra.mxu0 %v387
    %1799 = vmatprep.subr.mxu0 %v392
    %1800 = vmatpush1.msra.mxu0 %v391
    %1801 = vmatprep.subr.mxu0 %v396
    %1802 = vmatpush1.msra.mxu0 %v395
    %1803 = vmatprep.subr.mxu0 %v400
    %1804 = vmatpush1.msra.mxu0 %v399
    %1805 = vmatprep.subr.mxu0 %v404
    %1806 = vmatpush1.msra.mxu0 %v403
    %1807 = vmatprep.subr.mxu0 %v408
    %1808 = vmatpush1.msra.mxu0 %v407
    %1809 = vmatprep.mubr.f32.mxu0 %v983
    %1810 = vmatmul.mubr.f32.gmra.mrb[0].mxu0 %v975
    %v1811 = vpop.f32.mrb[0].mxu0
    %v1812 = vadd.f32 %v1741, %v1811
    %v1813 = vpop.f32.mrb[0].mxu0
    %v1814 = vadd.f32 %v1743, %v1813
    %1815 = vdwg.mxu0
    %1816 = vmatprep.subr.mxu0 %v412
    %1817 = vmatpush1.msra.mxu0 %v411
    %1818 = vmatprep.subr.mxu0 %v416
    %1819 = vmatpush1.msra.mxu0 %v415
    %1820 = vmatprep.subr.mxu0 %v420
    %1821 = vmatpush1.msra.mxu0 %v419
    %1822 = vmatprep.subr.mxu0 %v424
    %1823 = vmatpush1.msra.mxu0 %v423
    %1824 = vmatprep.subr.mxu0 %v428
    %1825 = vmatpush1.msra.mxu0 %v427
    %1826 = vmatprep.subr.mxu0 %v432
    %1827 = vmatpush1.msra.mxu0 %v431
    %1828 = vmatprep.subr.mxu0 %v436
    %1829 = vmatpush1.msra.mxu0 %v435
    %1830 = vmatprep.subr.mxu0 %v440
    %1831 = vmatpush1.msra.mxu0 %v439
    %1832 = vmatprep.subr.mxu0 %v444
    %1833 = vmatpush1.msra.mxu0 %v443
    %1834 = vmatprep.subr.mxu0 %v448
    %1835 = vmatpush1.msra.mxu0 %v447
    %1836 = vmatprep.subr.mxu0 %v452
    %1837 = vmatpush1.msra.mxu0 %v451
    %1838 = vmatprep.subr.mxu0 %v456
    %1839 = vmatpush1.msra.mxu0 %v455
    %1840 = vmatprep.subr.mxu0 %v460
    %1841 = vmatpush1.msra.mxu0 %v459
    %1842 = vmatprep.subr.mxu0 %v464
    %1843 = vmatpush1.msra.mxu0 %v463
    %1844 = vmatprep.subr.mxu0 %v468
    %1845 = vmatpush1.msra.mxu0 %v467
    %1846 = vmatprep.subr.mxu0 %v472
    %1847 = vmatpush1.msra.mxu0 %v471
    %1848 = vmatprep.subr.mxu0 %v476
    %1849 = vmatpush1.msra.mxu0 %v475
    %1850 = vmatprep.subr.mxu0 %v480
    %1851 = vmatpush1.msra.mxu0 %v479
    %1852 = vmatprep.subr.mxu0 %v484
    %1853 = vmatpush1.msra.mxu0 %v483
    %1854 = vmatprep.subr.mxu0 %v488
    %1855 = vmatpush1.msra.mxu0 %v487
    %1856 = vmatprep.subr.mxu0 %v492
    %1857 = vmatpush1.msra.mxu0 %v491
    %1858 = vmatprep.subr.mxu0 %v496
    %1859 = vmatpush1.msra.mxu0 %v495
    %1860 = vmatprep.subr.mxu0 %v500
    %1861 = vmatpush1.msra.mxu0 %v499
    %1862 = vmatprep.subr.mxu0 %v504
    %1863 = vmatpush1.msra.mxu0 %v503
    %1864 = vmatprep.subr.mxu0 %v508
    %1865 = vmatpush1.msra.mxu0 %v507
    %1866 = vmatprep.subr.mxu0 %v512
    %1867 = vmatpush1.msra.mxu0 %v511
    %1868 = vmatprep.subr.mxu0 %v516
    %1869 = vmatpush1.msra.mxu0 %v515
    %1870 = vmatprep.subr.mxu0 %v520
    %1871 = vmatpush1.msra.mxu0 %v519
    %1872 = vmatprep.subr.mxu0 %v524
    %1873 = vmatpush1.msra.mxu0 %v523
    %1874 = vmatprep.subr.mxu0 %v528
    %1875 = vmatpush1.msra.mxu0 %v527
    %1876 = vmatprep.subr.mxu0 %v532
    %1877 = vmatpush1.msra.mxu0 %v531
    %1878 = vmatprep.subr.mxu0 %v536
    %1879 = vmatpush1.msra.mxu0 %v535
    %1880 = vmatprep.mubr.f32.mxu0 %v984
    %1881 = vmatmul.mubr.f32.gmra.mrb[0].mxu0 %v982
    %v1882 = vpop.f32.mrb[0].mxu0
    %v1883 = vadd.f32 %v1812, %v1882
    %v1884 = vpop.f32.mrb[0].mxu0
    %v1885 = vadd.f32 %v1814, %v1884
    %1886 = vdwg.mxu0
    %1887 = vmatprep.subr.mxu0 %v540
    %1888 = vmatpush1.msra.mxu0 %v539
    %1889 = vmatprep.subr.mxu0 %v544
    %1890 = vmatpush1.msra.mxu0 %v543
    %1891 = vmatprep.subr.mxu0 %v548
    %1892 = vmatpush1.msra.mxu0 %v547
    %1893 = vmatprep.subr.mxu0 %v552
    %1894 = vmatpush1.msra.mxu0 %v551
    %1895 = vmatprep.subr.mxu0 %v556
    %1896 = vmatpush1.msra.mxu0 %v555
    %1897 = vmatprep.subr.mxu0 %v560
    %1898 = vmatpush1.msra.mxu0 %v559
    %1899 = vmatprep.subr.mxu0 %v564
    %1900 = vmatpush1.msra.mxu0 %v563
    %1901 = vmatprep.subr.mxu0 %v568
    %1902 = vmatpush1.msra.mxu0 %v567
    %1903 = vmatprep.subr.mxu0 %v572
    %1904 = vmatpush1.msra.mxu0 %v571
    %1905 = vmatprep.subr.mxu0 %v576
    %1906 = vmatpush1.msra.mxu0 %v575
    %1907 = vmatprep.subr.mxu0 %v580
    %1908 = vmatpush1.msra.mxu0 %v579
    %1909 = vmatprep.subr.mxu0 %v584
    %1910 = vmatpush1.msra.mxu0 %v583
    %1911 = vmatprep.subr.mxu0 %v588
    %1912 = vmatpush1.msra.mxu0 %v587
    %1913 = vmatprep.subr.mxu0 %v592
    %1914 = vmatpush1.msra.mxu0 %v591
    %1915 = vmatprep.subr.mxu0 %v596
    %1916 = vmatpush1.msra.mxu0 %v595
    %1917 = vmatprep.subr.mxu0 %v600
    %1918 = vmatpush1.msra.mxu0 %v599
    %1919 = vmatprep.subr.mxu0 %v604
    %1920 = vmatpush1.msra.mxu0 %v603
    %1921 = vmatprep.subr.mxu0 %v608
    %1922 = vmatpush1.msra.mxu0 %v607
    %1923 = vmatprep.subr.mxu0 %v612
    %1924 = vmatpush1.msra.mxu0 %v611
    %1925 = vmatprep.subr.mxu0 %v616
    %1926 = vmatpush1.msra.mxu0 %v615
    %1927 = vmatprep.subr.mxu0 %v620
    %1928 = vmatpush1.msra.mxu0 %v619
    %1929 = vmatprep.subr.mxu0 %v624
    %1930 = vmatpush1.msra.mxu0 %v623
    %1931 = vmatprep.subr.mxu0 %v628
    %1932 = vmatpush1.msra.mxu0 %v627
    %1933 = vmatprep.subr.mxu0 %v632
    %1934 = vmatpush1.msra.mxu0 %v631
    %1935 = vmatprep.subr.mxu0 %v636
    %1936 = vmatpush1.msra.mxu0 %v635
    %1937 = vmatprep.subr.mxu0 %v640
    %1938 = vmatpush1.msra.mxu0 %v639
    %1939 = vmatprep.subr.mxu0 %v644
    %1940 = vmatpush1.msra.mxu0 %v643
    %1941 = vmatprep.subr.mxu0 %v648
    %1942 = vmatpush1.msra.mxu0 %v647
    %1943 = vmatprep.subr.mxu0 %v652
    %1944 = vmatpush1.msra.mxu0 %v651
    %1945 = vmatprep.subr.mxu0 %v656
    %1946 = vmatpush1.msra.mxu0 %v655
    %1947 = vmatprep.subr.mxu0 %v660
    %1948 = vmatpush1.msra.mxu0 %v659
    %1949 = vmatprep.subr.mxu0 %v664
    %1950 = vmatpush1.msra.mxu0 %v663
    %1951 = vmatprep.mubr.f32.mxu0 %v1000
    %1952 = vmatmul.mubr.f32.gmra.mrb[0].mxu0 %v992
    %v1953 = vpop.f32.mrb[0].mxu0
    %v1954 = vadd.f32 %v1883, %v1953
    %v1955 = vpop.f32.mrb[0].mxu0
    %v1956 = vadd.f32 %v1885, %v1955
    %1957 = vdwg.mxu0
    %1958 = vmatprep.subr.mxu0 %v668
    %1959 = vmatpush1.msra.mxu0 %v667
    %1960 = vmatprep.subr.mxu0 %v672
    %1961 = vmatpush1.msra.mxu0 %v671
    %1962 = vmatprep.subr.mxu0 %v676
    %1963 = vmatpush1.msra.mxu0 %v675
    %1964 = vmatprep.subr.mxu0 %v680
    %1965 = vmatpush1.msra.mxu0 %v679
    %1966 = vmatprep.subr.mxu0 %v684
    %1967 = vmatpush1.msra.mxu0 %v683
    %1968 = vmatprep.subr.mxu0 %v688
    %1969 = vmatpush1.msra.mxu0 %v687
    %1970 = vmatprep.subr.mxu0 %v692
    %1971 = vmatpush1.msra.mxu0 %v691
    %1972 = vmatprep.subr.mxu0 %v696
    %1973 = vmatpush1.msra.mxu0 %v695
    %1974 = vmatprep.subr.mxu0 %v700
    %1975 = vmatpush1.msra.mxu0 %v699
    %1976 = vmatprep.subr.mxu0 %v704
    %1977 = vmatpush1.msra.mxu0 %v703
    %1978 = vmatprep.subr.mxu0 %v708
    %1979 = vmatpush1.msra.mxu0 %v707
    %1980 = vmatprep.subr.mxu0 %v712
    %1981 = vmatpush1.msra.mxu0 %v711
    %1982 = vmatprep.subr.mxu0 %v716
    %1983 = vmatpush1.msra.mxu0 %v715
    %1984 = vmatprep.subr.mxu0 %v720
    %1985 = vmatpush1.msra.mxu0 %v719
    %1986 = vmatprep.subr.mxu0 %v724
    %1987 = vmatpush1.msra.mxu0 %v723
    %1988 = vmatprep.subr.mxu0 %v728
    %1989 = vmatpush1.msra.mxu0 %v727
    %1990 = vmatprep.subr.mxu0 %v732
    %1991 = vmatpush1.msra.mxu0 %v731
    %1992 = vmatprep.subr.mxu0 %v736
    %1993 = vmatpush1.msra.mxu0 %v735
    %1994 = vmatprep.subr.mxu0 %v740
    %1995 = vmatpush1.msra.mxu0 %v739
    %1996 = vmatprep.subr.mxu0 %v744
    %1997 = vmatpush1.msra.mxu0 %v743
    %1998 = vmatprep.subr.mxu0 %v748
    %1999 = vmatpush1.msra.mxu0 %v747
    %2000 = vmatprep.subr.mxu0 %v752
    %2001 = vmatpush1.msra.mxu0 %v751
    %2002 = vmatprep.subr.mxu0 %v756
    %2003 = vmatpush1.msra.mxu0 %v755
    %2004 = vmatprep.subr.mxu0 %v760
    %2005 = vmatpush1.msra.mxu0 %v759
    %2006 = vmatprep.subr.mxu0 %v764
    %2007 = vmatpush1.msra.mxu0 %v763
    %2008 = vmatprep.subr.mxu0 %v768
    %2009 = vmatpush1.msra.mxu0 %v767
    %2010 = vmatprep.subr.mxu0 %v772
    %2011 = vmatpush1.msra.mxu0 %v771
    %2012 = vmatprep.subr.mxu0 %v776
    %2013 = vmatpush1.msra.mxu0 %v775
    %2014 = vmatprep.subr.mxu0 %v780
    %2015 = vmatpush1.msra.mxu0 %v779
    %2016 = vmatprep.subr.mxu0 %v784
    %2017 = vmatpush1.msra.mxu0 %v783
    %2018 = vmatprep.subr.mxu0 %v788
    %2019 = vmatpush1.msra.mxu0 %v787
    %2020 = vmatprep.subr.mxu0 %v792
    %2021 = vmatpush1.msra.mxu0 %v791
    %2022 = vmatprep.mubr.f32.mxu0 %v1001
    %2023 = vmatmul.mubr.f32.gmra.mrb[0].mxu0 %v999
    %v2024 = vpop.f32.mrb[0].mxu0
    %v2025 = vadd.f32 %v1954, %v2024
    %v2026 = vpop.f32.mrb[0].mxu0
    %v2027 = vadd.f32 %v1956, %v2026
    %2028 = vdwg.mxu0
    %2029 = vmatprep.subr.mxu0 %v796
    %2030 = vmatpush1.msra.mxu0 %v795
    %2031 = vmatprep.subr.mxu0 %v800
    %2032 = vmatpush1.msra.mxu0 %v799
    %2033 = vmatprep.subr.mxu0 %v804
    %2034 = vmatpush1.msra.mxu0 %v803
    %2035 = vmatprep.subr.mxu0 %v808
    %2036 = vmatpush1.msra.mxu0 %v807
    %2037 = vmatprep.subr.mxu0 %v812
    %2038 = vmatpush1.msra.mxu0 %v811
    %2039 = vmatprep.subr.mxu0 %v816
    %2040 = vmatpush1.msra.mxu0 %v815
    %2041 = vmatprep.subr.mxu0 %v820
    %2042 = vmatpush1.msra.mxu0 %v819
    %2043 = vmatprep.subr.mxu0 %v824
    %2044 = vmatpush1.msra.mxu0 %v823
    %2045 = vmatprep.subr.mxu0 %v828
    %2046 = vmatpush1.msra.mxu0 %v827
    %2047 = vmatprep.subr.mxu0 %v832
    %2048 = vmatpush1.msra.mxu0 %v831
    %2049 = vmatprep.subr.mxu0 %v836
    %2050 = vmatpush1.msra.mxu0 %v835
    %2051 = vmatprep.subr.mxu0 %v840
    %2052 = vmatpush1.msra.mxu0 %v839
    %2053 = vmatprep.subr.mxu0 %v844
    %2054 = vmatpush1.msra.mxu0 %v843
    %2055 = vmatprep.subr.mxu0 %v848
    %2056 = vmatpush1.msra.mxu0 %v847
    %2057 = vmatprep.subr.mxu0 %v852
    %2058 = vmatpush1.msra.mxu0 %v851
    %2059 = vmatprep.subr.mxu0 %v856
    %2060 = vmatpush1.msra.mxu0 %v855
    %2061 = vmatprep.subr.mxu0 %v860
    %2062 = vmatpush1.msra.mxu0 %v859
    %2063 = vmatprep.subr.mxu0 %v864
    %2064 = vmatpush1.msra.mxu0 %v863
    %2065 = vmatprep.subr.mxu0 %v868
    %2066 = vmatpush1.msra.mxu0 %v867
    %2067 = vmatprep.subr.mxu0 %v872
    %2068 = vmatpush1.msra.mxu0 %v871
    %2069 = vmatprep.subr.mxu0 %v876
    %2070 = vmatpush1.msra.mxu0 %v875
    %2071 = vmatprep.subr.mxu0 %v880
    %2072 = vmatpush1.msra.mxu0 %v879
    %2073 = vmatprep.subr.mxu0 %v884
    %2074 = vmatpush1.msra.mxu0 %v883
    %2075 = vmatprep.subr.mxu0 %v888
    %2076 = vmatpush1.msra.mxu0 %v887
    %2077 = vmatprep.subr.mxu0 %v892
    %2078 = vmatpush1.msra.mxu0 %v891
    %2079 = vmatprep.subr.mxu0 %v896
    %2080 = vmatpush1.msra.mxu0 %v895
    %2081 = vmatprep.subr.mxu0 %v900
    %2082 = vmatpush1.msra.mxu0 %v899
    %2083 = vmatprep.subr.mxu0 %v904
    %2084 = vmatpush1.msra.mxu0 %v903
    %2085 = vmatprep.subr.mxu0 %v908
    %2086 = vmatpush1.msra.mxu0 %v907
    %2087 = vmatprep.subr.mxu0 %v912
    %2088 = vmatpush1.msra.mxu0 %v911
    %2089 = vmatprep.subr.mxu0 %v916
    %2090 = vmatpush1.msra.mxu0 %v915
    %2091 = vmatprep.subr.mxu0 %v920
    %2092 = vmatpush1.msra.mxu0 %v919
    %2093 = vmatprep.mubr.f32.mxu0 %v1017
    %2094 = vmatmul.mubr.f32.gmra.mrb[0].mxu0 %v1009
    %v2095 = vpop.f32.mrb[0].mxu0
    %v2096 = vadd.f32 %v2025, %v2095
    %v2097 = vpop.f32.mrb[0].mxu0
    %v2098 = vadd.f32 %v2027, %v2097
    %2099 = vdwg.mxu0
    %2100 = vmatprep.subr.mxu0 %v924
    %2101 = vmatpush1.msra.mxu0 %v923
    %2102 = vmatprep.subr.mxu0 0.0
    %2103 = vmatpush1.msra.mxu0 0.0
    %2104 = vmatprep.subr.mxu0 0.0
    %2105 = vmatpush1.msra.mxu0 0.0
    %2106 = vmatprep.subr.mxu0 0.0
    %2107 = vmatpush1.msra.mxu0 0.0
    %2108 = vmatprep.subr.mxu0 0.0
    %2109 = vmatpush1.msra.mxu0 0.0
    %2110 = vmatprep.subr.mxu0 0.0
    %2111 = vmatpush1.msra.mxu0 0.0
    %2112 = vmatprep.subr.mxu0 0.0
    %2113 = vmatpush1.msra.mxu0 0.0
    %2114 = vmatprep.subr.mxu0 0.0
    %2115 = vmatpush1.msra.mxu0 0.0
    %2116 = vmatprep.subr.mxu0 0.0
    %2117 = vmatpush1.msra.mxu0 0.0
    %2118 = vmatprep.subr.mxu0 0.0
    %2119 = vmatpush1.msra.mxu0 0.0
    %2120 = vmatprep.subr.mxu0 0.0
    %2121 = vmatpush1.msra.mxu0 0.0
    %2122 = vmatprep.subr.mxu0 0.0
    %2123 = vmatpush1.msra.mxu0 0.0
    %2124 = vmatprep.subr.mxu0 0.0
    %2125 = vmatpush1.msra.mxu0 0.0
    %2126 = vmatprep.subr.mxu0 0.0
    %2127 = vmatpush1.msra.mxu0 0.0
    %2128 = vmatprep.subr.mxu0 0.0
    %2129 = vmatpush1.msra.mxu0 0.0
    %2130 = vmatprep.subr.mxu0 0.0
    %2131 = vmatpush1.msra.mxu0 0.0
    %2132 = vmatprep.subr.mxu0 0.0
    %2133 = vmatpush1.msra.mxu0 0.0
    %2134 = vmatprep.subr.mxu0 0.0
    %2135 = vmatpush1.msra.mxu0 0.0
    %2136 = vmatprep.subr.mxu0 0.0
    %2137 = vmatpush1.msra.mxu0 0.0
    %2138 = vmatprep.subr.mxu0 0.0
    %2139 = vmatpush1.msra.mxu0 0.0
    %2140 = vmatprep.subr.mxu0 0.0
    %2141 = vmatpush1.msra.mxu0 0.0
    %2142 = vmatprep.subr.mxu0 0.0
    %2143 = vmatpush1.msra.mxu0 0.0
    %2144 = vmatprep.subr.mxu0 0.0
    %2145 = vmatpush1.msra.mxu0 0.0
    %2146 = vmatprep.subr.mxu0 0.0
    %2147 = vmatpush1.msra.mxu0 0.0
    %2148 = vmatprep.subr.mxu0 0.0
    %2149 = vmatpush1.msra.mxu0 0.0
    %2150 = vmatprep.subr.mxu0 0.0
    %2151 = vmatpush1.msra.mxu0 0.0
    %2152 = vmatprep.subr.mxu0 0.0
    %2153 = vmatpush1.msra.mxu0 0.0
    %2154 = vmatprep.subr.mxu0 0.0
    %2155 = vmatpush1.msra.mxu0 0.0
    %2156 = vmatprep.subr.mxu0 0.0
    %2157 = vmatpush1.msra.mxu0 0.0
    %2158 = vmatprep.subr.mxu0 0.0
    %2159 = vmatpush1.msra.mxu0 0.0
    %2160 = vmatprep.subr.mxu0 0.0
    %2161 = vmatpush1.msra.mxu0 0.0
    %2162 = vmatprep.subr.mxu0 0.0
    %2163 = vmatpush1.msra.mxu0 0.0
    %2164 = vmatprep.mubr.f32.mxu0 0.0
    %2165 = vmatmul.mubr.f32.gmra.mrb[0].mxu0 %v1033
    %v2166 = vpop.f32.mrb[0].mxu0
    %v2167 = vadd.f32 %v2096, %v2166
    %v2168 = vpop.f32.mrb[0].mxu0
    %v2169 = vadd.f32 %v2098, %v2168
    %2170 = vdwg.mxu0
    %v2171 = vmul.f32 %v1599, %v1599
    %v2172 = vmul.f32 %v1601, %v1601
    %v2173 = vmul.f32 %v2167, %v2167
    %v2174 = vmul.f32 %v2169, %v2169
    %v2175 = vmul.f32 %v2171, 0.00055555557
    %v2176 = vmul.f32 %v2172, 0.00055555557
    %v2177 = vmul.f32 %v2173, 0.00055555557
    %v2178 = vmul.f32 %v2174, 0.00055555557
    %v2179 = vsub.f32 %v1599, %v2175
    %v2180 = vsub.f32 %v1601, %v2176
    %v2181 = vsub.f32 %v2167, %v2177
    %v2182 = vsub.f32 %v2169, %v2178
    %v2183 = vadd.f32 %v2179, 1e-06
    %v2184 = vadd.f32 %v2180, 1e-06
    %v2185 = vadd.f32 %v2181, 1e-06
    %v2186 = vadd.f32 %v2182, 1e-06
    %v2187 = vmax.f32 %v2183, 1e-06
    %v2188 = vmax.f32 %v2184, 1e-06
    %v2189 = vmax.f32 %v2185, 1e-06
    %v2190 = vmax.f32 %v2186, 1e-06
    %v2191 = vsub.f32 899.5, %v1599
    %v2192 = vsub.f32 899.5, %v1601
    %v2193 = vsub.f32 899.5, %v2167
    %v2194 = vsub.f32 899.5, %v2169
    %v2195 = vmul.f32 %v2187, 2.0
    %v2196 = vmul.f32 %v2188, 2.0
    %v2197 = vmul.f32 %v2189, 2.0
    %v2198 = vmul.f32 %v2190, 2.0
    %v2199 = vrsqrt.pop %v2195
    %v2200 = vrsqrt.pop %v2196
    %v2201 = vrsqrt.pop %v2197
    %v2202 = vrsqrt.pop %v2198
    %v2203 = vmul.f32 %v2191, %v2199
    %v2204 = vmul.f32 %v2192, %v2200
    %v2205 = vmul.f32 %v2193, %v2201
    %v2206 = vmul.f32 %v2194, %v2202
    %v2207 = vmax.f32 %v2203, -4.0
    %v2208 = vmax.f32 %v2204, -4.0
    %v2209 = vmax.f32 %v2205, -4.0
    %v2210 = vmax.f32 %v2206, -4.0
    %v2211 = vmin.f32 %v2207, 4.0
    %v2212 = vmin.f32 %v2208, 4.0
    %v2213 = vmin.f32 %v2209, 4.0
    %v2214 = vmin.f32 %v2210, 4.0
    %v2215 = vmul.f32 %v2211, %v2211
    %v2216 = vmul.f32 %v2212, %v2212
    %v2217 = vmul.f32 %v2213, %v2213
    %v2218 = vmul.f32 %v2214, %v2214
    %v2219 = vmul.f32 %v2215, 0.00022905065
    %v2220 = vmul.f32 %v2216, 0.00022905065
    %v2221 = vmul.f32 %v2217, 0.00022905065
    %v2222 = vmul.f32 %v2218, 0.00022905065
    %v2223 = vadd.f32 %v2219, 0.003408291
    %v2224 = vadd.f32 %v2220, 0.003408291
    %v2225 = vadd.f32 %v2221, 0.003408291
    %v2226 = vadd.f32 %v2222, 0.003408291
    %v2227 = vmul.f32 %v2223, %v2215
    %v2228 = vmul.f32 %v2224, %v2216
    %v2229 = vmul.f32 %v2225, %v2217
    %v2230 = vmul.f32 %v2226, %v2218
    %v2231 = vadd.f32 %v2227, 0.050955694
    %v2232 = vadd.f32 %v2228, 0.050955694
    %v2233 = vadd.f32 %v2229, 0.050955694
    %v2234 = vadd.f32 %v2230, 0.050955694
    %v2235 = vmul.f32 %v2231, %v2215
    %v2236 = vmul.f32 %v2232, %v2216
    %v2237 = vmul.f32 %v2233, %v2217
    %v2238 = vmul.f32 %v2234, %v2218
    %v2239 = vadd.f32 %v2235, 0.18520832
    %v2240 = vadd.f32 %v2236, 0.18520832
    %v2241 = vadd.f32 %v2237, 0.18520832
    %v2242 = vadd.f32 %v2238, 0.18520832
    %v2243 = vmul.f32 %v2239, %v2215
    %v2244 = vmul.f32 %v2240, %v2216
    %v2245 = vmul.f32 %v2241, %v2217
    %v2246 = vmul.f32 %v2242, %v2218
    %v2247 = vadd.f32 %v2243, 1.1283791
    %v2248 = vadd.f32 %v2244, 1.1283791
    %v2249 = vadd.f32 %v2245, 1.1283791
    %v2250 = vadd.f32 %v2246, 1.1283791
    %v2251 = vmul.f32 %v2215, -1.1791603e-07
    %v2252 = vmul.f32 %v2216, -1.1791603e-07
    %v2253 = vmul.f32 %v2217, -1.1791603e-07
    %v2254 = vmul.f32 %v2218, -1.1791603e-07
    %v2255 = vadd.f32 %v2251, 2.3547966e-05
    %v2256 = vadd.f32 %v2252, 2.3547966e-05
    %v2257 = vadd.f32 %v2253, 2.3547966e-05
    %v2258 = vadd.f32 %v2254, 2.3547966e-05
    %v2259 = vmul.f32 %v2255, %v2215
    %v2260 = vmul.f32 %v2256, %v2216
    %v2261 = vmul.f32 %v2257, %v2217
    %v2262 = vmul.f32 %v2258, %v2218
    %v2263 = vadd.f32 %v2259, 0.0010179626
    %v2264 = vadd.f32 %v2260, 0.0010179626
    %v2265 = vadd.f32 %v2261, 0.0010179626
    %v2266 = vadd.f32 %v2262, 0.0010179626
    %v2267 = vmul.f32 %v2263, %v2215
    %v2268 = vmul.f32 %v2264, %v2216
    %v2269 = vmul.f32 %v2265, %v2217
    %v2270 = vmul.f32 %v2266, %v2218
    %v2271 = vadd.f32 %v2267, 0.01407047
    %v2272 = vadd.f32 %v2268, 0.01407047
    %v2273 = vadd.f32 %v2269, 0.01407047
    %v2274 = vadd.f32 %v2270, 0.01407047
    %v2275 = vmul.f32 %v2271, %v2215
    %v2276 = vmul.f32 %v2272, %v2216
    %v2277 = vmul.f32 %v2273, %v2217
    %v2278 = vmul.f32 %v2274, %v2218
    %v2279 = vadd.f32 %v2275, 0.11098505
    %v2280 = vadd.f32 %v2276, 0.11098505
    %v2281 = vadd.f32 %v2277, 0.11098505
    %v2282 = vadd.f32 %v2278, 0.11098505
    %v2283 = vmul.f32 %v2279, %v2215
    %v2284 = vmul.f32 %v2280, %v2216
    %v2285 = vmul.f32 %v2281, %v2217
    %v2286 = vmul.f32 %v2282, %v2218
    %v2287 = vadd.f32 %v2283, 0.49746925
    %v2288 = vadd.f32 %v2284, 0.49746925
    %v2289 = vadd.f32 %v2285, 0.49746925
    %v2290 = vadd.f32 %v2286, 0.49746925
    %v2291 = vmul.f32 %v2287, %v2215
    %v2292 = vmul.f32 %v2288, %v2216
    %v2293 = vmul.f32 %v2289, %v2217
    %v2294 = vmul.f32 %v2290, %v2218
    %v2295 = vadd.f32 %v2291, 1.0
    %v2296 = vadd.f32 %v2292, 1.0
    %v2297 = vadd.f32 %v2293, 1.0
    %v2298 = vadd.f32 %v2294, 1.0
    %v2299 = vmul.f32 %v2211, %v2247
    %v2300 = vmul.f32 %v2212, %v2248
    %v2301 = vmul.f32 %v2213, %v2249
    %v2302 = vmul.f32 %v2214, %v2250
    %v2303 = vrcp.pop %v2295
    %v2304 = vrcp.pop %v2296
    %v2305 = vrcp.pop %v2297
    %v2306 = vrcp.pop %v2298
    %v2307 = vmul.f32 %v2299, %v2303
    %v2308 = vmul.f32 %v2300, %v2304
    %v2309 = vmul.f32 %v2301, %v2305
    %v2310 = vmul.f32 %v2302, %v2306
    %v2311 = vmul.f32 %v2307, 0.5
    %v2312 = vmul.f32 %v2308, 0.5
    %v2313 = vmul.f32 %v2309, 0.5
    %v2314 = vmul.f32 %v2310, 0.5
    %v2315 = vsub.f32 0.5, %v2311
    %v2316 = vsub.f32 0.5, %v2312
    %v2317 = vsub.f32 0.5, %v2313
    %v2318 = vsub.f32 0.5, %v2314
    %v2319 = vld [vmem:[%s3] sm:$0xff]
    %v2320 = vld [vmem:[%s3 + $0x8] sm:$0xff]
    %v2321 = vld [vmem:[%s3 + $0x10] sm:$0xff]
    %v2322 = vld [vmem:[%s3 + $0x18] sm:$0xff]
    %v2323 = vld [vmem:[%s3 + $0x20] sm:$0xff]
    %v2324 = vld [vmem:[%s3 + $0x28] sm:$0xff]
    %v2325 = vld [vmem:[%s3 + $0x30] sm:$0xff]
    %v2326 = vld [vmem:[%s3 + $0x38] sm:$0xff]
    %v2327 = vld [vmem:[%s3 + $0x40] sm:$0xff]
    %v2328 = vld [vmem:[%s3 + $0x48] sm:$0xff]
    %v2329 = vld [vmem:[%s3 + $0x50] sm:$0xff]
    %v2330 = vld [vmem:[%s3 + $0x58] sm:$0xff]
    %v2331 = vld [vmem:[%s3 + $0x60] sm:$0xff]
    %v2332 = vld [vmem:[%s3 + $0x68] sm:$0xff]
    %v2333 = vld [vmem:[%s3 + $0x70] sm:$0xff]
    %v2334 = vld [vmem:[%s3 + $0x78] sm:$0xff]
    %v2335 = vld [vmem:[%s3 + $0x80] sm:$0xff]
    %v2336 = vld [vmem:[%s3 + $0x88] sm:$0xff]
    %v2337 = vld [vmem:[%s3 + $0x90] sm:$0xff]
    %v2338 = vld [vmem:[%s3 + $0x98] sm:$0xff]
    %v2339 = vld [vmem:[%s3 + $0xa0] sm:$0xff]
    %v2340 = vld [vmem:[%s3 + $0xa8] sm:$0xff]
    %v2341 = vld [vmem:[%s3 + $0xb0] sm:$0xff]
    %v2342 = vld [vmem:[%s3 + $0xb8] sm:$0xff]
    %v2343 = vld [vmem:[%s3 + $0xc0] sm:$0xff]
    %v2344 = vld [vmem:[%s3 + $0xc8] sm:$0xff]
    %v2345 = vld [vmem:[%s3 + $0xd0] sm:$0xff]
    %v2346 = vld [vmem:[%s3 + $0xd8] sm:$0xff]
    %v2347 = vld [vmem:[%s3 + $0xe0] sm:$0xff]
    %v2348 = vld [vmem:[%s3 + $0xe8] sm:$0xff]
    %v2349 = vld [vmem:[%s3 + $0xf0] sm:$0xff]
    %v2350 = vld [vmem:[%s3 + $0xf8] sm:$0xff]
    %v2351 = vld [vmem:[%s3 + $0x100] sm:$0xff]
    %v2352 = vld [vmem:[%s3 + $0x108] sm:$0xff]
    %v2353 = vld [vmem:[%s3 + $0x110] sm:$0xff]
    %v2354 = vld [vmem:[%s3 + $0x118] sm:$0xff]
    %v2355 = vld [vmem:[%s3 + $0x120] sm:$0xff]
    %v2356 = vld [vmem:[%s3 + $0x128] sm:$0xff]
    %v2357 = vld [vmem:[%s3 + $0x130] sm:$0xff]
    %v2358 = vld [vmem:[%s3 + $0x138] sm:$0xff]
    %v2359 = vld [vmem:[%s3 + $0x140] sm:$0xff]
    %v2360 = vld [vmem:[%s3 + $0x148] sm:$0xff]
    %v2361 = vld [vmem:[%s3 + $0x150] sm:$0xff]
    %v2362 = vld [vmem:[%s3 + $0x158] sm:$0xff]
    %v2363 = vld [vmem:[%s3 + $0x160] sm:$0xff]
    %v2364 = vld [vmem:[%s3 + $0x168] sm:$0xff]
    %v2365 = vld [vmem:[%s3 + $0x170] sm:$0xff]
    %v2366 = vld [vmem:[%s3 + $0x178] sm:$0xff]
    %v2367 = vld [vmem:[%s3 + $0x180] sm:$0xff]
    %v2368 = vld [vmem:[%s3 + $0x188] sm:$0xff]
    %v2369 = vld [vmem:[%s3 + $0x190] sm:$0xff]
    %v2370 = vld [vmem:[%s3 + $0x198] sm:$0xff]
    %v2371 = vld [vmem:[%s3 + $0x1a0] sm:$0xff]
    %v2372 = vld [vmem:[%s3 + $0x1a8] sm:$0xff]
    %v2373 = vld [vmem:[%s3 + $0x1b0] sm:$0xff]
    %v2374 = vld [vmem:[%s3 + $0x1b8] sm:$0xff]
    %v2375 = vld [vmem:[%s3 + $0x1c0] sm:$0xff]
    %v2376 = vld [vmem:[%s3 + $0x1c8] sm:$0xff]
    %v2377 = vld [vmem:[%s3 + $0x1d0] sm:$0xff]
    %v2378 = vld [vmem:[%s3 + $0x1d8] sm:$0xff]
    %v2379 = vld [vmem:[%s3 + $0x1e0] sm:$0xff]
    %v2380 = vld [vmem:[%s3 + $0x1e8] sm:$0xff]
    %v2381 = vld [vmem:[%s3 + $0x1f0] sm:$0xf]
    %v2382 = vld [vmem:[%s4] sm:$0x1]
    %v2384 = vlaneseq
    %v2385 = vshrl.u32 %v2384, 7
    %v2386 = vsub.s32 0, %v2385
    %v2387 = vrot.slane %v2382, %v2386
    %vm2389 = vcmask 949248
    %v2391 = vsel %vm2389, %v2318, 0
    %vm2393 = vcmask 1043456
    %v2395 = vsel %vm2393, %v2381, 0
    %2397 = vmatprep.subr.mxu0 0.0
    %2398 = vmatpush1.msra.mxu0 %v2319
    %2399 = vmatprep.subr.mxu0 0.0
    %2400 = vmatpush1.msra.mxu0 %v2320
    %2401 = vmatprep.subr.mxu0 0.0
    %2402 = vmatpush1.msra.mxu0 %v2321
    %2403 = vmatprep.subr.mxu0 0.0
    %2404 = vmatpush1.msra.mxu0 %v2322
    %2405 = vmatprep.subr.mxu0 0.0
    %2406 = vmatpush1.msra.mxu0 %v2323
    %2407 = vmatprep.subr.mxu0 0.0
    %2408 = vmatpush1.msra.mxu0 %v2324
    %2409 = vmatprep.subr.mxu0 0.0
    %2410 = vmatpush1.msra.mxu0 %v2325
    %2411 = vmatprep.subr.mxu0 0.0
    %2412 = vmatpush1.msra.mxu0 %v2326
    %2413 = vmatprep.subr.mxu0 0.0
    %2414 = vmatpush1.msra.mxu0 %v2327
    %2415 = vmatprep.subr.mxu0 0.0
    %2416 = vmatpush1.msra.mxu0 %v2328
    %2417 = vmatprep.subr.mxu0 0.0
    %2418 = vmatpush1.msra.mxu0 %v2329
    %2419 = vmatprep.subr.mxu0 0.0
    %2420 = vmatpush1.msra.mxu0 %v2330
    %2421 = vmatprep.subr.mxu0 0.0
    %2422 = vmatpush1.msra.mxu0 %v2331
    %2423 = vmatprep.subr.mxu0 0.0
    %2424 = vmatpush1.msra.mxu0 %v2332
    %2425 = vmatprep.subr.mxu0 0.0
    %2426 = vmatpush1.msra.mxu0 %v2333
    %2427 = vmatprep.subr.mxu0 0.0
    %2428 = vmatpush1.msra.mxu0 %v2334
    %2429 = vmatprep.subr.mxu0 0.0
    %2430 = vmatpush1.msra.mxu0 %v2335
    %2431 = vmatprep.subr.mxu0 0.0
    %2432 = vmatpush1.msra.mxu0 %v2336
    %2433 = vmatprep.subr.mxu0 0.0
    %2434 = vmatpush1.msra.mxu0 %v2337
    %2435 = vmatprep.subr.mxu0 0.0
    %2436 = vmatpush1.msra.mxu0 %v2338
    %2437 = vmatprep.subr.mxu0 0.0
    %2438 = vmatpush1.msra.mxu0 %v2339
    %2439 = vmatprep.subr.mxu0 0.0
    %2440 = vmatpush1.msra.mxu0 %v2340
    %2441 = vmatprep.subr.mxu0 0.0
    %2442 = vmatpush1.msra.mxu0 %v2341
    %2443 = vmatprep.subr.mxu0 0.0
    %2444 = vmatpush1.msra.mxu0 %v2342
    %2445 = vmatprep.subr.mxu0 0.0
    %2446 = vmatpush1.msra.mxu0 %v2343
    %2447 = vmatprep.subr.mxu0 0.0
    %2448 = vmatpush1.msra.mxu0 %v2344
    %2449 = vmatprep.subr.mxu0 0.0
    %2450 = vmatpush1.msra.mxu0 %v2345
    %2451 = vmatprep.subr.mxu0 0.0
    %2452 = vmatpush1.msra.mxu0 %v2346
    %2453 = vmatprep.subr.mxu0 0.0
    %2454 = vmatpush1.msra.mxu0 %v2347
    %2455 = vmatprep.subr.mxu0 0.0
    %2456 = vmatpush1.msra.mxu0 %v2348
    %2457 = vmatprep.subr.mxu0 0.0
    %2458 = vmatpush1.msra.mxu0 %v2349
    %2459 = vmatprep.subr.mxu0 0.0
    %2460 = vmatpush1.msra.mxu0 %v2350
    %2461 = vmatprep.mubr.f32.mxu0 %v2316
    %2462 = vmatmul.mubr.f32.gmra.mrb[0].mxu0 %v2315
    %v2463 = vpop.f32.mrb[0].mxu0
    %v2464 = vadd.f32 %v2387, %v2463
    %v2465 = vpop.f32.mrb[0].mxu0
    %2466 = vdwg.mxu0
    %2467 = vmatprep.subr.mxu0 0.0
    %2468 = vmatpush1.msra.mxu0 %v2351
    %2469 = vmatprep.subr.mxu0 0.0
    %2470 = vmatpush1.msra.mxu0 %v2352
    %2471 = vmatprep.subr.mxu0 0.0
    %2472 = vmatpush1.msra.mxu0 %v2353
    %2473 = vmatprep.subr.mxu0 0.0
    %2474 = vmatpush1.msra.mxu0 %v2354
    %2475 = vmatprep.subr.mxu0 0.0
    %2476 = vmatpush1.msra.mxu0 %v2355
    %2477 = vmatprep.subr.mxu0 0.0
    %2478 = vmatpush1.msra.mxu0 %v2356
    %2479 = vmatprep.subr.mxu0 0.0
    %2480 = vmatpush1.msra.mxu0 %v2357
    %2481 = vmatprep.subr.mxu0 0.0
    %2482 = vmatpush1.msra.mxu0 %v2358
    %2483 = vmatprep.subr.mxu0 0.0
    %2484 = vmatpush1.msra.mxu0 %v2359
    %2485 = vmatprep.subr.mxu0 0.0
    %2486 = vmatpush1.msra.mxu0 %v2360
    %2487 = vmatprep.subr.mxu0 0.0
    %2488 = vmatpush1.msra.mxu0 %v2361
    %2489 = vmatprep.subr.mxu0 0.0
    %2490 = vmatpush1.msra.mxu0 %v2362
    %2491 = vmatprep.subr.mxu0 0.0
    %2492 = vmatpush1.msra.mxu0 %v2363
    %2493 = vmatprep.subr.mxu0 0.0
    %2494 = vmatpush1.msra.mxu0 %v2364
    %2495 = vmatprep.subr.mxu0 0.0
    %2496 = vmatpush1.msra.mxu0 %v2365
    %2497 = vmatprep.subr.mxu0 0.0
    %2498 = vmatpush1.msra.mxu0 %v2366
    %2499 = vmatprep.subr.mxu0 0.0
    %2500 = vmatpush1.msra.mxu0 %v2367
    %2501 = vmatprep.subr.mxu0 0.0
    %2502 = vmatpush1.msra.mxu0 %v2368
    %2503 = vmatprep.subr.mxu0 0.0
    %2504 = vmatpush1.msra.mxu0 %v2369
    %2505 = vmatprep.subr.mxu0 0.0
    %2506 = vmatpush1.msra.mxu0 %v2370
    %2507 = vmatprep.subr.mxu0 0.0
    %2508 = vmatpush1.msra.mxu0 %v2371
    %2509 = vmatprep.subr.mxu0 0.0
    %2510 = vmatpush1.msra.mxu0 %v2372
    %2511 = vmatprep.subr.mxu0 0.0
    %2512 = vmatpush1.msra.mxu0 %v2373
    %2513 = vmatprep.subr.mxu0 0.0
    %2514 = vmatpush1.msra.mxu0 %v2374
    %2515 = vmatprep.subr.mxu0 0.0
    %2516 = vmatpush1.msra.mxu0 %v2375
    %2517 = vmatprep.subr.mxu0 0.0
    %2518 = vmatpush1.msra.mxu0 %v2376
    %2519 = vmatprep.subr.mxu0 0.0
    %2520 = vmatpush1.msra.mxu0 %v2377
    %2521 = vmatprep.subr.mxu0 0.0
    %2522 = vmatpush1.msra.mxu0 %v2378
    %2523 = vmatprep.subr.mxu0 0.0
    %2524 = vmatpush1.msra.mxu0 %v2379
    %2525 = vmatprep.subr.mxu0 0.0
    %2526 = vmatpush1.msra.mxu0 %v2380
    %2527 = vmatprep.subr.mxu0 0.0
    %2528 = vmatpush1.msra.mxu0 %v2395
    %2529 = vmatprep.subr.mxu0 0.0
    %2530 = vmatpush1.msra.mxu0 0.0
    %2531 = vmatprep.mubr.f32.mxu0 %v2391
    %2532 = vmatmul.mubr.f32.gmra.mrb[0].mxu0 %v2317
    %v2533 = vpop.f32.mrb[0].mxu0
    %v2534 = vadd.f32 %v2464, %v2533
    %v2535 = vpop.f32.mrb[0].mxu0
    %2536 = vdwg.mxu0
    %v2537 = vmul.f32 %v2534, %v2534
    %v2538 = vmul.f32 %v2537, 0.002
    %v2539 = vsub.f32 %v2534, %v2538
    %v2540 = vadd.f32 %v2539, 1e-06
    %v2541 = vmax.f32 %v2540, 1e-06
    %v2542 = vsub.f32 249.5, %v2534
    %v2543 = vmul.f32 %v2541, 2.0
    %v2544 = vrsqrt.pop %v2543
    %v2545 = vmul.f32 %v2542, %v2544
    %v2546 = vmax.f32 %v2545, -4.0
    %v2547 = vmin.f32 %v2546, 4.0
    %v2548 = vmul.f32 %v2547, %v2547
    %v2549 = vmul.f32 %v2548, 0.00022905065
    %v2550 = vadd.f32 %v2549, 0.003408291
    %v2551 = vmul.f32 %v2550, %v2548
    %v2552 = vadd.f32 %v2551, 0.050955694
    %v2553 = vmul.f32 %v2552, %v2548
    %v2554 = vadd.f32 %v2553, 0.18520832
    %v2555 = vmul.f32 %v2554, %v2548
    %v2556 = vadd.f32 %v2555, 1.1283791
    %v2557 = vmul.f32 %v2548, -1.1791603e-07
    %v2558 = vadd.f32 %v2557, 2.3547966e-05
    %v2559 = vmul.f32 %v2558, %v2548
    %v2560 = vadd.f32 %v2559, 0.0010179626
    %v2561 = vmul.f32 %v2560, %v2548
    %v2562 = vadd.f32 %v2561, 0.01407047
    %v2563 = vmul.f32 %v2562, %v2548
    %v2564 = vadd.f32 %v2563, 0.11098505
    %v2565 = vmul.f32 %v2564, %v2548
    %v2566 = vadd.f32 %v2565, 0.49746925
    %v2567 = vmul.f32 %v2566, %v2548
    %v2568 = vadd.f32 %v2567, 1.0
    %v2569 = vmul.f32 %v2547, %v2556
    %v2570 = vrcp.pop %v2568
    %v2571 = vmul.f32 %v2569, %v2570
    %v2572 = vmul.f32 %v2571, 0.5
    %v2573 = vsub.f32 0.5, %v2572
    %vm2574 = vcmask 25600
    %2575 = vst.msk [vmem:[#allocation2] sm:$0x3] %vm2574, %v2573
    // Predicated region
    $region22: #{digitalnet1_forward.5} parent=1 // pred_check
      _
    $region23: #{digitalnet1_forward.5} parent=1 // pred_check_branch
      %2577 = sbr.rel (0) target = $region25
    $region24: #{digitalnet1_forward.5} parent=1 // pred_region
      %s2579 = ssub.s32 32, 32
      %2580 = vsyncadd [#allocation3], %s2579
      %s2582 = sshll.u32 [#allocation2], 4
      %s2583 = int_to_ptr.vmem [resolvable:$true] %s2582
      %2585 = dma.vmem_to_hbm [thread:$0]  %s2583, 32, %s5, [#allocation3]
    $region25: #{digitalnet1_forward.5} parent=1 // pred_fallthru
      _
    // Predicated region
    $region26: #{digitalnet1_forward.5} parent=1 // pred_check
      _
    $region27: #{digitalnet1_forward.5} parent=1 // pred_check_branch
      %2587 = sbr.rel (0) target = $region29
    $region28: #{digitalnet1_forward.5} parent=1 // pred_region
      %2588 = dma.done [#allocation3], 32
    $region29: #{digitalnet1_forward.5} parent=1 // pred_fallthru
      _
    %2589 = vsyncpa [#allocation3], 1

</llo_original>
